<compile_context>
chip_gen: v6e
topology: v6e:2x2x1
jax: 0.10.0
libtpu: 0.0.40
codegen_flags: <defaults>
</compile_context>

<pallas_src>
import jax
import jax.numpy as jnp
from jax.experimental import pallas as pl
from jax.experimental.pallas import tpu as pltpu

FEATURES = 15680           # = 20 * 28 * 28, matches self.features_size
HIDDEN = 128
N_CLASSES = 17
KSPLIT = 2                 # K-split for lane-dense W1 tiles + DMA/compute overlap
KH = FEATURES // KSPLIT    # 7840 (divisible by 8 -> valid sublane block dim)


def close_layer_kernel(x_ref, w1_ref, b1_ref, w2_ref, b2_ref, out_ref, acc_ref):
    k = pl.program_id(0)

    @pl.when(k == 0)
    def _init():
        acc_ref[...] = jnp.zeros_like(acc_ref)

    # fc1 partial over this K chunk: bf16 x bf16, f32 accumulate (native MXU path).
    acc_ref[...] += jnp.dot(x_ref[0], w1_ref[0],
                            preferred_element_type=jnp.float32)

    @pl.when(k == pl.num_programs(0) - 1)
    def _finalize():
        # bias + relu in f32 on the VPU.
        h = jnp.maximum(acc_ref[...] + b1_ref[...], 0.0)          # (B, HIDDEN)
        # fc2: bf16 x bf16 -> f32 on the MXU, then f32 bias add.
        logits = jnp.dot(h.astype(jnp.bfloat16), w2_ref[...],
                         preferred_element_type=jnp.float32) + b2_ref[...]
        # log_softmax over classes (dim=1).
        m = jnp.max(logits, axis=-1, keepdims=True)
        s = logits - m
        lse = jnp.log(jnp.sum(jnp.exp(s), axis=-1, keepdims=True))
        out_ref[...] = (s - lse).astype(out_ref.dtype)


def prepare_params(w1, b1, w2, b2):
    """One-time weight preprocessing (storage-layout decision, done at setup).

    w1: (FEATURES, HIDDEN) f32 -> (KSPLIT, KH, HIDDEN) bf16  (contiguous K chunks,
                                                              lane-dense 128-wide tiles)
    b1: (1, HIDDEN)        f32 -> unchanged (f32 bias add on VPU)
    w2: (HIDDEN, N_CLASSES) f32 -> bf16 (native MXU operand)
    b2: (1, N_CLASSES)     f32 -> unchanged
    """
    w1_split = w1.astype(jnp.bfloat16).reshape(KSPLIT, KH, HIDDEN)
    return w1_split, b1, w2.astype(jnp.bfloat16), b2


def close_layer_forward(x_nchw, w1_split, b1, w2_bf16, b2):
    """x_nchw: (B, C, H, W) float32 with C*H*W == FEATURES."""
    B = x_nchw.shape[0]
    x_flat = x_nchw.reshape(B, -1)                       # torch.flatten(x, 1)
    assert x_flat.shape[1] == FEATURES
    # bf16 cast (native MXU input dtype) + split K into KSPLIT contiguous chunks.
    # Tiny (~63 KiB) XLA pre-op; fuses with the flatten under jit.
    x_split = x_flat.astype(jnp.bfloat16).reshape(B, KSPLIT, KH).swapaxes(0, 1)

    flops = 2 * B * FEATURES * HIDDEN + 2 * B * HIDDEN * N_CLASSES
    bytes_accessed = (FEATURES * HIDDEN * 2          # W1 bf16 (dominant)
                      + B * FEATURES * 2             # x bf16
                      + HIDDEN * N_CLASSES * 2       # W2 bf16
                      + HIDDEN * 4 + N_CLASSES * 4   # biases
                      + B * N_CLASSES * 4)           # output

    return pl.pallas_call(
        close_layer_kernel,
        out_shape=jax.ShapeDtypeStruct((B, N_CLASSES), jnp.float32),
        grid=(KSPLIT,),
        in_specs=[
            # x chunk k: (1, B, KH) bf16 — last two dims are full array extents.
            pl.BlockSpec((1, B, KH), lambda k: (k, 0, 0)),
            # W1 chunk k: (1, KH, HIDDEN) bf16 — lane-dense (last dim 128).
            pl.BlockSpec((1, KH, HIDDEN), lambda k: (k, 0, 0)),
            # b1 / W2 / b2: tiny, same block every step (fetched once).
            pl.BlockSpec((1, HIDDEN), lambda k: (0, 0)),
            pl.BlockSpec((HIDDEN, N_CLASSES), lambda k: (0, 0)),
            pl.BlockSpec((1, N_CLASSES), lambda k: (0, 0)),
        ],
        # Output block is constant across the reduction axis; written only on the
        # last step (standard accumulator / in-kernel-finalize pattern).
        out_specs=pl.BlockSpec((B, N_CLASSES), lambda k: (0, 0)),
        scratch_shapes=[pltpu.VMEM((B, HIDDEN), jnp.float32)],
        compiler_params=pltpu.CompilerParams(
            dimension_semantics=("arbitrary",),      # reduction axis; single-TC layout
            vmem_limit_bytes=32 << 20,               # actual footprint ~4 MiB
        ),
        cost_estimate=pl.CostEstimate(
            flops=flops,
            transcendentals=B * (N_CLASSES + 1),     # exp + log in log_softmax
            bytes_accessed=bytes_accessed,
        ),
    )(x_split, w1_split, b1, w2_bf16, b2)


def _reference(x_nchw, w1, b1, w2, b2):
    """Pure-JAX reference mirroring the kernel's bf16 quantization of x/W1/W2."""
    x = x_nchw.reshape(x_nchw.shape[0], -1).astype(jnp.bfloat16)
    h = jnp.maximum(
        jnp.dot(x, w1.astype(jnp.bfloat16), preferred_element_type=jnp.float32) + b1,
        0.0)
    logits = jnp.dot(h.astype(jnp.bfloat16), w2.astype(jnp.bfloat16),
                     preferred_element_type=jnp.float32) + b2
    return jax.nn.log_softmax(logits, axis=1)


if __name__ == "__main__":
    key = jax.random.PRNGKey(0)
    kx, k1, k2, k3, k4 = jax.random.split(key, 5)

    B, C, H, W = 2, 20, 28, 28                 # C*H*W = 15680 = features_size
    x = jax.random.normal(kx, (B, C, H, W), dtype=jnp.float32)

    # Synthetic parameters (shapes from nn.Linear(15680,128) / nn.Linear(128,17)),
    # stored as (in, out) so the kernel computes x @ W + b.
    w1 = jax.random.normal(k1, (FEATURES, HIDDEN), dtype=jnp.float32) * 0.01
    b1 = jax.random.normal(k2, (1, HIDDEN), dtype=jnp.float32) * 0.01
    w2 = jax.random.normal(k3, (HIDDEN, N_CLASSES), dtype=jnp.float32) * 0.01
    b2 = jax.random.normal(k4, (1, N_CLASSES), dtype=jnp.float32) * 0.01

    w1_split, b1_p, w2_bf16, b2_p = prepare_params(w1, b1, w2, b2)

    fwd = jax.jit(close_layer_forward)
    out = jax.block_until_ready(fwd(x, w1_split, b1_p, w2_bf16, b2_p))

    ref = _reference(x, w1, b1, w2, b2)
    assert out.shape == (B, N_CLASSES)
    assert jnp.allclose(out, ref, atol=2e-4, rtol=2e-4), float(jnp.max(jnp.abs(out - ref)))

    print("KERNEL_OK")
</pallas_src>

<mosaic_0001>
module attributes {stable_mosaic.version = 11 : i64} {
  func.func @close_layer_kernel(%arg0: i32, %arg1: memref<1x2x7840xbf16, #tpu.memory_space<vmem>>, %arg2: memref<1x7840x128xbf16, #tpu.memory_space<vmem>>, %arg3: memref<1x128xf32, #tpu.memory_space<vmem>>, %arg4: memref<128x17xbf16, #tpu.memory_space<vmem>>, %arg5: memref<1x17xf32, #tpu.memory_space<vmem>>, %arg6: memref<2x17xf32, #tpu.memory_space<vmem>>, %arg7: memref<2x128xf32, #tpu.memory_space<vmem>>) attributes {dimension_semantics = [#tpu.dimension_semantics<arbitrary>], iteration_bounds = array<i64: 2>, scalar_prefetch = 0 : i64, scratch_operands = 1 : i64, tpu.core_type = #tpu.core_type<tc>, window_params = [{transform_indices = @transform_0, window_bounds = array<i64: 1, 2, 7840>}, {transform_indices = @transform_1, window_bounds = array<i64: 1, 7840, 128>}, {pipeline_mode = #tpu.pipeline_mode<synchronous>, transform_indices = @transform_2, window_bounds = array<i64: 1, 128>}, {pipeline_mode = #tpu.pipeline_mode<synchronous>, transform_indices = @transform_3, window_bounds = array<i64: 128, 17>}, {pipeline_mode = #tpu.pipeline_mode<synchronous>, transform_indices = @transform_4, window_bounds = array<i64: 1, 17>}, {pipeline_mode = #tpu.pipeline_mode<synchronous>, transform_indices = @transform_5, window_bounds = array<i64: 2, 17>}]} {
    %c0_i32 = arith.constant 0 : i32
    %0 = arith.cmpi eq, %arg0, %c0_i32 : i32
    %1 = arith.extui %0 : i1 to i32
    %c0_i32_0 = arith.constant 0 : i32
    %2 = arith.cmpi ne, %1, %c0_i32_0 : i32
    scf.if %2 {
      %cst_11 = arith.constant 0.000000e+00 : f32
      %14 = vector.broadcast %cst_11 : f32 to vector<2x128xf32>
      %c0_12 = arith.constant 0 : index
      %c0_13 = arith.constant 0 : index
      %15 = vector.load %arg7[%c0_12, %c0_13] : memref<2x128xf32, #tpu.memory_space<vmem>>, vector<2x128xf32>
      tpu.vector_store %arg7[%c0_12, %c0_13], %14 {strides = array<i32>} : memref<2x128xf32, #tpu.memory_space<vmem>>, vector<2x128xf32>,
    } else {
    }
    %c0 = arith.constant 0 : index
    %c0_1 = arith.constant 0 : index
    %3 = vector.load %arg7[%c0, %c0_1] : memref<2x128xf32, #tpu.memory_space<vmem>>, vector<2x128xf32>
    %c0_2 = arith.constant 0 : index
    %c0_3 = arith.constant 0 : index
    %c0_4 = arith.constant 0 : index
    %4 = vector.load %arg1[%c0_2, %c0_3, %c0_4] : memref<1x2x7840xbf16, #tpu.memory_space<vmem>>, vector<1x2x7840xbf16>
    %5 = vector.shape_cast %4 : vector<1x2x7840xbf16> to vector<2x7840xbf16>
    %c0_5 = arith.constant 0 : index
    %c0_6 = arith.constant 0 : index
    %c0_7 = arith.constant 0 : index
    %6 = vector.load %arg2[%c0_5, %c0_6, %c0_7] : memref<1x7840x128xbf16, #tpu.memory_space<vmem>>, vector<1x7840x128xbf16>
    %7 = vector.shape_cast %6 : vector<1x7840x128xbf16> to vector<7840x128xbf16>
    %cst = arith.constant dense<0.000000e+00> : vector<2x128xf32>
    %8 = tpu.matmul %5, %7, %cst {dimension_numbers = #tpu.dot_dimension_numbers<[1], [0], [0], [1], [0, 0, 1, 1], [], []>} : vector<2x7840xbf16>, vector<7840x128xbf16>, vector<2x128xf32> -> vector<2x128xf32>
    %9 = arith.addf %3, %8 : vector<2x128xf32>
    %c0_8 = arith.constant 0 : index
    %c0_9 = arith.constant 0 : index
    %10 = vector.load %arg7[%c0_8, %c0_9] : memref<2x128xf32, #tpu.memory_space<vmem>>, vector<2x128xf32>
    tpu.vector_store %arg7[%c0_8, %c0_9], %9 {strides = array<i32>} : memref<2x128xf32, #tpu.memory_space<vmem>>, vector<2x128xf32>,
    %c1_i32 = arith.constant 1 : i32
    %11 = arith.cmpi eq, %arg0, %c1_i32 : i32
    %12 = arith.extui %11 : i1 to i32
    %c0_i32_10 = arith.constant 0 : i32
    %13 = arith.cmpi ne, %12, %c0_i32_10 : i32
    scf.if %13 {
      %c0_11 = arith.constant 0 : index
      %c0_12 = arith.constant 0 : index
      %14 = vector.load %arg7[%c0_11, %c0_12] : memref<2x128xf32, #tpu.memory_space<vmem>>, vector<2x128xf32>
      %c0_13 = arith.constant 0 : index
      %c0_14 = arith.constant 0 : index
      %15 = vector.load %arg3[%c0_13, %c0_14] : memref<1x128xf32, #tpu.memory_space<vmem>>, vector<1x128xf32>
      %16 = vector.broadcast %15 : vector<1x128xf32> to vector<2x128xf32>
      %17 = arith.addf %14, %16 : vector<2x128xf32>
      %cst_15 = arith.constant 0.000000e+00 : f32
      %18 = vector.broadcast %cst_15 : f32 to vector<2x128xf32>
      %19 = arith.maximumf %17, %18 : vector<2x128xf32>
      %20 = arith.truncf %19 : vector<2x128xf32> to vector<2x128xbf16>
      %c0_16 = arith.constant 0 : index
      %c0_17 = arith.constant 0 : index
      %21 = vector.load %arg4[%c0_16, %c0_17] : memref<128x17xbf16, #tpu.memory_space<vmem>>, vector<128x17xbf16>
      %cst_18 = arith.constant dense<0.000000e+00> : vector<2x17xf32>
      %22 = tpu.matmul %20, %21, %cst_18 {dimension_numbers = #tpu.dot_dimension_numbers<[1], [0], [0], [1], [0, 0, 1, 1], [], []>} : vector<2x128xbf16>, vector<128x17xbf16>, vector<2x17xf32> -> vector<2x17xf32>
      %c0_19 = arith.constant 0 : index
      %c0_20 = arith.constant 0 : index
      %23 = vector.load %arg5[%c0_19, %c0_20] : memref<1x17xf32, #tpu.memory_space<vmem>>, vector<1x17xf32>
      %24 = vector.broadcast %23 : vector<1x17xf32> to vector<2x17xf32>
      %25 = arith.addf %22, %24 : vector<2x17xf32>
      %cst_21 = arith.constant dense<0xFF800000> : vector<2xf32>
      %26 = vector.multi_reduction <maximumf>, %25, %cst_21 [1] : vector<2x17xf32> to vector<2xf32>
      %27 = vector.shape_cast %26 : vector<2xf32> to vector<2x1xf32>
      %28 = vector.broadcast %27 : vector<2x1xf32> to vector<2x17xf32>
      %29 = arith.subf %25, %28 : vector<2x17xf32>
      %30 = math.exp %29 : vector<2x17xf32>
      %cst_22 = arith.constant dense<0.000000e+00> : vector<2xf32>
      %31 = vector.multi_reduction <add>, %30, %cst_22 [1] : vector<2x17xf32> to vector<2xf32>
      %32 = vector.shape_cast %31 : vector<2xf32> to vector<2x1xf32>
      %33 = math.log %32 : vector<2x1xf32>
      %34 = vector.broadcast %33 : vector<2x1xf32> to vector<2x17xf32>
      %35 = arith.subf %29, %34 : vector<2x17xf32>
      %c0_23 = arith.constant 0 : index
      %c0_24 = arith.constant 0 : index
      %36 = vector.load %arg6[%c0_23, %c0_24] : memref<2x17xf32, #tpu.memory_space<vmem>>, vector<2x17xf32>
      tpu.vector_store %arg6[%c0_23, %c0_24], %35 {strides = array<i32>} : memref<2x17xf32, #tpu.memory_space<vmem>>, vector<2x17xf32>,
    } else {
    }
    return
  }
  func.func @transform_0(%arg0: i32) -> (i32, i32, i32) {
    %c0_i32 = arith.constant 0 : i32
    %c0_i32_0 = arith.constant 0 : i32
    %c0_i32_1 = arith.constant 0 : i32
    return %arg0, %c0_i32, %c0_i32_0 : i32, i32, i32
  }
  func.func @transform_1(%arg0: i32) -> (i32, i32, i32) {
    %c0_i32 = arith.constant 0 : i32
    %c0_i32_0 = arith.constant 0 : i32
    %c0_i32_1 = arith.constant 0 : i32
    return %arg0, %c0_i32, %c0_i32_0 : i32, i32, i32
  }
  func.func @transform_2(%arg0: i32) -> (i32, i32) {
    %c0_i32 = arith.constant 0 : i32
    %c0_i32_0 = arith.constant 0 : i32
    %c0_i32_1 = arith.constant 0 : i32
    return %c0_i32, %c0_i32_0 : i32, i32
  }
  func.func @transform_3(%arg0: i32) -> (i32, i32) {
    %c0_i32 = arith.constant 0 : i32
    %c0_i32_0 = arith.constant 0 : i32
    %c0_i32_1 = arith.constant 0 : i32
    return %c0_i32, %c0_i32_0 : i32, i32
  }
  func.func @transform_4(%arg0: i32) -> (i32, i32) {
    %c0_i32 = arith.constant 0 : i32
    %c0_i32_0 = arith.constant 0 : i32
    %c0_i32_1 = arith.constant 0 : i32
    return %c0_i32, %c0_i32_0 : i32, i32
  }
  func.func @transform_5(%arg0: i32) -> (i32, i32) {
    %c0_i32 = arith.constant 0 : i32
    %c0_i32_0 = arith.constant 0 : i32
    %c0_i32_1 = arith.constant 0 : i32
    return %c0_i32, %c0_i32_0 : i32, i32
  }
}

</mosaic_0001>

<llo_original>
// kernel: close_layer_forward.1
$region0: #{close_layer_forward.1}
  #allocation0 [shape = 'u32[]', space=smem, size = 0x4, offset = 0x4, fixed_abs, tag = 'smem constant byte address 0x4 - core index']
  #allocation1 [shape = 'u32[144,128]{1,0:T(1,128)}', space=vmem, size = 0x12000, scoped, tag = 'internal scratch']
  #allocation2 [shape = 'f32[2,128]{1,0:T(2,128)}', space=vmem, size = 0x400, scoped, tag = 'scratch operand']
  %s0 = inlined_call_operand.vmem [shape: bf16[2,2,7840], index: 0, kind: input, shape index: {}]
  %s1 = inlined_call_operand.hbm [shape: bf16[2,7840,128], index: 1, kind: input, shape index: {}]
  %s2 = inlined_call_operand.hbm [shape: f32[1,128], index: 2, kind: input, shape index: {}]
  %s3 = inlined_call_operand.vmem [shape: bf16[128,17], index: 3, kind: input, shape index: {}]
  %s4 = inlined_call_operand.hbm [shape: f32[1,17], index: 4, kind: input, shape index: {}]
  %s5 = inlined_call_operand.hbm [shape: f32[2,17], index: 5, kind: output, shape index: {}]
  %s6 = sld [smem:[#allocation0]]
  $region73: #{close_layer_forward.1} parent=0
    _
  %s8 = ssub.s32 1, %s6
  %s9 = scalar_select 0, %s8, %s6
  $region1: #{close_layer_forward.1} parent=0
    #allocation3 [shape = 'u8[4014080]{0}', space=vmem, size = 0x3d4000, scoped, tag = 'input window, operand 1']
    #allocation4 [shape = 's32[2]{0}', space=sflag, size = 0x8, scoped, tag = 'scoped memory for close_layer_forward.1']
    #allocation5 [shape = 's32[2]{0}', space=sflag, size = 0x8, scoped, tag = 'scoped memory for close_layer_forward.1']
    #allocation6 [shape = 'u8[512]{0}', space=vmem, size = 0x400, scoped, tag = 'input window, operand 2, single buffered']
    #allocation7 [shape = 's32[1]{0}', space=sflag, size = 0x4, scoped, tag = 'scoped memory for close_layer_forward.1']
    #allocation8 [shape = 'u8[512]{0}', space=vmem, size = 0x400, scoped, tag = 'input window, operand 4, single buffered']
    #allocation9 [shape = 'u8[1024]{0}', space=vmem, size = 0x400, scoped, tag = 'output window, operand 0, single buffered']
    %10 = vsyncpa [#allocation4], 0
    %s11 = scalar_lea.sflag [#allocation4], 1
    %12 = vsyncpa %s11, 0
    %13 = vsyncpa [#allocation7], 0
    %14 = vsyncpa [#allocation5], 0
    loop: start=0, step=1, limit=4
    $region2: #{close_layer_forward.1} parent=1 // loop_pre_header
      _
    $region3: #{close_layer_forward.1} parent=1 // loop_header
      %s16 = sphi 0, %s20
      %p17 = scmp.ge.s32.totalorder %s16, 4
      %s26 = sphi 0, %s28
      %s29 = sphi 0, %s26
      %s30 = sphi 0, %s29
      %s46 = sphi 0, %s30
      %s52 = sphi 0, %s54
      %s55 = sphi 0, %s52
      %s56 = sphi 0, %s55
      %s72 = sphi 0, %s56
      %s76 = sphi 0, %s76
      %s78 = sphi 0, %s76
      %s79 = sphi 0, %s78
      %s93 = sphi 0, %s79
      %s97 = sphi 0, %s97
      %s99 = sphi 0, %s97
      %s100 = sphi 0, %s99
      %s114 = sphi 0, %s100
      %s118 = sphi 0, %s118
      %s120 = sphi 0, %s118
      %s121 = sphi 0, %s120
      %s135 = sphi 0, %s121
      %s139 = sphi 0, %s139
      %s141 = sphi 0, %s139
      %s142 = sphi 0, %s141
      %s156 = sphi 0, %s142
    $region4: #{close_layer_forward.1} parent=1 // loop_header_branch
      %19 = sbr.rel (%p17) target = $region8
    $region5: #{close_layer_forward.1} parent=1 // loop_body
      %s21 = ssub.s32 %s16, 1
      %s22 = ssub.s32 %s16, 2
      %s23 = sadd.s32 %s16, 1
      %s24 = ssub.s32 %s16, %s23
      %p25 = scmp.eq.s32.totalorder %s24, 0
      %s27 = sadd.s32 %s26, 1
      %s28 = scalar_select %p25, %s26, %s27
      %p31 = pneg %p25
      %p32 = scmp.eq.s32.totalorder %s16, 1
      %p33 = por %p31, %p32
      %p34 = scmp.ne.s32.totalorder %s26, %s29
      %p35 = scmp.eq.s32.totalorder %s16, 0
      %p36 = por %p34, %p35
      %p37 = scmp.ne.s32.totalorder %s26, %s29
      %p38 = scmp.eq.s32.totalorder %s21, 1
      %p39 = por %p37, %p38
      %p40 = scmp.ne.s32.totalorder %s29, %s30
      %p41 = scmp.eq.s32.totalorder %s21, 0
      %p42 = por %p40, %p41
      %p43 = scmp.ne.s32.totalorder %s29, %s30
      %p44 = scmp.eq.s32.totalorder %s22, 1
      %p45 = por %p43, %p44
      %p47 = scmp.ne.s32.totalorder %s30, %s46
      %p48 = scmp.eq.s32.totalorder %s22, 0
      %p49 = por %p47, %p48
      %s50 = ssub.s32 %s16, %s23
      %p51 = scmp.eq.s32.totalorder %s50, 0
      %s53 = sadd.s32 %s52, 1
      %s54 = scalar_select %p51, %s52, %s53
      %p57 = pneg %p51
      %p58 = scmp.eq.s32.totalorder %s16, 1
      %p59 = por %p57, %p58
      %p60 = scmp.ne.s32.totalorder %s52, %s55
      %p61 = scmp.eq.s32.totalorder %s16, 0
      %p62 = por %p60, %p61
      %p63 = scmp.ne.s32.totalorder %s52, %s55
      %p64 = scmp.eq.s32.totalorder %s21, 1
      %p65 = por %p63, %p64
      %p66 = scmp.ne.s32.totalorder %s55, %s56
      %p67 = scmp.eq.s32.totalorder %s21, 0
      %p68 = por %p66, %p67
      %p69 = scmp.ne.s32.totalorder %s55, %s56
      %p70 = scmp.eq.s32.totalorder %s22, 1
      %p71 = por %p69, %p70
      %p73 = scmp.ne.s32.totalorder %s56, %s72
      %p74 = scmp.eq.s32.totalorder %s22, 0
      %p75 = por %p73, %p74
      %s77 = sadd.s32 %s76, 1
      %p80 = scmp.eq.s32.totalorder %s16, 1
      %p81 = scmp.ne.s32.totalorder %s76, %s78
      %p82 = scmp.eq.s32.totalorder %s16, 0
      %p83 = por %p81, %p82
      %p84 = scmp.ne.s32.totalorder %s76, %s78
      %p85 = scmp.eq.s32.totalorder %s21, 1
      %p86 = por %p84, %p85
      %p87 = scmp.ne.s32.totalorder %s78, %s79
      %p88 = scmp.eq.s32.totalorder %s21, 0
      %p89 = por %p87, %p88
      %p90 = scmp.ne.s32.totalorder %s78, %s79
      %p91 = scmp.eq.s32.totalorder %s22, 1
      %p92 = por %p90, %p91
      %p94 = scmp.ne.s32.totalorder %s79, %s93
      %p95 = scmp.eq.s32.totalorder %s22, 0
      %p96 = por %p94, %p95
      %s98 = sadd.s32 %s97, 1
      %p101 = scmp.eq.s32.totalorder %s16, 1
      %p102 = scmp.ne.s32.totalorder %s97, %s99
      %p103 = scmp.eq.s32.totalorder %s16, 0
      %p104 = por %p102, %p103
      %p105 = scmp.ne.s32.totalorder %s97, %s99
      %p106 = scmp.eq.s32.totalorder %s21, 1
      %p107 = por %p105, %p106
      %p108 = scmp.ne.s32.totalorder %s99, %s100
      %p109 = scmp.eq.s32.totalorder %s21, 0
      %p110 = por %p108, %p109
      %p111 = scmp.ne.s32.totalorder %s99, %s100
      %p112 = scmp.eq.s32.totalorder %s22, 1
      %p113 = por %p111, %p112
      %p115 = scmp.ne.s32.totalorder %s100, %s114
      %p116 = scmp.eq.s32.totalorder %s22, 0
      %p117 = por %p115, %p116
      %s119 = sadd.s32 %s118, 1
      %p122 = scmp.eq.s32.totalorder %s16, 1
      %p123 = scmp.ne.s32.totalorder %s118, %s120
      %p124 = scmp.eq.s32.totalorder %s16, 0
      %p125 = por %p123, %p124
      %p126 = scmp.ne.s32.totalorder %s118, %s120
      %p127 = scmp.eq.s32.totalorder %s21, 1
      %p128 = por %p126, %p127
      %p129 = scmp.ne.s32.totalorder %s120, %s121
      %p130 = scmp.eq.s32.totalorder %s21, 0
      %p131 = por %p129, %p130
      %p132 = scmp.ne.s32.totalorder %s120, %s121
      %p133 = scmp.eq.s32.totalorder %s22, 1
      %p134 = por %p132, %p133
      %p136 = scmp.ne.s32.totalorder %s121, %s135
      %p137 = scmp.eq.s32.totalorder %s22, 0
      %p138 = por %p136, %p137
      %s140 = sadd.s32 %s139, 1
      %p143 = scmp.eq.s32.totalorder %s16, 1
      %p144 = scmp.ne.s32.totalorder %s139, %s141
      %p145 = scmp.eq.s32.totalorder %s16, 0
      %p146 = por %p144, %p145
      %p147 = scmp.ne.s32.totalorder %s139, %s141
      %p148 = scmp.eq.s32.totalorder %s21, 1
      %p149 = por %p147, %p148
      %p150 = scmp.ne.s32.totalorder %s141, %s142
      %p151 = scmp.eq.s32.totalorder %s21, 0
      %p152 = por %p150, %p151
      %p153 = scmp.ne.s32.totalorder %s141, %s142
      %p154 = scmp.eq.s32.totalorder %s22, 1
      %p155 = por %p153, %p154
      %p157 = scmp.ne.s32.totalorder %s142, %s156
      %p158 = scmp.eq.s32.totalorder %s22, 0
      %p159 = por %p157, %p158
      %p160 = scmp.le.s32.totalorder 1, %s16
      %p161 = scmp.lt.s32.totalorder %s16, 3
      %p162 = pnand %p160, %p161
      %p163 = pneg %p162
      // Predicated region
      $region9: #{close_layer_forward.1} parent=5 // pred_check
        _
      $region10: #{close_layer_forward.1} parent=5 // pred_check_branch
        %165 = sbr.rel (%p162) target = $region12
      $region11: #{close_layer_forward.1} parent=5 // pred_region
        %s166 = ssub.s32 %s16, 1
        // Predicated region
        $region13: #{close_layer_forward.1} parent=11 // pred_check
          %p167 = pneg %p89
        $region14: #{close_layer_forward.1} parent=11 // pred_check_branch
          %169 = sbr.rel (%p167) target = $region16
        $region15: #{close_layer_forward.1} parent=11 // pred_region
          %s171 = ssub.s32 16, 16
          %172 = vsyncadd [#allocation7], %s171
          %s174 = sshll.u32 [#allocation6], 4
          %s175 = int_to_ptr.vmem [resolvable:$true] %s174
          %177 = dma.hbm_to_vmem [thread:$0]  %s2, 16, %s175, [#allocation7]
        $region16: #{close_layer_forward.1} parent=11 // pred_fallthru
          _
        // Predicated region
        $region17: #{close_layer_forward.1} parent=11 // pred_check
          %p178 = pneg %p110
        $region18: #{close_layer_forward.1} parent=11 // pred_check_branch
          %180 = sbr.rel (%p178) target = $region20
        $region19: #{close_layer_forward.1} parent=11 // pred_region
          _
        $region20: #{close_layer_forward.1} parent=11 // pred_fallthru
          _
        // Predicated region
        $region21: #{close_layer_forward.1} parent=11 // pred_check
          %p181 = pneg %p131
        $region22: #{close_layer_forward.1} parent=11 // pred_check_branch
          %183 = sbr.rel (%p181) target = $region24
        $region23: #{close_layer_forward.1} parent=11 // pred_region
          %s185 = ssub.s32 16, 16
          %186 = vsyncadd [#allocation7], %s185
          %s188 = sshll.u32 [#allocation8], 4
          %s189 = int_to_ptr.vmem [resolvable:$true] %s188
          %191 = dma.hbm_to_vmem [thread:$0]  %s4, 16, %s189, [#allocation7]
        $region24: #{close_layer_forward.1} parent=11 // pred_fallthru
          _
      $region12: #{close_layer_forward.1} parent=5 // pred_fallthru
        _
      %p192 = scmp.lt.s32.totalorder %s16, 2
      // Predicated region
      $region25: #{close_layer_forward.1} parent=5 // pred_check
        %p193 = pneg %p192
      $region26: #{close_layer_forward.1} parent=5 // pred_check_branch
        %195 = sbr.rel (%p193) target = $region28
      $region27: #{close_layer_forward.1} parent=5 // pred_region
        // Predicated region
        $region29: #{close_layer_forward.1} parent=27 // pred_check
          %p196 = pneg %p36
        $region30: #{close_layer_forward.1} parent=27 // pred_check_branch
          %198 = sbr.rel (%p196) target = $region32
        $region31: #{close_layer_forward.1} parent=27 // pred_region
          %p199 = scmp.lt.s32.totalorder %s16, 1
          %s200 = scalar_select %p199, %s16, 1
          %s201 = smul.addr %s200, 62
          %s202 = scalar_lea.vmem %s0, %s201
        $region32: #{close_layer_forward.1} parent=27 // pred_fallthru
          _
        // Predicated region
        $region33: #{close_layer_forward.1} parent=27 // pred_check
          %p203 = pneg %p62
        $region34: #{close_layer_forward.1} parent=27 // pred_check_branch
          %205 = sbr.rel (%p203) target = $region36
        $region35: #{close_layer_forward.1} parent=27 // pred_region
          %s206 = sand.u32 %s52, 1
          %s207 = scalar_lea.sflag [#allocation4], %s206
          %s208 = sand.u32 %s52, 1
          %s209 = smul.addr %s208, 3920
          %s210 = scalar_lea.vmem [#allocation3], %s209
          %s212 = ssub.s32 62720, 62720
          %213 = vsyncadd %s207, %s212
          %s214 = smul.addr %s16, 980
          %s215 = smul.addr %s214, 64
          %s216 = scalar_lea.hbm %s1, %s215
          %s217 = sshll.u32 %s210, 4
          %s218 = int_to_ptr.vmem [resolvable:$true] %s217
          %223 = dma.hbm_to_vmem [thread:$0]  %s216, 62720, %s218, %s207, 64, 64, 4
        $region36: #{close_layer_forward.1} parent=27 // pred_fallthru
          _
      $region28: #{close_layer_forward.1} parent=5 // pred_fallthru
        _
      %p224 = scmp.le.s32.totalorder 1, %s16
      %p225 = scmp.lt.s32.totalorder %s16, 3
      %p226 = pnand %p224, %p225
      %p227 = pneg %p226
      // Predicated region
      $region37: #{close_layer_forward.1} parent=5 // pred_check
        _
      $region38: #{close_layer_forward.1} parent=5 // pred_check_branch
        %229 = sbr.rel (%p226) target = $region40
      $region39: #{close_layer_forward.1} parent=5 // pred_region
        %s230 = ssub.s32 %s16, 1
        %s231 = sand.u32 %s55, 1
        %s232 = scalar_lea.sflag [#allocation4], %s231
        %s233 = sand.u32 %s55, 1
        %s234 = smul.addr %s233, 3920
        %s235 = scalar_lea.vmem [#allocation3], %s234
        // Predicated region
        $region41: #{close_layer_forward.1} parent=39 // pred_check
          %p236 = pneg %p68
        $region42: #{close_layer_forward.1} parent=39 // pred_check_branch
          %238 = sbr.rel (%p236) target = $region44
        $region43: #{close_layer_forward.1} parent=39 // pred_region
          %239 = dma.done %s232, 62720
        $region44: #{close_layer_forward.1} parent=39 // pred_fallthru
          _
        // Predicated region
        $region45: #{close_layer_forward.1} parent=39 // pred_check
          %p240 = pneg %p89
        $region46: #{close_layer_forward.1} parent=39 // pred_check_branch
          %242 = sbr.rel (%p240) target = $region48
        $region47: #{close_layer_forward.1} parent=39 // pred_region
          %243 = dma.done [#allocation7], 16
        $region48: #{close_layer_forward.1} parent=39 // pred_fallthru
          _
        // Predicated region
        $region49: #{close_layer_forward.1} parent=39 // pred_check
          %p244 = pneg %p131
        $region50: #{close_layer_forward.1} parent=39 // pred_check_branch
          %246 = sbr.rel (%p244) target = $region52
        $region51: #{close_layer_forward.1} parent=39 // pred_region
          %247 = dma.done [#allocation7], 16
        $region52: #{close_layer_forward.1} parent=39 // pred_fallthru
          _
        %p248 = scmp.lt.s32.totalorder %s21, 1
        %s249 = scalar_select %p248, %s21, 1
        %s250 = smul.addr %s249, 62
        %s251 = scalar_lea.vmem %s0, %s250
        %p252 = pneg %p42
        %p253 = pneg %p39
        %s254 = sand.u32 %s55, 1
        %s255 = scalar_lea.sflag [#allocation4], %s254
        %s256 = sand.u32 %s55, 1
        %s257 = smul.addr %s256, 3920
        %s258 = scalar_lea.vmem [#allocation3], %s257
        %p259 = pneg %p68
        %p260 = pneg %p65
        %p261 = pneg %p89
        %p262 = pneg %p86
        %p263 = pneg %p110
        %p264 = pneg %p107
        %p265 = pneg %p131
        %p266 = pneg %p128
        %p267 = pneg %p152
        %p268 = pneg %p149
        %p269 = scmp.lt.s32.totalorder %s21, 1
        %s270 = scalar_select %p269, %s21, 1
        %s271 = smul.addr %s270, 62
        %s272 = scalar_lea.vmem %s0, %s271
        %p274 = scmp.eq.s32.totalorder %s21, 0
        // Predicated region
        $region53: #{close_layer_forward.1} parent=39 // pred_check
          %p275 = pneg %p274
        $region54: #{close_layer_forward.1} parent=39 // pred_check_branch
          %277 = sbr.rel (%p275) target = $region56
        $region55: #{close_layer_forward.1} parent=39 // pred_region
          %278 = vst [vmem:[#allocation2] sm:$0x3] 0.0
        $region56: #{close_layer_forward.1} parent=39 // pred_fallthru
          _
        %v279 = vld [vmem:[#allocation2] sm:$0x3]
        %v280 = vld [vmem:[%s272] sm:$0xff]
        %v281 = vld [vmem:[%s272 + $0x8] sm:$0xff]
        %v282 = vld [vmem:[%s272 + $0x10] sm:$0xff]
        %v283 = vld [vmem:[%s272 + $0x18] sm:$0xff]
        %v284 = vld [vmem:[%s272 + $0x20] sm:$0xff]
        %v285 = vld [vmem:[%s272 + $0x28] sm:$0xff]
        %v286 = vld [vmem:[%s272 + $0x30] sm:$0xff]
        %v287 = vld [vmem:[%s272 + $0x38] sm:$0x3f]
        %v288 = vld [vmem:[%s235] sm:$0xf]
        %v289 = vld [vmem:[%s235 + $0x4] sm:$0xf]
        %v290 = vld [vmem:[%s235 + $0x8] sm:$0xf]
        %v291 = vld [vmem:[%s235 + $0xc] sm:$0xf]
        %v292 = vld [vmem:[%s235 + $0x10] sm:$0xf]
        %v293 = vld [vmem:[%s235 + $0x14] sm:$0xf]
        %v294 = vld [vmem:[%s235 + $0x18] sm:$0xf]
        %v295 = vld [vmem:[%s235 + $0x1c] sm:$0xf]
        %v296 = vld [vmem:[%s235 + $0x20] sm:$0xf]
        %v297 = vld [vmem:[%s235 + $0x24] sm:$0xf]
        %v298 = vld [vmem:[%s235 + $0x28] sm:$0xf]
        %v299 = vld [vmem:[%s235 + $0x2c] sm:$0xf]
        %v300 = vld [vmem:[%s235 + $0x30] sm:$0xf]
        %v301 = vld [vmem:[%s235 + $0x34] sm:$0xf]
        %v302 = vld [vmem:[%s235 + $0x38] sm:$0xf]
        %v303 = vld [vmem:[%s235 + $0x3c] sm:$0xf]
        %v304 = vld [vmem:[%s235 + $0x40] sm:$0xf]
        %v305 = vld [vmem:[%s235 + $0x44] sm:$0xf]
        %v306 = vld [vmem:[%s235 + $0x48] sm:$0xf]
        %v307 = vld [vmem:[%s235 + $0x4c] sm:$0xf]
        %v308 = vld [vmem:[%s235 + $0x50] sm:$0xf]
        %v309 = vld [vmem:[%s235 + $0x54] sm:$0xf]
        %v310 = vld [vmem:[%s235 + $0x58] sm:$0xf]
        %v311 = vld [vmem:[%s235 + $0x5c] sm:$0xf]
        %v312 = vld [vmem:[%s235 + $0x60] sm:$0xf]
        %v313 = vld [vmem:[%s235 + $0x64] sm:$0xf]
        %v314 = vld [vmem:[%s235 + $0x68] sm:$0xf]
        %v315 = vld [vmem:[%s235 + $0x6c] sm:$0xf]
        %v316 = vld [vmem:[%s235 + $0x70] sm:$0xf]
        %v317 = vld [vmem:[%s235 + $0x74] sm:$0xf]
        %v318 = vld [vmem:[%s235 + $0x78] sm:$0xf]
        %v319 = vld [vmem:[%s235 + $0x7c] sm:$0xf]
        %v320 = vld [vmem:[%s235 + $0x80] sm:$0xf]
        %v321 = vld [vmem:[%s235 + $0x84] sm:$0xf]
        %v322 = vld [vmem:[%s235 + $0x88] sm:$0xf]
        %v323 = vld [vmem:[%s235 + $0x8c] sm:$0xf]
        %v324 = vld [vmem:[%s235 + $0x90] sm:$0xf]
        %v325 = vld [vmem:[%s235 + $0x94] sm:$0xf]
        %v326 = vld [vmem:[%s235 + $0x98] sm:$0xf]
        %v327 = vld [vmem:[%s235 + $0x9c] sm:$0xf]
        %v328 = vld [vmem:[%s235 + $0xa0] sm:$0xf]
        %v329 = vld [vmem:[%s235 + $0xa4] sm:$0xf]
        %v330 = vld [vmem:[%s235 + $0xa8] sm:$0xf]
        %v331 = vld [vmem:[%s235 + $0xac] sm:$0xf]
        %v332 = vld [vmem:[%s235 + $0xb0] sm:$0xf]
        %v333 = vld [vmem:[%s235 + $0xb4] sm:$0xf]
        %v334 = vld [vmem:[%s235 + $0xb8] sm:$0xf]
        %v335 = vld [vmem:[%s235 + $0xbc] sm:$0xf]
        %v336 = vld [vmem:[%s235 + $0xc0] sm:$0xf]
        %v337 = vld [vmem:[%s235 + $0xc4] sm:$0xf]
        %v338 = vld [vmem:[%s235 + $0xc8] sm:$0xf]
        %v339 = vld [vmem:[%s235 + $0xcc] sm:$0xf]
        %v340 = vld [vmem:[%s235 + $0xd0] sm:$0xf]
        %v341 = vld [vmem:[%s235 + $0xd4] sm:$0xf]
        %v342 = vld [vmem:[%s235 + $0xd8] sm:$0xf]
        %v343 = vld [vmem:[%s235 + $0xdc] sm:$0xf]
        %v344 = vld [vmem:[%s235 + $0xe0] sm:$0xf]
        %v345 = vld [vmem:[%s235 + $0xe4] sm:$0xf]
        %v346 = vld [vmem:[%s235 + $0xe8] sm:$0xf]
        %v347 = vld [vmem:[%s235 + $0xec] sm:$0xf]
        %v348 = vld [vmem:[%s235 + $0xf0] sm:$0xf]
        %v349 = vld [vmem:[%s235 + $0xf4] sm:$0xf]
        %v350 = vld [vmem:[%s235 + $0xf8] sm:$0xf]
        %v351 = vld [vmem:[%s235 + $0xfc] sm:$0xf]
        %v352 = vld [vmem:[%s235 + $0x100] sm:$0xf]
        %v353 = vld [vmem:[%s235 + $0x104] sm:$0xf]
        %v354 = vld [vmem:[%s235 + $0x108] sm:$0xf]
        %v355 = vld [vmem:[%s235 + $0x10c] sm:$0xf]
        %v356 = vld [vmem:[%s235 + $0x110] sm:$0xf]
        %v357 = vld [vmem:[%s235 + $0x114] sm:$0xf]
        %v358 = vld [vmem:[%s235 + $0x118] sm:$0xf]
        %v359 = vld [vmem:[%s235 + $0x11c] sm:$0xf]
        %v360 = vld [vmem:[%s235 + $0x120] sm:$0xf]
        %v361 = vld [vmem:[%s235 + $0x124] sm:$0xf]
        %v362 = vld [vmem:[%s235 + $0x128] sm:$0xf]
        %v363 = vld [vmem:[%s235 + $0x12c] sm:$0xf]
        %v364 = vld [vmem:[%s235 + $0x130] sm:$0xf]
        %v365 = vld [vmem:[%s235 + $0x134] sm:$0xf]
        %v366 = vld [vmem:[%s235 + $0x138] sm:$0xf]
        %v367 = vld [vmem:[%s235 + $0x13c] sm:$0xf]
        %v368 = vld [vmem:[%s235 + $0x140] sm:$0xf]
        %v369 = vld [vmem:[%s235 + $0x144] sm:$0xf]
        %v370 = vld [vmem:[%s235 + $0x148] sm:$0xf]
        %v371 = vld [vmem:[%s235 + $0x14c] sm:$0xf]
        %v372 = vld [vmem:[%s235 + $0x150] sm:$0xf]
        %v373 = vld [vmem:[%s235 + $0x154] sm:$0xf]
        %v374 = vld [vmem:[%s235 + $0x158] sm:$0xf]
        %v375 = vld [vmem:[%s235 + $0x15c] sm:$0xf]
        %v376 = vld [vmem:[%s235 + $0x160] sm:$0xf]
        %v377 = vld [vmem:[%s235 + $0x164] sm:$0xf]
        %v378 = vld [vmem:[%s235 + $0x168] sm:$0xf]
        %v379 = vld [vmem:[%s235 + $0x16c] sm:$0xf]
        %v380 = vld [vmem:[%s235 + $0x170] sm:$0xf]
        %v381 = vld [vmem:[%s235 + $0x174] sm:$0xf]
        %v382 = vld [vmem:[%s235 + $0x178] sm:$0xf]
        %v383 = vld [vmem:[%s235 + $0x17c] sm:$0xf]
        %v384 = vld [vmem:[%s235 + $0x180] sm:$0xf]
        %v385 = vld [vmem:[%s235 + $0x184] sm:$0xf]
        %v386 = vld [vmem:[%s235 + $0x188] sm:$0xf]
        %v387 = vld [vmem:[%s235 + $0x18c] sm:$0xf]
        %v388 = vld [vmem:[%s235 + $0x190] sm:$0xf]
        %v389 = vld [vmem:[%s235 + $0x194] sm:$0xf]
        %v390 = vld [vmem:[%s235 + $0x198] sm:$0xf]
        %v391 = vld [vmem:[%s235 + $0x19c] sm:$0xf]
        %v392 = vld [vmem:[%s235 + $0x1a0] sm:$0xf]
        %v393 = vld [vmem:[%s235 + $0x1a4] sm:$0xf]
        %v394 = vld [vmem:[%s235 + $0x1a8] sm:$0xf]
        %v395 = vld [vmem:[%s235 + $0x1ac] sm:$0xf]
        %v396 = vld [vmem:[%s235 + $0x1b0] sm:$0xf]
        %v397 = vld [vmem:[%s235 + $0x1b4] sm:$0xf]
        %v398 = vld [vmem:[%s235 + $0x1b8] sm:$0xf]
        %v399 = vld [vmem:[%s235 + $0x1bc] sm:$0xf]
        %v400 = vld [vmem:[%s235 + $0x1c0] sm:$0xf]
        %v401 = vld [vmem:[%s235 + $0x1c4] sm:$0xf]
        %v402 = vld [vmem:[%s235 + $0x1c8] sm:$0xf]
        %v403 = vld [vmem:[%s235 + $0x1cc] sm:$0xf]
        %v404 = vld [vmem:[%s235 + $0x1d0] sm:$0xf]
        %v405 = vld [vmem:[%s235 + $0x1d4] sm:$0xf]
        %v406 = vld [vmem:[%s235 + $0x1d8] sm:$0xf]
        %v407 = vld [vmem:[%s235 + $0x1dc] sm:$0xf]
        %v408 = vld [vmem:[%s235 + $0x1e0] sm:$0xf]
        %v409 = vld [vmem:[%s235 + $0x1e4] sm:$0xf]
        %v410 = vld [vmem:[%s235 + $0x1e8] sm:$0xf]
        %v411 = vld [vmem:[%s235 + $0x1ec] sm:$0xf]
        %v412 = vld [vmem:[%s235 + $0x1f0] sm:$0xf]
        %v413 = vld [vmem:[%s235 + $0x1f4] sm:$0xf]
        %v414 = vld [vmem:[%s235 + $0x1f8] sm:$0xf]
        %v415 = vld [vmem:[%s235 + $0x1fc] sm:$0xf]
        %v416 = vld [vmem:[%s235 + $0x200] sm:$0xf]
        %v417 = vld [vmem:[%s235 + $0x204] sm:$0xf]
        %v418 = vld [vmem:[%s235 + $0x208] sm:$0xf]
        %v419 = vld [vmem:[%s235 + $0x20c] sm:$0xf]
        %v420 = vld [vmem:[%s235 + $0x210] sm:$0xf]
        %v421 = vld [vmem:[%s235 + $0x214] sm:$0xf]
        %v422 = vld [vmem:[%s235 + $0x218] sm:$0xf]
        %v423 = vld [vmem:[%s235 + $0x21c] sm:$0xf]
        %v424 = vld [vmem:[%s235 + $0x220] sm:$0xf]
        %v425 = vld [vmem:[%s235 + $0x224] sm:$0xf]
        %v426 = vld [vmem:[%s235 + $0x228] sm:$0xf]
        %v427 = vld [vmem:[%s235 + $0x22c] sm:$0xf]
        %v428 = vld [vmem:[%s235 + $0x230] sm:$0xf]
        %v429 = vld [vmem:[%s235 + $0x234] sm:$0xf]
        %v430 = vld [vmem:[%s235 + $0x238] sm:$0xf]
        %v431 = vld [vmem:[%s235 + $0x23c] sm:$0xf]
        %v432 = vld [vmem:[%s235 + $0x240] sm:$0xf]
        %v433 = vld [vmem:[%s235 + $0x244] sm:$0xf]
        %v434 = vld [vmem:[%s235 + $0x248] sm:$0xf]
        %v435 = vld [vmem:[%s235 + $0x24c] sm:$0xf]
        %v436 = vld [vmem:[%s235 + $0x250] sm:$0xf]
        %v437 = vld [vmem:[%s235 + $0x254] sm:$0xf]
        %v438 = vld [vmem:[%s235 + $0x258] sm:$0xf]
        %v439 = vld [vmem:[%s235 + $0x25c] sm:$0xf]
        %v440 = vld [vmem:[%s235 + $0x260] sm:$0xf]
        %v441 = vld [vmem:[%s235 + $0x264] sm:$0xf]
        %v442 = vld [vmem:[%s235 + $0x268] sm:$0xf]
        %v443 = vld [vmem:[%s235 + $0x26c] sm:$0xf]
        %v444 = vld [vmem:[%s235 + $0x270] sm:$0xf]
        %v445 = vld [vmem:[%s235 + $0x274] sm:$0xf]
        %v446 = vld [vmem:[%s235 + $0x278] sm:$0xf]
        %v447 = vld [vmem:[%s235 + $0x27c] sm:$0xf]
        %v448 = vld [vmem:[%s235 + $0x280] sm:$0xf]
        %v449 = vld [vmem:[%s235 + $0x284] sm:$0xf]
        %v450 = vld [vmem:[%s235 + $0x288] sm:$0xf]
        %v451 = vld [vmem:[%s235 + $0x28c] sm:$0xf]
        %v452 = vld [vmem:[%s235 + $0x290] sm:$0xf]
        %v453 = vld [vmem:[%s235 + $0x294] sm:$0xf]
        %v454 = vld [vmem:[%s235 + $0x298] sm:$0xf]
        %v455 = vld [vmem:[%s235 + $0x29c] sm:$0xf]
        %v456 = vld [vmem:[%s235 + $0x2a0] sm:$0xf]
        %v457 = vld [vmem:[%s235 + $0x2a4] sm:$0xf]
        %v458 = vld [vmem:[%s235 + $0x2a8] sm:$0xf]
        %v459 = vld [vmem:[%s235 + $0x2ac] sm:$0xf]
        %v460 = vld [vmem:[%s235 + $0x2b0] sm:$0xf]
        %v461 = vld [vmem:[%s235 + $0x2b4] sm:$0xf]
        %v462 = vld [vmem:[%s235 + $0x2b8] sm:$0xf]
        %v463 = vld [vmem:[%s235 + $0x2bc] sm:$0xf]
        %v464 = vld [vmem:[%s235 + $0x2c0] sm:$0xf]
        %v465 = vld [vmem:[%s235 + $0x2c4] sm:$0xf]
        %v466 = vld [vmem:[%s235 + $0x2c8] sm:$0xf]
        %v467 = vld [vmem:[%s235 + $0x2cc] sm:$0xf]
        %v468 = vld [vmem:[%s235 + $0x2d0] sm:$0xf]
        %v469 = vld [vmem:[%s235 + $0x2d4] sm:$0xf]
        %v470 = vld [vmem:[%s235 + $0x2d8] sm:$0xf]
        %v471 = vld [vmem:[%s235 + $0x2dc] sm:$0xf]
        %v472 = vld [vmem:[%s235 + $0x2e0] sm:$0xf]
        %v473 = vld [vmem:[%s235 + $0x2e4] sm:$0xf]
        %v474 = vld [vmem:[%s235 + $0x2e8] sm:$0xf]
        %v475 = vld [vmem:[%s235 + $0x2ec] sm:$0xf]
        %v476 = vld [vmem:[%s235 + $0x2f0] sm:$0xf]
        %v477 = vld [vmem:[%s235 + $0x2f4] sm:$0xf]
        %v478 = vld [vmem:[%s235 + $0x2f8] sm:$0xf]
        %v479 = vld [vmem:[%s235 + $0x2fc] sm:$0xf]
        %v480 = vld [vmem:[%s235 + $0x300] sm:$0xf]
        %v481 = vld [vmem:[%s235 + $0x304] sm:$0xf]
        %v482 = vld [vmem:[%s235 + $0x308] sm:$0xf]
        %v483 = vld [vmem:[%s235 + $0x30c] sm:$0xf]
        %v484 = vld [vmem:[%s235 + $0x310] sm:$0xf]
        %v485 = vld [vmem:[%s235 + $0x314] sm:$0xf]
        %v486 = vld [vmem:[%s235 + $0x318] sm:$0xf]
        %v487 = vld [vmem:[%s235 + $0x31c] sm:$0xf]
        %v488 = vld [vmem:[%s235 + $0x320] sm:$0xf]
        %v489 = vld [vmem:[%s235 + $0x324] sm:$0xf]
        %v490 = vld [vmem:[%s235 + $0x328] sm:$0xf]
        %v491 = vld [vmem:[%s235 + $0x32c] sm:$0xf]
        %v492 = vld [vmem:[%s235 + $0x330] sm:$0xf]
        %v493 = vld [vmem:[%s235 + $0x334] sm:$0xf]
        %v494 = vld [vmem:[%s235 + $0x338] sm:$0xf]
        %v495 = vld [vmem:[%s235 + $0x33c] sm:$0xf]
        %v496 = vld [vmem:[%s235 + $0x340] sm:$0xf]
        %v497 = vld [vmem:[%s235 + $0x344] sm:$0xf]
        %v498 = vld [vmem:[%s235 + $0x348] sm:$0xf]
        %v499 = vld [vmem:[%s235 + $0x34c] sm:$0xf]
        %v500 = vld [vmem:[%s235 + $0x350] sm:$0xf]
        %v501 = vld [vmem:[%s235 + $0x354] sm:$0xf]
        %v502 = vld [vmem:[%s235 + $0x358] sm:$0xf]
        %v503 = vld [vmem:[%s235 + $0x35c] sm:$0xf]
        %v504 = vld [vmem:[%s235 + $0x360] sm:$0xf]
        %v505 = vld [vmem:[%s235 + $0x364] sm:$0xf]
        %v506 = vld [vmem:[%s235 + $0x368] sm:$0xf]
        %v507 = vld [vmem:[%s235 + $0x36c] sm:$0xf]
        %v508 = vld [vmem:[%s235 + $0x370] sm:$0xf]
        %v509 = vld [vmem:[%s235 + $0x374] sm:$0xf]
        %v510 = vld [vmem:[%s235 + $0x378] sm:$0xf]
        %v511 = vld [vmem:[%s235 + $0x37c] sm:$0xf]
        %v512 = vld [vmem:[%s235 + $0x380] sm:$0xf]
        %v513 = vld [vmem:[%s235 + $0x384] sm:$0xf]
        %v514 = vld [vmem:[%s235 + $0x388] sm:$0xf]
        %v515 = vld [vmem:[%s235 + $0x38c] sm:$0xf]
        %v516 = vld [vmem:[%s235 + $0x390] sm:$0xf]
        %v517 = vld [vmem:[%s235 + $0x394] sm:$0xf]
        %v518 = vld [vmem:[%s235 + $0x398] sm:$0xf]
        %v519 = vld [vmem:[%s235 + $0x39c] sm:$0xf]
        %v520 = vld [vmem:[%s235 + $0x3a0] sm:$0xf]
        %v521 = vld [vmem:[%s235 + $0x3a4] sm:$0xf]
        %v522 = vld [vmem:[%s235 + $0x3a8] sm:$0xf]
        %v523 = vld [vmem:[%s235 + $0x3ac] sm:$0xf]
        %v524 = vld [vmem:[%s235 + $0x3b0] sm:$0xf]
        %v525 = vld [vmem:[%s235 + $0x3b4] sm:$0xf]
        %v526 = vld [vmem:[%s235 + $0x3b8] sm:$0xf]
        %v527 = vld [vmem:[%s235 + $0x3bc] sm:$0xf]
        %v528 = vld [vmem:[%s235 + $0x3c0] sm:$0xf]
        %v529 = vld [vmem:[%s235 + $0x3c4] sm:$0xf]
        %v530 = vld [vmem:[%s235 + $0x3c8] sm:$0xf]
        %v531 = vld [vmem:[%s235 + $0x3cc] sm:$0xf]
        %v532 = vld [vmem:[%s235 + $0x3d0] sm:$0xf]
        %v533 = vld [vmem:[%s235 + $0x3d4] sm:$0xf]
        %v534 = vld [vmem:[%s235 + $0x3d8] sm:$0xf]
        %v535 = vld [vmem:[%s235 + $0x3dc] sm:$0xf]
        %v536 = vld [vmem:[%s235 + $0x3e0] sm:$0xf]
        %v537 = vld [vmem:[%s235 + $0x3e4] sm:$0xf]
        %v538 = vld [vmem:[%s235 + $0x3e8] sm:$0xf]
        %v539 = vld [vmem:[%s235 + $0x3ec] sm:$0xf]
        %v540 = vld [vmem:[%s235 + $0x3f0] sm:$0xf]
        %v541 = vld [vmem:[%s235 + $0x3f4] sm:$0xf]
        %v542 = vld [vmem:[%s235 + $0x3f8] sm:$0xf]
        %v543 = vld [vmem:[%s235 + $0x3fc] sm:$0xf]
        %v544 = vld [vmem:[%s235 + $0x400] sm:$0xf]
        %v545 = vld [vmem:[%s235 + $0x404] sm:$0xf]
        %v546 = vld [vmem:[%s235 + $0x408] sm:$0xf]
        %v547 = vld [vmem:[%s235 + $0x40c] sm:$0xf]
        %v548 = vld [vmem:[%s235 + $0x410] sm:$0xf]
        %v549 = vld [vmem:[%s235 + $0x414] sm:$0xf]
        %v550 = vld [vmem:[%s235 + $0x418] sm:$0xf]
        %v551 = vld [vmem:[%s235 + $0x41c] sm:$0xf]
        %v552 = vld [vmem:[%s235 + $0x420] sm:$0xf]
        %v553 = vld [vmem:[%s235 + $0x424] sm:$0xf]
        %v554 = vld [vmem:[%s235 + $0x428] sm:$0xf]
        %v555 = vld [vmem:[%s235 + $0x42c] sm:$0xf]
        %v556 = vld [vmem:[%s235 + $0x430] sm:$0xf]
        %v557 = vld [vmem:[%s235 + $0x434] sm:$0xf]
        %v558 = vld [vmem:[%s235 + $0x438] sm:$0xf]
        %v559 = vld [vmem:[%s235 + $0x43c] sm:$0xf]
        %v560 = vld [vmem:[%s235 + $0x440] sm:$0xf]
        %v561 = vld [vmem:[%s235 + $0x444] sm:$0xf]
        %v562 = vld [vmem:[%s235 + $0x448] sm:$0xf]
        %v563 = vld [vmem:[%s235 + $0x44c] sm:$0xf]
        %v564 = vld [vmem:[%s235 + $0x450] sm:$0xf]
        %v565 = vld [vmem:[%s235 + $0x454] sm:$0xf]
        %v566 = vld [vmem:[%s235 + $0x458] sm:$0xf]
        %v567 = vld [vmem:[%s235 + $0x45c] sm:$0xf]
        %v568 = vld [vmem:[%s235 + $0x460] sm:$0xf]
        %v569 = vld [vmem:[%s235 + $0x464] sm:$0xf]
        %v570 = vld [vmem:[%s235 + $0x468] sm:$0xf]
        %v571 = vld [vmem:[%s235 + $0x46c] sm:$0xf]
        %v572 = vld [vmem:[%s235 + $0x470] sm:$0xf]
        %v573 = vld [vmem:[%s235 + $0x474] sm:$0xf]
        %v574 = vld [vmem:[%s235 + $0x478] sm:$0xf]
        %v575 = vld [vmem:[%s235 + $0x47c] sm:$0xf]
        %v576 = vld [vmem:[%s235 + $0x480] sm:$0xf]
        %v577 = vld [vmem:[%s235 + $0x484] sm:$0xf]
        %v578 = vld [vmem:[%s235 + $0x488] sm:$0xf]
        %v579 = vld [vmem:[%s235 + $0x48c] sm:$0xf]
        %v580 = vld [vmem:[%s235 + $0x490] sm:$0xf]
        %v581 = vld [vmem:[%s235 + $0x494] sm:$0xf]
        %v582 = vld [vmem:[%s235 + $0x498] sm:$0xf]
        %v583 = vld [vmem:[%s235 + $0x49c] sm:$0xf]
        %v584 = vld [vmem:[%s235 + $0x4a0] sm:$0xf]
        %v585 = vld [vmem:[%s235 + $0x4a4] sm:$0xf]
        %v586 = vld [vmem:[%s235 + $0x4a8] sm:$0xf]
        %v587 = vld [vmem:[%s235 + $0x4ac] sm:$0xf]
        %v588 = vld [vmem:[%s235 + $0x4b0] sm:$0xf]
        %v589 = vld [vmem:[%s235 + $0x4b4] sm:$0xf]
        %v590 = vld [vmem:[%s235 + $0x4b8] sm:$0xf]
        %v591 = vld [vmem:[%s235 + $0x4bc] sm:$0xf]
        %v592 = vld [vmem:[%s235 + $0x4c0] sm:$0xf]
        %v593 = vld [vmem:[%s235 + $0x4c4] sm:$0xf]
        %v594 = vld [vmem:[%s235 + $0x4c8] sm:$0xf]
        %v595 = vld [vmem:[%s235 + $0x4cc] sm:$0xf]
        %v596 = vld [vmem:[%s235 + $0x4d0] sm:$0xf]
        %v597 = vld [vmem:[%s235 + $0x4d4] sm:$0xf]
        %v598 = vld [vmem:[%s235 + $0x4d8] sm:$0xf]
        %v599 = vld [vmem:[%s235 + $0x4dc] sm:$0xf]
        %v600 = vld [vmem:[%s235 + $0x4e0] sm:$0xf]
        %v601 = vld [vmem:[%s235 + $0x4e4] sm:$0xf]
        %v602 = vld [vmem:[%s235 + $0x4e8] sm:$0xf]
        %v603 = vld [vmem:[%s235 + $0x4ec] sm:$0xf]
        %v604 = vld [vmem:[%s235 + $0x4f0] sm:$0xf]
        %v605 = vld [vmem:[%s235 + $0x4f4] sm:$0xf]
        %v606 = vld [vmem:[%s235 + $0x4f8] sm:$0xf]
        %v607 = vld [vmem:[%s235 + $0x4fc] sm:$0xf]
        %v608 = vld [vmem:[%s235 + $0x500] sm:$0xf]
        %v609 = vld [vmem:[%s235 + $0x504] sm:$0xf]
        %v610 = vld [vmem:[%s235 + $0x508] sm:$0xf]
        %v611 = vld [vmem:[%s235 + $0x50c] sm:$0xf]
        %v612 = vld [vmem:[%s235 + $0x510] sm:$0xf]
        %v613 = vld [vmem:[%s235 + $0x514] sm:$0xf]
        %v614 = vld [vmem:[%s235 + $0x518] sm:$0xf]
        %v615 = vld [vmem:[%s235 + $0x51c] sm:$0xf]
        %v616 = vld [vmem:[%s235 + $0x520] sm:$0xf]
        %v617 = vld [vmem:[%s235 + $0x524] sm:$0xf]
        %v618 = vld [vmem:[%s235 + $0x528] sm:$0xf]
        %v619 = vld [vmem:[%s235 + $0x52c] sm:$0xf]
        %v620 = vld [vmem:[%s235 + $0x530] sm:$0xf]
        %v621 = vld [vmem:[%s235 + $0x534] sm:$0xf]
        %v622 = vld [vmem:[%s235 + $0x538] sm:$0xf]
        %v623 = vld [vmem:[%s235 + $0x53c] sm:$0xf]
        %v624 = vld [vmem:[%s235 + $0x540] sm:$0xf]
        %v625 = vld [vmem:[%s235 + $0x544] sm:$0xf]
        %v626 = vld [vmem:[%s235 + $0x548] sm:$0xf]
        %v627 = vld [vmem:[%s235 + $0x54c] sm:$0xf]
        %v628 = vld [vmem:[%s235 + $0x550] sm:$0xf]
        %v629 = vld [vmem:[%s235 + $0x554] sm:$0xf]
        %v630 = vld [vmem:[%s235 + $0x558] sm:$0xf]
        %v631 = vld [vmem:[%s235 + $0x55c] sm:$0xf]
        %v632 = vld [vmem:[%s235 + $0x560] sm:$0xf]
        %v633 = vld [vmem:[%s235 + $0x564] sm:$0xf]
        %v634 = vld [vmem:[%s235 + $0x568] sm:$0xf]
        %v635 = vld [vmem:[%s235 + $0x56c] sm:$0xf]
        %v636 = vld [vmem:[%s235 + $0x570] sm:$0xf]
        %v637 = vld [vmem:[%s235 + $0x574] sm:$0xf]
        %v638 = vld [vmem:[%s235 + $0x578] sm:$0xf]
        %v639 = vld [vmem:[%s235 + $0x57c] sm:$0xf]
        %v640 = vld [vmem:[%s235 + $0x580] sm:$0xf]
        %v641 = vld [vmem:[%s235 + $0x584] sm:$0xf]
        %v642 = vld [vmem:[%s235 + $0x588] sm:$0xf]
        %v643 = vld [vmem:[%s235 + $0x58c] sm:$0xf]
        %v644 = vld [vmem:[%s235 + $0x590] sm:$0xf]
        %v645 = vld [vmem:[%s235 + $0x594] sm:$0xf]
        %v646 = vld [vmem:[%s235 + $0x598] sm:$0xf]
        %v647 = vld [vmem:[%s235 + $0x59c] sm:$0xf]
        %v648 = vld [vmem:[%s235 + $0x5a0] sm:$0xf]
        %v649 = vld [vmem:[%s235 + $0x5a4] sm:$0xf]
        %v650 = vld [vmem:[%s235 + $0x5a8] sm:$0xf]
        %v651 = vld [vmem:[%s235 + $0x5ac] sm:$0xf]
        %v652 = vld [vmem:[%s235 + $0x5b0] sm:$0xf]
        %v653 = vld [vmem:[%s235 + $0x5b4] sm:$0xf]
        %v654 = vld [vmem:[%s235 + $0x5b8] sm:$0xf]
        %v655 = vld [vmem:[%s235 + $0x5bc] sm:$0xf]
        %v656 = vld [vmem:[%s235 + $0x5c0] sm:$0xf]
        %v657 = vld [vmem:[%s235 + $0x5c4] sm:$0xf]
        %v658 = vld [vmem:[%s235 + $0x5c8] sm:$0xf]
        %v659 = vld [vmem:[%s235 + $0x5cc] sm:$0xf]
        %v660 = vld [vmem:[%s235 + $0x5d0] sm:$0xf]
        %v661 = vld [vmem:[%s235 + $0x5d4] sm:$0xf]
        %v662 = vld [vmem:[%s235 + $0x5d8] sm:$0xf]
        %v663 = vld [vmem:[%s235 + $0x5dc] sm:$0xf]
        %v664 = vld [vmem:[%s235 + $0x5e0] sm:$0xf]
        %v665 = vld [vmem:[%s235 + $0x5e4] sm:$0xf]
        %v666 = vld [vmem:[%s235 + $0x5e8] sm:$0xf]
        %v667 = vld [vmem:[%s235 + $0x5ec] sm:$0xf]
        %v668 = vld [vmem:[%s235 + $0x5f0] sm:$0xf]
        %v669 = vld [vmem:[%s235 + $0x5f4] sm:$0xf]
        %v670 = vld [vmem:[%s235 + $0x5f8] sm:$0xf]
        %v671 = vld [vmem:[%s235 + $0x5fc] sm:$0xf]
        %v672 = vld [vmem:[%s235 + $0x600] sm:$0xf]
        %v673 = vld [vmem:[%s235 + $0x604] sm:$0xf]
        %v674 = vld [vmem:[%s235 + $0x608] sm:$0xf]
        %v675 = vld [vmem:[%s235 + $0x60c] sm:$0xf]
        %v676 = vld [vmem:[%s235 + $0x610] sm:$0xf]
        %v677 = vld [vmem:[%s235 + $0x614] sm:$0xf]
        %v678 = vld [vmem:[%s235 + $0x618] sm:$0xf]
        %v679 = vld [vmem:[%s235 + $0x61c] sm:$0xf]
        %v680 = vld [vmem:[%s235 + $0x620] sm:$0xf]
        %v681 = vld [vmem:[%s235 + $0x624] sm:$0xf]
        %v682 = vld [vmem:[%s235 + $0x628] sm:$0xf]
        %v683 = vld [vmem:[%s235 + $0x62c] sm:$0xf]
        %v684 = vld [vmem:[%s235 + $0x630] sm:$0xf]
        %v685 = vld [vmem:[%s235 + $0x634] sm:$0xf]
        %v686 = vld [vmem:[%s235 + $0x638] sm:$0xf]
        %v687 = vld [vmem:[%s235 + $0x63c] sm:$0xf]
        %v688 = vld [vmem:[%s235 + $0x640] sm:$0xf]
        %v689 = vld [vmem:[%s235 + $0x644] sm:$0xf]
        %v690 = vld [vmem:[%s235 + $0x648] sm:$0xf]
        %v691 = vld [vmem:[%s235 + $0x64c] sm:$0xf]
        %v692 = vld [vmem:[%s235 + $0x650] sm:$0xf]
        %v693 = vld [vmem:[%s235 + $0x654] sm:$0xf]
        %v694 = vld [vmem:[%s235 + $0x658] sm:$0xf]
        %v695 = vld [vmem:[%s235 + $0x65c] sm:$0xf]
        %v696 = vld [vmem:[%s235 + $0x660] sm:$0xf]
        %v697 = vld [vmem:[%s235 + $0x664] sm:$0xf]
        %v698 = vld [vmem:[%s235 + $0x668] sm:$0xf]
        %v699 = vld [vmem:[%s235 + $0x66c] sm:$0xf]
        %v700 = vld [vmem:[%s235 + $0x670] sm:$0xf]
        %v701 = vld [vmem:[%s235 + $0x674] sm:$0xf]
        %v702 = vld [vmem:[%s235 + $0x678] sm:$0xf]
        %v703 = vld [vmem:[%s235 + $0x67c] sm:$0xf]
        %v704 = vld [vmem:[%s235 + $0x680] sm:$0xf]
        %v705 = vld [vmem:[%s235 + $0x684] sm:$0xf]
        %v706 = vld [vmem:[%s235 + $0x688] sm:$0xf]
        %v707 = vld [vmem:[%s235 + $0x68c] sm:$0xf]
        %v708 = vld [vmem:[%s235 + $0x690] sm:$0xf]
        %v709 = vld [vmem:[%s235 + $0x694] sm:$0xf]
        %v710 = vld [vmem:[%s235 + $0x698] sm:$0xf]
        %v711 = vld [vmem:[%s235 + $0x69c] sm:$0xf]
        %v712 = vld [vmem:[%s235 + $0x6a0] sm:$0xf]
        %v713 = vld [vmem:[%s235 + $0x6a4] sm:$0xf]
        %v714 = vld [vmem:[%s235 + $0x6a8] sm:$0xf]
        %v715 = vld [vmem:[%s235 + $0x6ac] sm:$0xf]
        %v716 = vld [vmem:[%s235 + $0x6b0] sm:$0xf]
        %v717 = vld [vmem:[%s235 + $0x6b4] sm:$0xf]
        %v718 = vld [vmem:[%s235 + $0x6b8] sm:$0xf]
        %v719 = vld [vmem:[%s235 + $0x6bc] sm:$0xf]
        %v720 = vld [vmem:[%s235 + $0x6c0] sm:$0xf]
        %v721 = vld [vmem:[%s235 + $0x6c4] sm:$0xf]
        %v722 = vld [vmem:[%s235 + $0x6c8] sm:$0xf]
        %v723 = vld [vmem:[%s235 + $0x6cc] sm:$0xf]
        %v724 = vld [vmem:[%s235 + $0x6d0] sm:$0xf]
        %v725 = vld [vmem:[%s235 + $0x6d4] sm:$0xf]
        %v726 = vld [vmem:[%s235 + $0x6d8] sm:$0xf]
        %v727 = vld [vmem:[%s235 + $0x6dc] sm:$0xf]
        %v728 = vld [vmem:[%s235 + $0x6e0] sm:$0xf]
        %v729 = vld [vmem:[%s235 + $0x6e4] sm:$0xf]
        %v730 = vld [vmem:[%s235 + $0x6e8] sm:$0xf]
        %v731 = vld [vmem:[%s235 + $0x6ec] sm:$0xf]
        %v732 = vld [vmem:[%s235 + $0x6f0] sm:$0xf]
        %v733 = vld [vmem:[%s235 + $0x6f4] sm:$0xf]
        %v734 = vld [vmem:[%s235 + $0x6f8] sm:$0xf]
        %v735 = vld [vmem:[%s235 + $0x6fc] sm:$0xf]
        %v736 = vld [vmem:[%s235 + $0x700] sm:$0xf]
        %v737 = vld [vmem:[%s235 + $0x704] sm:$0xf]
        %v738 = vld [vmem:[%s235 + $0x708] sm:$0xf]
        %v739 = vld [vmem:[%s235 + $0x70c] sm:$0xf]
        %v740 = vld [vmem:[%s235 + $0x710] sm:$0xf]
        %v741 = vld [vmem:[%s235 + $0x714] sm:$0xf]
        %v742 = vld [vmem:[%s235 + $0x718] sm:$0xf]
        %v743 = vld [vmem:[%s235 + $0x71c] sm:$0xf]
        %v744 = vld [vmem:[%s235 + $0x720] sm:$0xf]
        %v745 = vld [vmem:[%s235 + $0x724] sm:$0xf]
        %v746 = vld [vmem:[%s235 + $0x728] sm:$0xf]
        %v747 = vld [vmem:[%s235 + $0x72c] sm:$0xf]
        %v748 = vld [vmem:[%s235 + $0x730] sm:$0xf]
        %v749 = vld [vmem:[%s235 + $0x734] sm:$0xf]
        %v750 = vld [vmem:[%s235 + $0x738] sm:$0xf]
        %v751 = vld [vmem:[%s235 + $0x73c] sm:$0xf]
        %v752 = vld [vmem:[%s235 + $0x740] sm:$0xf]
        %v753 = vld [vmem:[%s235 + $0x744] sm:$0xf]
        %v754 = vld [vmem:[%s235 + $0x748] sm:$0xf]
        %v755 = vld [vmem:[%s235 + $0x74c] sm:$0xf]
        %v756 = vld [vmem:[%s235 + $0x750] sm:$0xf]
        %v757 = vld [vmem:[%s235 + $0x754] sm:$0xf]
        %v758 = vld [vmem:[%s235 + $0x758] sm:$0xf]
        %v759 = vld [vmem:[%s235 + $0x75c] sm:$0xf]
        %v760 = vld [vmem:[%s235 + $0x760] sm:$0xf]
        %v761 = vld [vmem:[%s235 + $0x764] sm:$0xf]
        %v762 = vld [vmem:[%s235 + $0x768] sm:$0xf]
        %v763 = vld [vmem:[%s235 + $0x76c] sm:$0xf]
        %v764 = vld [vmem:[%s235 + $0x770] sm:$0xf]
        %v765 = vld [vmem:[%s235 + $0x774] sm:$0xf]
        %v766 = vld [vmem:[%s235 + $0x778] sm:$0xf]
        %v767 = vld [vmem:[%s235 + $0x77c] sm:$0xf]
        %v768 = vld [vmem:[%s235 + $0x780] sm:$0xf]
        %v769 = vld [vmem:[%s235 + $0x784] sm:$0xf]
        %v770 = vld [vmem:[%s235 + $0x788] sm:$0xf]
        %v771 = vld [vmem:[%s235 + $0x78c] sm:$0xf]
        %v772 = vld [vmem:[%s235 + $0x790] sm:$0xf]
        %v773 = vld [vmem:[%s235 + $0x794] sm:$0xf]
        %v774 = vld [vmem:[%s235 + $0x798] sm:$0xf]
        %v775 = vld [vmem:[%s235 + $0x79c] sm:$0xf]
        %v776 = vld [vmem:[%s235 + $0x7a0] sm:$0xf]
        %v777 = vld [vmem:[%s235 + $0x7a4] sm:$0xf]
        %v778 = vld [vmem:[%s235 + $0x7a8] sm:$0xf]
        %v779 = vld [vmem:[%s235 + $0x7ac] sm:$0xf]
        %v780 = vld [vmem:[%s235 + $0x7b0] sm:$0xf]
        %v781 = vld [vmem:[%s235 + $0x7b4] sm:$0xf]
        %v782 = vld [vmem:[%s235 + $0x7b8] sm:$0xf]
        %v783 = vld [vmem:[%s235 + $0x7bc] sm:$0xf]
        %v784 = vld [vmem:[%s235 + $0x7c0] sm:$0xf]
        %v785 = vld [vmem:[%s235 + $0x7c4] sm:$0xf]
        %v786 = vld [vmem:[%s235 + $0x7c8] sm:$0xf]
        %v787 = vld [vmem:[%s235 + $0x7cc] sm:$0xf]
        %v788 = vld [vmem:[%s235 + $0x7d0] sm:$0xf]
        %v789 = vld [vmem:[%s235 + $0x7d4] sm:$0xf]
        %v790 = vld [vmem:[%s235 + $0x7d8] sm:$0xf]
        %v791 = vld [vmem:[%s235 + $0x7dc] sm:$0xf]
        %v792 = vld [vmem:[%s235 + $0x7e0] sm:$0xf]
        %v793 = vld [vmem:[%s235 + $0x7e4] sm:$0xf]
        %v794 = vld [vmem:[%s235 + $0x7e8] sm:$0xf]
        %v795 = vld [vmem:[%s235 + $0x7ec] sm:$0xf]
        %v796 = vld [vmem:[%s235 + $0x7f0] sm:$0xf]
        %v797 = vld [vmem:[%s235 + $0x7f4] sm:$0xf]
        %v798 = vld [vmem:[%s235 + $0x7f8] sm:$0xf]
        %v799 = vld [vmem:[%s235 + $0x7fc] sm:$0xf]
        %v800 = vld [vmem:[%s235 + $0x800] sm:$0xf]
        %v801 = vld [vmem:[%s235 + $0x804] sm:$0xf]
        %v802 = vld [vmem:[%s235 + $0x808] sm:$0xf]
        %v803 = vld [vmem:[%s235 + $0x80c] sm:$0xf]
        %v804 = vld [vmem:[%s235 + $0x810] sm:$0xf]
        %v805 = vld [vmem:[%s235 + $0x814] sm:$0xf]
        %v806 = vld [vmem:[%s235 + $0x818] sm:$0xf]
        %v807 = vld [vmem:[%s235 + $0x81c] sm:$0xf]
        %v808 = vld [vmem:[%s235 + $0x820] sm:$0xf]
        %v809 = vld [vmem:[%s235 + $0x824] sm:$0xf]
        %v810 = vld [vmem:[%s235 + $0x828] sm:$0xf]
        %v811 = vld [vmem:[%s235 + $0x82c] sm:$0xf]
        %v812 = vld [vmem:[%s235 + $0x830] sm:$0xf]
        %v813 = vld [vmem:[%s235 + $0x834] sm:$0xf]
        %v814 = vld [vmem:[%s235 + $0x838] sm:$0xf]
        %v815 = vld [vmem:[%s235 + $0x83c] sm:$0xf]
        %v816 = vld [vmem:[%s235 + $0x840] sm:$0xf]
        %v817 = vld [vmem:[%s235 + $0x844] sm:$0xf]
        %v818 = vld [vmem:[%s235 + $0x848] sm:$0xf]
        %v819 = vld [vmem:[%s235 + $0x84c] sm:$0xf]
        %v820 = vld [vmem:[%s235 + $0x850] sm:$0xf]
        %v821 = vld [vmem:[%s235 + $0x854] sm:$0xf]
        %v822 = vld [vmem:[%s235 + $0x858] sm:$0xf]
        %v823 = vld [vmem:[%s235 + $0x85c] sm:$0xf]
        %v824 = vld [vmem:[%s235 + $0x860] sm:$0xf]
        %v825 = vld [vmem:[%s235 + $0x864] sm:$0xf]
        %v826 = vld [vmem:[%s235 + $0x868] sm:$0xf]
        %v827 = vld [vmem:[%s235 + $0x86c] sm:$0xf]
        %v828 = vld [vmem:[%s235 + $0x870] sm:$0xf]
        %v829 = vld [vmem:[%s235 + $0x874] sm:$0xf]
        %v830 = vld [vmem:[%s235 + $0x878] sm:$0xf]
        %v831 = vld [vmem:[%s235 + $0x87c] sm:$0xf]
        %v832 = vld [vmem:[%s235 + $0x880] sm:$0xf]
        %v833 = vld [vmem:[%s235 + $0x884] sm:$0xf]
        %v834 = vld [vmem:[%s235 + $0x888] sm:$0xf]
        %v835 = vld [vmem:[%s235 + $0x88c] sm:$0xf]
        %v836 = vld [vmem:[%s235 + $0x890] sm:$0xf]
        %v837 = vld [vmem:[%s235 + $0x894] sm:$0xf]
        %v838 = vld [vmem:[%s235 + $0x898] sm:$0xf]
        %v839 = vld [vmem:[%s235 + $0x89c] sm:$0xf]
        %v840 = vld [vmem:[%s235 + $0x8a0] sm:$0xf]
        %v841 = vld [vmem:[%s235 + $0x8a4] sm:$0xf]
        %v842 = vld [vmem:[%s235 + $0x8a8] sm:$0xf]
        %v843 = vld [vmem:[%s235 + $0x8ac] sm:$0xf]
        %v844 = vld [vmem:[%s235 + $0x8b0] sm:$0xf]
        %v845 = vld [vmem:[%s235 + $0x8b4] sm:$0xf]
        %v846 = vld [vmem:[%s235 + $0x8b8] sm:$0xf]
        %v847 = vld [vmem:[%s235 + $0x8bc] sm:$0xf]
        %v848 = vld [vmem:[%s235 + $0x8c0] sm:$0xf]
        %v849 = vld [vmem:[%s235 + $0x8c4] sm:$0xf]
        %v850 = vld [vmem:[%s235 + $0x8c8] sm:$0xf]
        %v851 = vld [vmem:[%s235 + $0x8cc] sm:$0xf]
        %v852 = vld [vmem:[%s235 + $0x8d0] sm:$0xf]
        %v853 = vld [vmem:[%s235 + $0x8d4] sm:$0xf]
        %v854 = vld [vmem:[%s235 + $0x8d8] sm:$0xf]
        %v855 = vld [vmem:[%s235 + $0x8dc] sm:$0xf]
        %v856 = vld [vmem:[%s235 + $0x8e0] sm:$0xf]
        %v857 = vld [vmem:[%s235 + $0x8e4] sm:$0xf]
        %v858 = vld [vmem:[%s235 + $0x8e8] sm:$0xf]
        %v859 = vld [vmem:[%s235 + $0x8ec] sm:$0xf]
        %v860 = vld [vmem:[%s235 + $0x8f0] sm:$0xf]
        %v861 = vld [vmem:[%s235 + $0x8f4] sm:$0xf]
        %v862 = vld [vmem:[%s235 + $0x8f8] sm:$0xf]
        %v863 = vld [vmem:[%s235 + $0x8fc] sm:$0xf]
        %v864 = vld [vmem:[%s235 + $0x900] sm:$0xf]
        %v865 = vld [vmem:[%s235 + $0x904] sm:$0xf]
        %v866 = vld [vmem:[%s235 + $0x908] sm:$0xf]
        %v867 = vld [vmem:[%s235 + $0x90c] sm:$0xf]
        %v868 = vld [vmem:[%s235 + $0x910] sm:$0xf]
        %v869 = vld [vmem:[%s235 + $0x914] sm:$0xf]
        %v870 = vld [vmem:[%s235 + $0x918] sm:$0xf]
        %v871 = vld [vmem:[%s235 + $0x91c] sm:$0xf]
        %v872 = vld [vmem:[%s235 + $0x920] sm:$0xf]
        %v873 = vld [vmem:[%s235 + $0x924] sm:$0xf]
        %v874 = vld [vmem:[%s235 + $0x928] sm:$0xf]
        %v875 = vld [vmem:[%s235 + $0x92c] sm:$0xf]
        %v876 = vld [vmem:[%s235 + $0x930] sm:$0xf]
        %v877 = vld [vmem:[%s235 + $0x934] sm:$0xf]
        %v878 = vld [vmem:[%s235 + $0x938] sm:$0xf]
        %v879 = vld [vmem:[%s235 + $0x93c] sm:$0xf]
        %v880 = vld [vmem:[%s235 + $0x940] sm:$0xf]
        %v881 = vld [vmem:[%s235 + $0x944] sm:$0xf]
        %v882 = vld [vmem:[%s235 + $0x948] sm:$0xf]
        %v883 = vld [vmem:[%s235 + $0x94c] sm:$0xf]
        %v884 = vld [vmem:[%s235 + $0x950] sm:$0xf]
        %v885 = vld [vmem:[%s235 + $0x954] sm:$0xf]
        %v886 = vld [vmem:[%s235 + $0x958] sm:$0xf]
        %v887 = vld [vmem:[%s235 + $0x95c] sm:$0xf]
        %v888 = vld [vmem:[%s235 + $0x960] sm:$0xf]
        %v889 = vld [vmem:[%s235 + $0x964] sm:$0xf]
        %v890 = vld [vmem:[%s235 + $0x968] sm:$0xf]
        %v891 = vld [vmem:[%s235 + $0x96c] sm:$0xf]
        %v892 = vld [vmem:[%s235 + $0x970] sm:$0xf]
        %v893 = vld [vmem:[%s235 + $0x974] sm:$0xf]
        %v894 = vld [vmem:[%s235 + $0x978] sm:$0xf]
        %v895 = vld [vmem:[%s235 + $0x97c] sm:$0xf]
        %v896 = vld [vmem:[%s235 + $0x980] sm:$0xf]
        %v897 = vld [vmem:[%s235 + $0x984] sm:$0xf]
        %v898 = vld [vmem:[%s235 + $0x988] sm:$0xf]
        %v899 = vld [vmem:[%s235 + $0x98c] sm:$0xf]
        %v900 = vld [vmem:[%s235 + $0x990] sm:$0xf]
        %v901 = vld [vmem:[%s235 + $0x994] sm:$0xf]
        %v902 = vld [vmem:[%s235 + $0x998] sm:$0xf]
        %v903 = vld [vmem:[%s235 + $0x99c] sm:$0xf]
        %v904 = vld [vmem:[%s235 + $0x9a0] sm:$0xf]
        %v905 = vld [vmem:[%s235 + $0x9a4] sm:$0xf]
        %v906 = vld [vmem:[%s235 + $0x9a8] sm:$0xf]
        %v907 = vld [vmem:[%s235 + $0x9ac] sm:$0xf]
        %v908 = vld [vmem:[%s235 + $0x9b0] sm:$0xf]
        %v909 = vld [vmem:[%s235 + $0x9b4] sm:$0xf]
        %v910 = vld [vmem:[%s235 + $0x9b8] sm:$0xf]
        %v911 = vld [vmem:[%s235 + $0x9bc] sm:$0xf]
        %v912 = vld [vmem:[%s235 + $0x9c0] sm:$0xf]
        %v913 = vld [vmem:[%s235 + $0x9c4] sm:$0xf]
        %v914 = vld [vmem:[%s235 + $0x9c8] sm:$0xf]
        %v915 = vld [vmem:[%s235 + $0x9cc] sm:$0xf]
        %v916 = vld [vmem:[%s235 + $0x9d0] sm:$0xf]
        %v917 = vld [vmem:[%s235 + $0x9d4] sm:$0xf]
        %v918 = vld [vmem:[%s235 + $0x9d8] sm:$0xf]
        %v919 = vld [vmem:[%s235 + $0x9dc] sm:$0xf]
        %v920 = vld [vmem:[%s235 + $0x9e0] sm:$0xf]
        %v921 = vld [vmem:[%s235 + $0x9e4] sm:$0xf]
        %v922 = vld [vmem:[%s235 + $0x9e8] sm:$0xf]
        %v923 = vld [vmem:[%s235 + $0x9ec] sm:$0xf]
        %v924 = vld [vmem:[%s235 + $0x9f0] sm:$0xf]
        %v925 = vld [vmem:[%s235 + $0x9f4] sm:$0xf]
        %v926 = vld [vmem:[%s235 + $0x9f8] sm:$0xf]
        %v927 = vld [vmem:[%s235 + $0x9fc] sm:$0xf]
        %v928 = vld [vmem:[%s235 + $0xa00] sm:$0xf]
        %v929 = vld [vmem:[%s235 + $0xa04] sm:$0xf]
        %v930 = vld [vmem:[%s235 + $0xa08] sm:$0xf]
        %v931 = vld [vmem:[%s235 + $0xa0c] sm:$0xf]
        %v932 = vld [vmem:[%s235 + $0xa10] sm:$0xf]
        %v933 = vld [vmem:[%s235 + $0xa14] sm:$0xf]
        %v934 = vld [vmem:[%s235 + $0xa18] sm:$0xf]
        %v935 = vld [vmem:[%s235 + $0xa1c] sm:$0xf]
        %v936 = vld [vmem:[%s235 + $0xa20] sm:$0xf]
        %v937 = vld [vmem:[%s235 + $0xa24] sm:$0xf]
        %v938 = vld [vmem:[%s235 + $0xa28] sm:$0xf]
        %v939 = vld [vmem:[%s235 + $0xa2c] sm:$0xf]
        %v940 = vld [vmem:[%s235 + $0xa30] sm:$0xf]
        %v941 = vld [vmem:[%s235 + $0xa34] sm:$0xf]
        %v942 = vld [vmem:[%s235 + $0xa38] sm:$0xf]
        %v943 = vld [vmem:[%s235 + $0xa3c] sm:$0xf]
        %v944 = vld [vmem:[%s235 + $0xa40] sm:$0xf]
        %v945 = vld [vmem:[%s235 + $0xa44] sm:$0xf]
        %v946 = vld [vmem:[%s235 + $0xa48] sm:$0xf]
        %v947 = vld [vmem:[%s235 + $0xa4c] sm:$0xf]
        %v948 = vld [vmem:[%s235 + $0xa50] sm:$0xf]
        %v949 = vld [vmem:[%s235 + $0xa54] sm:$0xf]
        %v950 = vld [vmem:[%s235 + $0xa58] sm:$0xf]
        %v951 = vld [vmem:[%s235 + $0xa5c] sm:$0xf]
        %v952 = vld [vmem:[%s235 + $0xa60] sm:$0xf]
        %v953 = vld [vmem:[%s235 + $0xa64] sm:$0xf]
        %v954 = vld [vmem:[%s235 + $0xa68] sm:$0xf]
        %v955 = vld [vmem:[%s235 + $0xa6c] sm:$0xf]
        %v956 = vld [vmem:[%s235 + $0xa70] sm:$0xf]
        %v957 = vld [vmem:[%s235 + $0xa74] sm:$0xf]
        %v958 = vld [vmem:[%s235 + $0xa78] sm:$0xf]
        %v959 = vld [vmem:[%s235 + $0xa7c] sm:$0xf]
        %v960 = vld [vmem:[%s235 + $0xa80] sm:$0xf]
        %v961 = vld [vmem:[%s235 + $0xa84] sm:$0xf]
        %v962 = vld [vmem:[%s235 + $0xa88] sm:$0xf]
        %v963 = vld [vmem:[%s235 + $0xa8c] sm:$0xf]
        %v964 = vld [vmem:[%s235 + $0xa90] sm:$0xf]
        %v965 = vld [vmem:[%s235 + $0xa94] sm:$0xf]
        %v966 = vld [vmem:[%s235 + $0xa98] sm:$0xf]
        %v967 = vld [vmem:[%s235 + $0xa9c] sm:$0xf]
        %v968 = vld [vmem:[%s235 + $0xaa0] sm:$0xf]
        %v969 = vld [vmem:[%s235 + $0xaa4] sm:$0xf]
        %v970 = vld [vmem:[%s235 + $0xaa8] sm:$0xf]
        %v971 = vld [vmem:[%s235 + $0xaac] sm:$0xf]
        %v972 = vld [vmem:[%s235 + $0xab0] sm:$0xf]
        %v973 = vld [vmem:[%s235 + $0xab4] sm:$0xf]
        %v974 = vld [vmem:[%s235 + $0xab8] sm:$0xf]
        %v975 = vld [vmem:[%s235 + $0xabc] sm:$0xf]
        %v976 = vld [vmem:[%s235 + $0xac0] sm:$0xf]
        %v977 = vld [vmem:[%s235 + $0xac4] sm:$0xf]
        %v978 = vld [vmem:[%s235 + $0xac8] sm:$0xf]
        %v979 = vld [vmem:[%s235 + $0xacc] sm:$0xf]
        %v980 = vld [vmem:[%s235 + $0xad0] sm:$0xf]
        %v981 = vld [vmem:[%s235 + $0xad4] sm:$0xf]
        %v982 = vld [vmem:[%s235 + $0xad8] sm:$0xf]
        %v983 = vld [vmem:[%s235 + $0xadc] sm:$0xf]
        %v984 = vld [vmem:[%s235 + $0xae0] sm:$0xf]
        %v985 = vld [vmem:[%s235 + $0xae4] sm:$0xf]
        %v986 = vld [vmem:[%s235 + $0xae8] sm:$0xf]
        %v987 = vld [vmem:[%s235 + $0xaec] sm:$0xf]
        %v988 = vld [vmem:[%s235 + $0xaf0] sm:$0xf]
        %v989 = vld [vmem:[%s235 + $0xaf4] sm:$0xf]
        %v990 = vld [vmem:[%s235 + $0xaf8] sm:$0xf]
        %v991 = vld [vmem:[%s235 + $0xafc] sm:$0xf]
        %v992 = vld [vmem:[%s235 + $0xb00] sm:$0xf]
        %v993 = vld [vmem:[%s235 + $0xb04] sm:$0xf]
        %v994 = vld [vmem:[%s235 + $0xb08] sm:$0xf]
        %v995 = vld [vmem:[%s235 + $0xb0c] sm:$0xf]
        %v996 = vld [vmem:[%s235 + $0xb10] sm:$0xf]
        %v997 = vld [vmem:[%s235 + $0xb14] sm:$0xf]
        %v998 = vld [vmem:[%s235 + $0xb18] sm:$0xf]
        %v999 = vld [vmem:[%s235 + $0xb1c] sm:$0xf]
        %v1000 = vld [vmem:[%s235 + $0xb20] sm:$0xf]
        %v1001 = vld [vmem:[%s235 + $0xb24] sm:$0xf]
        %v1002 = vld [vmem:[%s235 + $0xb28] sm:$0xf]
        %v1003 = vld [vmem:[%s235 + $0xb2c] sm:$0xf]
        %v1004 = vld [vmem:[%s235 + $0xb30] sm:$0xf]
        %v1005 = vld [vmem:[%s235 + $0xb34] sm:$0xf]
        %v1006 = vld [vmem:[%s235 + $0xb38] sm:$0xf]
        %v1007 = vld [vmem:[%s235 + $0xb3c] sm:$0xf]
        %v1008 = vld [vmem:[%s235 + $0xb40] sm:$0xf]
        %v1009 = vld [vmem:[%s235 + $0xb44] sm:$0xf]
        %v1010 = vld [vmem:[%s235 + $0xb48] sm:$0xf]
        %v1011 = vld [vmem:[%s235 + $0xb4c] sm:$0xf]
        %v1012 = vld [vmem:[%s235 + $0xb50] sm:$0xf]
        %v1013 = vld [vmem:[%s235 + $0xb54] sm:$0xf]
        %v1014 = vld [vmem:[%s235 + $0xb58] sm:$0xf]
        %v1015 = vld [vmem:[%s235 + $0xb5c] sm:$0xf]
        %v1016 = vld [vmem:[%s235 + $0xb60] sm:$0xf]
        %v1017 = vld [vmem:[%s235 + $0xb64] sm:$0xf]
        %v1018 = vld [vmem:[%s235 + $0xb68] sm:$0xf]
        %v1019 = vld [vmem:[%s235 + $0xb6c] sm:$0xf]
        %v1020 = vld [vmem:[%s235 + $0xb70] sm:$0xf]
        %v1021 = vld [vmem:[%s235 + $0xb74] sm:$0xf]
        %v1022 = vld [vmem:[%s235 + $0xb78] sm:$0xf]
        %v1023 = vld [vmem:[%s235 + $0xb7c] sm:$0xf]
        %v1024 = vld [vmem:[%s235 + $0xb80] sm:$0xf]
        %v1025 = vld [vmem:[%s235 + $0xb84] sm:$0xf]
        %v1026 = vld [vmem:[%s235 + $0xb88] sm:$0xf]
        %v1027 = vld [vmem:[%s235 + $0xb8c] sm:$0xf]
        %v1028 = vld [vmem:[%s235 + $0xb90] sm:$0xf]
        %v1029 = vld [vmem:[%s235 + $0xb94] sm:$0xf]
        %v1030 = vld [vmem:[%s235 + $0xb98] sm:$0xf]
        %v1031 = vld [vmem:[%s235 + $0xb9c] sm:$0xf]
        %v1032 = vld [vmem:[%s235 + $0xba0] sm:$0xf]
        %v1033 = vld [vmem:[%s235 + $0xba4] sm:$0xf]
        %v1034 = vld [vmem:[%s235 + $0xba8] sm:$0xf]
        %v1035 = vld [vmem:[%s235 + $0xbac] sm:$0xf]
        %v1036 = vld [vmem:[%s235 + $0xbb0] sm:$0xf]
        %v1037 = vld [vmem:[%s235 + $0xbb4] sm:$0xf]
        %v1038 = vld [vmem:[%s235 + $0xbb8] sm:$0xf]
        %v1039 = vld [vmem:[%s235 + $0xbbc] sm:$0xf]
        %v1040 = vld [vmem:[%s235 + $0xbc0] sm:$0xf]
        %v1041 = vld [vmem:[%s235 + $0xbc4] sm:$0xf]
        %v1042 = vld [vmem:[%s235 + $0xbc8] sm:$0xf]
        %v1043 = vld [vmem:[%s235 + $0xbcc] sm:$0xf]
        %v1044 = vld [vmem:[%s235 + $0xbd0] sm:$0xf]
        %v1045 = vld [vmem:[%s235 + $0xbd4] sm:$0xf]
        %v1046 = vld [vmem:[%s235 + $0xbd8] sm:$0xf]
        %v1047 = vld [vmem:[%s235 + $0xbdc] sm:$0xf]
        %v1048 = vld [vmem:[%s235 + $0xbe0] sm:$0xf]
        %v1049 = vld [vmem:[%s235 + $0xbe4] sm:$0xf]
        %v1050 = vld [vmem:[%s235 + $0xbe8] sm:$0xf]
        %v1051 = vld [vmem:[%s235 + $0xbec] sm:$0xf]
        %v1052 = vld [vmem:[%s235 + $0xbf0] sm:$0xf]
        %v1053 = vld [vmem:[%s235 + $0xbf4] sm:$0xf]
        %v1054 = vld [vmem:[%s235 + $0xbf8] sm:$0xf]
        %v1055 = vld [vmem:[%s235 + $0xbfc] sm:$0xf]
        %v1056 = vld [vmem:[%s235 + $0xc00] sm:$0xf]
        %v1057 = vld [vmem:[%s235 + $0xc04] sm:$0xf]
        %v1058 = vld [vmem:[%s235 + $0xc08] sm:$0xf]
        %v1059 = vld [vmem:[%s235 + $0xc0c] sm:$0xf]
        %v1060 = vld [vmem:[%s235 + $0xc10] sm:$0xf]
        %v1061 = vld [vmem:[%s235 + $0xc14] sm:$0xf]
        %v1062 = vld [vmem:[%s235 + $0xc18] sm:$0xf]
        %v1063 = vld [vmem:[%s235 + $0xc1c] sm:$0xf]
        %v1064 = vld [vmem:[%s235 + $0xc20] sm:$0xf]
        %v1065 = vld [vmem:[%s235 + $0xc24] sm:$0xf]
        %v1066 = vld [vmem:[%s235 + $0xc28] sm:$0xf]
        %v1067 = vld [vmem:[%s235 + $0xc2c] sm:$0xf]
        %v1068 = vld [vmem:[%s235 + $0xc30] sm:$0xf]
        %v1069 = vld [vmem:[%s235 + $0xc34] sm:$0xf]
        %v1070 = vld [vmem:[%s235 + $0xc38] sm:$0xf]
        %v1071 = vld [vmem:[%s235 + $0xc3c] sm:$0xf]
        %v1072 = vld [vmem:[%s235 + $0xc40] sm:$0xf]
        %v1073 = vld [vmem:[%s235 + $0xc44] sm:$0xf]
        %v1074 = vld [vmem:[%s235 + $0xc48] sm:$0xf]
        %v1075 = vld [vmem:[%s235 + $0xc4c] sm:$0xf]
        %v1076 = vld [vmem:[%s235 + $0xc50] sm:$0xf]
        %v1077 = vld [vmem:[%s235 + $0xc54] sm:$0xf]
        %v1078 = vld [vmem:[%s235 + $0xc58] sm:$0xf]
        %v1079 = vld [vmem:[%s235 + $0xc5c] sm:$0xf]
        %v1080 = vld [vmem:[%s235 + $0xc60] sm:$0xf]
        %v1081 = vld [vmem:[%s235 + $0xc64] sm:$0xf]
        %v1082 = vld [vmem:[%s235 + $0xc68] sm:$0xf]
        %v1083 = vld [vmem:[%s235 + $0xc6c] sm:$0xf]
        %v1084 = vld [vmem:[%s235 + $0xc70] sm:$0xf]
        %v1085 = vld [vmem:[%s235 + $0xc74] sm:$0xf]
        %v1086 = vld [vmem:[%s235 + $0xc78] sm:$0xf]
        %v1087 = vld [vmem:[%s235 + $0xc7c] sm:$0xf]
        %v1088 = vld [vmem:[%s235 + $0xc80] sm:$0xf]
        %v1089 = vld [vmem:[%s235 + $0xc84] sm:$0xf]
        %v1090 = vld [vmem:[%s235 + $0xc88] sm:$0xf]
        %v1091 = vld [vmem:[%s235 + $0xc8c] sm:$0xf]
        %v1092 = vld [vmem:[%s235 + $0xc90] sm:$0xf]
        %v1093 = vld [vmem:[%s235 + $0xc94] sm:$0xf]
        %v1094 = vld [vmem:[%s235 + $0xc98] sm:$0xf]
        %v1095 = vld [vmem:[%s235 + $0xc9c] sm:$0xf]
        %v1096 = vld [vmem:[%s235 + $0xca0] sm:$0xf]
        %v1097 = vld [vmem:[%s235 + $0xca4] sm:$0xf]
        %v1098 = vld [vmem:[%s235 + $0xca8] sm:$0xf]
        %v1099 = vld [vmem:[%s235 + $0xcac] sm:$0xf]
        %v1100 = vld [vmem:[%s235 + $0xcb0] sm:$0xf]
        %v1101 = vld [vmem:[%s235 + $0xcb4] sm:$0xf]
        %v1102 = vld [vmem:[%s235 + $0xcb8] sm:$0xf]
        %v1103 = vld [vmem:[%s235 + $0xcbc] sm:$0xf]
        %v1104 = vld [vmem:[%s235 + $0xcc0] sm:$0xf]
        %v1105 = vld [vmem:[%s235 + $0xcc4] sm:$0xf]
        %v1106 = vld [vmem:[%s235 + $0xcc8] sm:$0xf]
        %v1107 = vld [vmem:[%s235 + $0xccc] sm:$0xf]
        %v1108 = vld [vmem:[%s235 + $0xcd0] sm:$0xf]
        %v1109 = vld [vmem:[%s235 + $0xcd4] sm:$0xf]
        %v1110 = vld [vmem:[%s235 + $0xcd8] sm:$0xf]
        %v1111 = vld [vmem:[%s235 + $0xcdc] sm:$0xf]
        %v1112 = vld [vmem:[%s235 + $0xce0] sm:$0xf]
        %v1113 = vld [vmem:[%s235 + $0xce4] sm:$0xf]
        %v1114 = vld [vmem:[%s235 + $0xce8] sm:$0xf]
        %v1115 = vld [vmem:[%s235 + $0xcec] sm:$0xf]
        %v1116 = vld [vmem:[%s235 + $0xcf0] sm:$0xf]
        %v1117 = vld [vmem:[%s235 + $0xcf4] sm:$0xf]
        %v1118 = vld [vmem:[%s235 + $0xcf8] sm:$0xf]
        %v1119 = vld [vmem:[%s235 + $0xcfc] sm:$0xf]
        %v1120 = vld [vmem:[%s235 + $0xd00] sm:$0xf]
        %v1121 = vld [vmem:[%s235 + $0xd04] sm:$0xf]
        %v1122 = vld [vmem:[%s235 + $0xd08] sm:$0xf]
        %v1123 = vld [vmem:[%s235 + $0xd0c] sm:$0xf]
        %v1124 = vld [vmem:[%s235 + $0xd10] sm:$0xf]
        %v1125 = vld [vmem:[%s235 + $0xd14] sm:$0xf]
        %v1126 = vld [vmem:[%s235 + $0xd18] sm:$0xf]
        %v1127 = vld [vmem:[%s235 + $0xd1c] sm:$0xf]
        %v1128 = vld [vmem:[%s235 + $0xd20] sm:$0xf]
        %v1129 = vld [vmem:[%s235 + $0xd24] sm:$0xf]
        %v1130 = vld [vmem:[%s235 + $0xd28] sm:$0xf]
        %v1131 = vld [vmem:[%s235 + $0xd2c] sm:$0xf]
        %v1132 = vld [vmem:[%s235 + $0xd30] sm:$0xf]
        %v1133 = vld [vmem:[%s235 + $0xd34] sm:$0xf]
        %v1134 = vld [vmem:[%s235 + $0xd38] sm:$0xf]
        %v1135 = vld [vmem:[%s235 + $0xd3c] sm:$0xf]
        %v1136 = vld [vmem:[%s235 + $0xd40] sm:$0xf]
        %v1137 = vld [vmem:[%s235 + $0xd44] sm:$0xf]
        %v1138 = vld [vmem:[%s235 + $0xd48] sm:$0xf]
        %v1139 = vld [vmem:[%s235 + $0xd4c] sm:$0xf]
        %v1140 = vld [vmem:[%s235 + $0xd50] sm:$0xf]
        %v1141 = vld [vmem:[%s235 + $0xd54] sm:$0xf]
        %v1142 = vld [vmem:[%s235 + $0xd58] sm:$0xf]
        %v1143 = vld [vmem:[%s235 + $0xd5c] sm:$0xf]
        %v1144 = vld [vmem:[%s235 + $0xd60] sm:$0xf]
        %v1145 = vld [vmem:[%s235 + $0xd64] sm:$0xf]
        %v1146 = vld [vmem:[%s235 + $0xd68] sm:$0xf]
        %v1147 = vld [vmem:[%s235 + $0xd6c] sm:$0xf]
        %v1148 = vld [vmem:[%s235 + $0xd70] sm:$0xf]
        %v1149 = vld [vmem:[%s235 + $0xd74] sm:$0xf]
        %v1150 = vld [vmem:[%s235 + $0xd78] sm:$0xf]
        %v1151 = vld [vmem:[%s235 + $0xd7c] sm:$0xf]
        %v1152 = vld [vmem:[%s235 + $0xd80] sm:$0xf]
        %v1153 = vld [vmem:[%s235 + $0xd84] sm:$0xf]
        %v1154 = vld [vmem:[%s235 + $0xd88] sm:$0xf]
        %v1155 = vld [vmem:[%s235 + $0xd8c] sm:$0xf]
        %v1156 = vld [vmem:[%s235 + $0xd90] sm:$0xf]
        %v1157 = vld [vmem:[%s235 + $0xd94] sm:$0xf]
        %v1158 = vld [vmem:[%s235 + $0xd98] sm:$0xf]
        %v1159 = vld [vmem:[%s235 + $0xd9c] sm:$0xf]
        %v1160 = vld [vmem:[%s235 + $0xda0] sm:$0xf]
        %v1161 = vld [vmem:[%s235 + $0xda4] sm:$0xf]
        %v1162 = vld [vmem:[%s235 + $0xda8] sm:$0xf]
        %v1163 = vld [vmem:[%s235 + $0xdac] sm:$0xf]
        %v1164 = vld [vmem:[%s235 + $0xdb0] sm:$0xf]
        %v1165 = vld [vmem:[%s235 + $0xdb4] sm:$0xf]
        %v1166 = vld [vmem:[%s235 + $0xdb8] sm:$0xf]
        %v1167 = vld [vmem:[%s235 + $0xdbc] sm:$0xf]
        %v1168 = vld [vmem:[%s235 + $0xdc0] sm:$0xf]
        %v1169 = vld [vmem:[%s235 + $0xdc4] sm:$0xf]
        %v1170 = vld [vmem:[%s235 + $0xdc8] sm:$0xf]
        %v1171 = vld [vmem:[%s235 + $0xdcc] sm:$0xf]
        %v1172 = vld [vmem:[%s235 + $0xdd0] sm:$0xf]
        %v1173 = vld [vmem:[%s235 + $0xdd4] sm:$0xf]
        %v1174 = vld [vmem:[%s235 + $0xdd8] sm:$0xf]
        %v1175 = vld [vmem:[%s235 + $0xddc] sm:$0xf]
        %v1176 = vld [vmem:[%s235 + $0xde0] sm:$0xf]
        %v1177 = vld [vmem:[%s235 + $0xde4] sm:$0xf]
        %v1178 = vld [vmem:[%s235 + $0xde8] sm:$0xf]
        %v1179 = vld [vmem:[%s235 + $0xdec] sm:$0xf]
        %v1180 = vld [vmem:[%s235 + $0xdf0] sm:$0xf]
        %v1181 = vld [vmem:[%s235 + $0xdf4] sm:$0xf]
        %v1182 = vld [vmem:[%s235 + $0xdf8] sm:$0xf]
        %v1183 = vld [vmem:[%s235 + $0xdfc] sm:$0xf]
        %v1184 = vld [vmem:[%s235 + $0xe00] sm:$0xf]
        %v1185 = vld [vmem:[%s235 + $0xe04] sm:$0xf]
        %v1186 = vld [vmem:[%s235 + $0xe08] sm:$0xf]
        %v1187 = vld [vmem:[%s235 + $0xe0c] sm:$0xf]
        %v1188 = vld [vmem:[%s235 + $0xe10] sm:$0xf]
        %v1189 = vld [vmem:[%s235 + $0xe14] sm:$0xf]
        %v1190 = vld [vmem:[%s235 + $0xe18] sm:$0xf]
        %v1191 = vld [vmem:[%s235 + $0xe1c] sm:$0xf]
        %v1192 = vld [vmem:[%s235 + $0xe20] sm:$0xf]
        %v1193 = vld [vmem:[%s235 + $0xe24] sm:$0xf]
        %v1194 = vld [vmem:[%s235 + $0xe28] sm:$0xf]
        %v1195 = vld [vmem:[%s235 + $0xe2c] sm:$0xf]
        %v1196 = vld [vmem:[%s235 + $0xe30] sm:$0xf]
        %v1197 = vld [vmem:[%s235 + $0xe34] sm:$0xf]
        %v1198 = vld [vmem:[%s235 + $0xe38] sm:$0xf]
        %v1199 = vld [vmem:[%s235 + $0xe3c] sm:$0xf]
        %v1200 = vld [vmem:[%s235 + $0xe40] sm:$0xf]
        %v1201 = vld [vmem:[%s235 + $0xe44] sm:$0xf]
        %v1202 = vld [vmem:[%s235 + $0xe48] sm:$0xf]
        %v1203 = vld [vmem:[%s235 + $0xe4c] sm:$0xf]
        %v1204 = vld [vmem:[%s235 + $0xe50] sm:$0xf]
        %v1205 = vld [vmem:[%s235 + $0xe54] sm:$0xf]
        %v1206 = vld [vmem:[%s235 + $0xe58] sm:$0xf]
        %v1207 = vld [vmem:[%s235 + $0xe5c] sm:$0xf]
        %v1208 = vld [vmem:[%s235 + $0xe60] sm:$0xf]
        %v1209 = vld [vmem:[%s235 + $0xe64] sm:$0xf]
        %v1210 = vld [vmem:[%s235 + $0xe68] sm:$0xf]
        %v1211 = vld [vmem:[%s235 + $0xe6c] sm:$0xf]
        %v1212 = vld [vmem:[%s235 + $0xe70] sm:$0xf]
        %v1213 = vld [vmem:[%s235 + $0xe74] sm:$0xf]
        %v1214 = vld [vmem:[%s235 + $0xe78] sm:$0xf]
        %v1215 = vld [vmem:[%s235 + $0xe7c] sm:$0xf]
        %v1216 = vld [vmem:[%s235 + $0xe80] sm:$0xf]
        %v1217 = vld [vmem:[%s235 + $0xe84] sm:$0xf]
        %v1218 = vld [vmem:[%s235 + $0xe88] sm:$0xf]
        %v1219 = vld [vmem:[%s235 + $0xe8c] sm:$0xf]
        %v1220 = vld [vmem:[%s235 + $0xe90] sm:$0xf]
        %v1221 = vld [vmem:[%s235 + $0xe94] sm:$0xf]
        %v1222 = vld [vmem:[%s235 + $0xe98] sm:$0xf]
        %v1223 = vld [vmem:[%s235 + $0xe9c] sm:$0xf]
        %v1224 = vld [vmem:[%s235 + $0xea0] sm:$0xf]
        %v1225 = vld [vmem:[%s235 + $0xea4] sm:$0xf]
        %v1226 = vld [vmem:[%s235 + $0xea8] sm:$0xf]
        %v1227 = vld [vmem:[%s235 + $0xeac] sm:$0xf]
        %v1228 = vld [vmem:[%s235 + $0xeb0] sm:$0xf]
        %v1229 = vld [vmem:[%s235 + $0xeb4] sm:$0xf]
        %v1230 = vld [vmem:[%s235 + $0xeb8] sm:$0xf]
        %v1231 = vld [vmem:[%s235 + $0xebc] sm:$0xf]
        %v1232 = vld [vmem:[%s235 + $0xec0] sm:$0xf]
        %v1233 = vld [vmem:[%s235 + $0xec4] sm:$0xf]
        %v1234 = vld [vmem:[%s235 + $0xec8] sm:$0xf]
        %v1235 = vld [vmem:[%s235 + $0xecc] sm:$0xf]
        %v1236 = vld [vmem:[%s235 + $0xed0] sm:$0xf]
        %v1237 = vld [vmem:[%s235 + $0xed4] sm:$0xf]
        %v1238 = vld [vmem:[%s235 + $0xed8] sm:$0xf]
        %v1239 = vld [vmem:[%s235 + $0xedc] sm:$0xf]
        %v1240 = vld [vmem:[%s235 + $0xee0] sm:$0xf]
        %v1241 = vld [vmem:[%s235 + $0xee4] sm:$0xf]
        %v1242 = vld [vmem:[%s235 + $0xee8] sm:$0xf]
        %v1243 = vld [vmem:[%s235 + $0xeec] sm:$0xf]
        %v1244 = vld [vmem:[%s235 + $0xef0] sm:$0xf]
        %v1245 = vld [vmem:[%s235 + $0xef4] sm:$0xf]
        %v1246 = vld [vmem:[%s235 + $0xef8] sm:$0xf]
        %v1247 = vld [vmem:[%s235 + $0xefc] sm:$0xf]
        %v1248 = vld [vmem:[%s235 + $0xf00] sm:$0xf]
        %v1249 = vld [vmem:[%s235 + $0xf04] sm:$0xf]
        %v1250 = vld [vmem:[%s235 + $0xf08] sm:$0xf]
        %v1251 = vld [vmem:[%s235 + $0xf0c] sm:$0xf]
        %v1252 = vld [vmem:[%s235 + $0xf10] sm:$0xf]
        %v1253 = vld [vmem:[%s235 + $0xf14] sm:$0xf]
        %v1254 = vld [vmem:[%s235 + $0xf18] sm:$0xf]
        %v1255 = vld [vmem:[%s235 + $0xf1c] sm:$0xf]
        %v1256 = vld [vmem:[%s235 + $0xf20] sm:$0xf]
        %v1257 = vld [vmem:[%s235 + $0xf24] sm:$0xf]
        %v1258 = vld [vmem:[%s235 + $0xf28] sm:$0xf]
        %v1259 = vld [vmem:[%s235 + $0xf2c] sm:$0xf]
        %v1260 = vld [vmem:[%s235 + $0xf30] sm:$0xf]
        %v1261 = vld [vmem:[%s235 + $0xf34] sm:$0xf]
        %v1262 = vld [vmem:[%s235 + $0xf38] sm:$0xf]
        %v1263 = vld [vmem:[%s235 + $0xf3c] sm:$0xf]
        %v1264 = vld [vmem:[%s235 + $0xf40] sm:$0xf]
        %v1265 = vld [vmem:[%s235 + $0xf44] sm:$0xf]
        %v1266 = vld [vmem:[%s235 + $0xf48] sm:$0xf]
        %v1267 = vld [vmem:[%s235 + $0xf4c] sm:$0xf]
        %v1276 = vcombine.high %v280, %v280
        %v1278 = vunpack.c.l.s4 1966171168
        %v1279 = vunpack.c.0.s8 %v1278
        %v1280 = vlaneseq
        %v1281 = vshrl.u32 %v1280, 7
        %v1282 = vsub.s32 %v1279, %v1281
        %v1283 = vrot.slane %v280, %v1282
        %v1285 = vunpack.c.l.s4 1966171168
        %v1286 = vunpack.c.0.s8 %v1285
        %v1287 = vlaneseq
        %v1288 = vshrl.u32 %v1287, 7
        %v1289 = vsub.s32 %v1286, %v1288
        %v1290 = vrot.slane %v1276, %v1289
        %v1291 = vcombine.high %v1283, %v1283
        %v1292 = vcombine.high %v1290, %v1290
        %v1294 = vunpack.c.l.s4 1966171168
        %v1295 = vunpack.c.0.s8 %v1294
        %v1296 = vlaneseq
        %v1297 = vshrl.u32 %v1296, 7
        %v1298 = vsub.s32 %v1295, %v1297
        %v1299 = vrot.slane %v1283, %v1298
        %v1301 = vunpack.c.l.s4 1966171168
        %v1302 = vunpack.c.0.s8 %v1301
        %v1303 = vlaneseq
        %v1304 = vshrl.u32 %v1303, 7
        %v1305 = vsub.s32 %v1302, %v1304
        %v1306 = vrot.slane %v1290, %v1305
        %v1308 = vunpack.c.l.s4 1966171168
        %v1309 = vunpack.c.0.s8 %v1308
        %v1310 = vlaneseq
        %v1311 = vshrl.u32 %v1310, 7
        %v1312 = vsub.s32 %v1309, %v1311
        %v1313 = vrot.slane %v1291, %v1312
        %v1315 = vunpack.c.l.s4 1966171168
        %v1316 = vunpack.c.0.s8 %v1315
        %v1317 = vlaneseq
        %v1318 = vshrl.u32 %v1317, 7
        %v1319 = vsub.s32 %v1316, %v1318
        %v1320 = vrot.slane %v1292, %v1319
        %v1321 = vcombine.high %v1299, %v1299
        %v1322 = vcombine.high %v1306, %v1306
        %v1323 = vcombine.high %v1313, %v1313
        %v1324 = vcombine.high %v1320, %v1320
        %v1325 = vcombine.high %v281, %v281
        %v1327 = vunpack.c.l.s4 1966171168
        %v1328 = vunpack.c.0.s8 %v1327
        %v1329 = vlaneseq
        %v1330 = vshrl.u32 %v1329, 7
        %v1331 = vsub.s32 %v1328, %v1330
        %v1332 = vrot.slane %v281, %v1331
        %v1334 = vunpack.c.l.s4 1966171168
        %v1335 = vunpack.c.0.s8 %v1334
        %v1336 = vlaneseq
        %v1337 = vshrl.u32 %v1336, 7
        %v1338 = vsub.s32 %v1335, %v1337
        %v1339 = vrot.slane %v1325, %v1338
        %v1340 = vcombine.high %v1332, %v1332
        %v1341 = vcombine.high %v1339, %v1339
        %v1343 = vunpack.c.l.s4 1966171168
        %v1344 = vunpack.c.0.s8 %v1343
        %v1345 = vlaneseq
        %v1346 = vshrl.u32 %v1345, 7
        %v1347 = vsub.s32 %v1344, %v1346
        %v1348 = vrot.slane %v1332, %v1347
        %v1350 = vunpack.c.l.s4 1966171168
        %v1351 = vunpack.c.0.s8 %v1350
        %v1352 = vlaneseq
        %v1353 = vshrl.u32 %v1352, 7
        %v1354 = vsub.s32 %v1351, %v1353
        %v1355 = vrot.slane %v1339, %v1354
        %v1357 = vunpack.c.l.s4 1966171168
        %v1358 = vunpack.c.0.s8 %v1357
        %v1359 = vlaneseq
        %v1360 = vshrl.u32 %v1359, 7
        %v1361 = vsub.s32 %v1358, %v1360
        %v1362 = vrot.slane %v1340, %v1361
        %v1364 = vunpack.c.l.s4 1966171168
        %v1365 = vunpack.c.0.s8 %v1364
        %v1366 = vlaneseq
        %v1367 = vshrl.u32 %v1366, 7
        %v1368 = vsub.s32 %v1365, %v1367
        %v1369 = vrot.slane %v1341, %v1368
        %v1370 = vcombine.high %v1348, %v1348
        %v1371 = vcombine.high %v1355, %v1355
        %v1372 = vcombine.high %v1362, %v1362
        %v1373 = vcombine.high %v1369, %v1369
        %v1374 = vcombine.high %v282, %v282
        %v1376 = vunpack.c.l.s4 1966171168
        %v1377 = vunpack.c.0.s8 %v1376
        %v1378 = vlaneseq
        %v1379 = vshrl.u32 %v1378, 7
        %v1380 = vsub.s32 %v1377, %v1379
        %v1381 = vrot.slane %v282, %v1380
        %v1383 = vunpack.c.l.s4 1966171168
        %v1384 = vunpack.c.0.s8 %v1383
        %v1385 = vlaneseq
        %v1386 = vshrl.u32 %v1385, 7
        %v1387 = vsub.s32 %v1384, %v1386
        %v1388 = vrot.slane %v1374, %v1387
        %v1389 = vcombine.high %v1381, %v1381
        %v1390 = vcombine.high %v1388, %v1388
        %v1392 = vunpack.c.l.s4 1966171168
        %v1393 = vunpack.c.0.s8 %v1392
        %v1394 = vlaneseq
        %v1395 = vshrl.u32 %v1394, 7
        %v1396 = vsub.s32 %v1393, %v1395
        %v1397 = vrot.slane %v1381, %v1396
        %v1399 = vunpack.c.l.s4 1966171168
        %v1400 = vunpack.c.0.s8 %v1399
        %v1401 = vlaneseq
        %v1402 = vshrl.u32 %v1401, 7
        %v1403 = vsub.s32 %v1400, %v1402
        %v1404 = vrot.slane %v1388, %v1403
        %v1406 = vunpack.c.l.s4 1966171168
        %v1407 = vunpack.c.0.s8 %v1406
        %v1408 = vlaneseq
        %v1409 = vshrl.u32 %v1408, 7
        %v1410 = vsub.s32 %v1407, %v1409
        %v1411 = vrot.slane %v1389, %v1410
        %v1413 = vunpack.c.l.s4 1966171168
        %v1414 = vunpack.c.0.s8 %v1413
        %v1415 = vlaneseq
        %v1416 = vshrl.u32 %v1415, 7
        %v1417 = vsub.s32 %v1414, %v1416
        %v1418 = vrot.slane %v1390, %v1417
        %v1419 = vcombine.high %v1397, %v1397
        %v1420 = vcombine.high %v1404, %v1404
        %v1421 = vcombine.high %v1411, %v1411
        %v1422 = vcombine.high %v1418, %v1418
        %v1423 = vcombine.high %v283, %v283
        %v1425 = vunpack.c.l.s4 1966171168
        %v1426 = vunpack.c.0.s8 %v1425
        %v1427 = vlaneseq
        %v1428 = vshrl.u32 %v1427, 7
        %v1429 = vsub.s32 %v1426, %v1428
        %v1430 = vrot.slane %v283, %v1429
        %v1432 = vunpack.c.l.s4 1966171168
        %v1433 = vunpack.c.0.s8 %v1432
        %v1434 = vlaneseq
        %v1435 = vshrl.u32 %v1434, 7
        %v1436 = vsub.s32 %v1433, %v1435
        %v1437 = vrot.slane %v1423, %v1436
        %v1438 = vcombine.high %v1430, %v1430
        %v1439 = vcombine.high %v1437, %v1437
        %v1441 = vunpack.c.l.s4 1966171168
        %v1442 = vunpack.c.0.s8 %v1441
        %v1443 = vlaneseq
        %v1444 = vshrl.u32 %v1443, 7
        %v1445 = vsub.s32 %v1442, %v1444
        %v1446 = vrot.slane %v1430, %v1445
        %v1448 = vunpack.c.l.s4 1966171168
        %v1449 = vunpack.c.0.s8 %v1448
        %v1450 = vlaneseq
        %v1451 = vshrl.u32 %v1450, 7
        %v1452 = vsub.s32 %v1449, %v1451
        %v1453 = vrot.slane %v1437, %v1452
        %v1455 = vunpack.c.l.s4 1966171168
        %v1456 = vunpack.c.0.s8 %v1455
        %v1457 = vlaneseq
        %v1458 = vshrl.u32 %v1457, 7
        %v1459 = vsub.s32 %v1456, %v1458
        %v1460 = vrot.slane %v1438, %v1459
        %v1462 = vunpack.c.l.s4 1966171168
        %v1463 = vunpack.c.0.s8 %v1462
        %v1464 = vlaneseq
        %v1465 = vshrl.u32 %v1464, 7
        %v1466 = vsub.s32 %v1463, %v1465
        %v1467 = vrot.slane %v1439, %v1466
        %v1468 = vcombine.high %v1446, %v1446
        %v1469 = vcombine.high %v1453, %v1453
        %v1470 = vcombine.high %v1460, %v1460
        %v1471 = vcombine.high %v1467, %v1467
        %v1472 = vcombine.high %v284, %v284
        %v1474 = vunpack.c.l.s4 1966171168
        %v1475 = vunpack.c.0.s8 %v1474
        %v1476 = vlaneseq
        %v1477 = vshrl.u32 %v1476, 7
        %v1478 = vsub.s32 %v1475, %v1477
        %v1479 = vrot.slane %v284, %v1478
        %v1481 = vunpack.c.l.s4 1966171168
        %v1482 = vunpack.c.0.s8 %v1481
        %v1483 = vlaneseq
        %v1484 = vshrl.u32 %v1483, 7
        %v1485 = vsub.s32 %v1482, %v1484
        %v1486 = vrot.slane %v1472, %v1485
        %v1487 = vcombine.high %v1479, %v1479
        %v1488 = vcombine.high %v1486, %v1486
        %v1490 = vunpack.c.l.s4 1966171168
        %v1491 = vunpack.c.0.s8 %v1490
        %v1492 = vlaneseq
        %v1493 = vshrl.u32 %v1492, 7
        %v1494 = vsub.s32 %v1491, %v1493
        %v1495 = vrot.slane %v1479, %v1494
        %v1497 = vunpack.c.l.s4 1966171168
        %v1498 = vunpack.c.0.s8 %v1497
        %v1499 = vlaneseq
        %v1500 = vshrl.u32 %v1499, 7
        %v1501 = vsub.s32 %v1498, %v1500
        %v1502 = vrot.slane %v1486, %v1501
        %v1504 = vunpack.c.l.s4 1966171168
        %v1505 = vunpack.c.0.s8 %v1504
        %v1506 = vlaneseq
        %v1507 = vshrl.u32 %v1506, 7
        %v1508 = vsub.s32 %v1505, %v1507
        %v1509 = vrot.slane %v1487, %v1508
        %v1511 = vunpack.c.l.s4 1966171168
        %v1512 = vunpack.c.0.s8 %v1511
        %v1513 = vlaneseq
        %v1514 = vshrl.u32 %v1513, 7
        %v1515 = vsub.s32 %v1512, %v1514
        %v1516 = vrot.slane %v1488, %v1515
        %v1517 = vcombine.high %v1495, %v1495
        %v1518 = vcombine.high %v1502, %v1502
        %v1519 = vcombine.high %v1509, %v1509
        %v1520 = vcombine.high %v1516, %v1516
        %v1521 = vcombine.high %v285, %v285
        %v1523 = vunpack.c.l.s4 1966171168
        %v1524 = vunpack.c.0.s8 %v1523
        %v1525 = vlaneseq
        %v1526 = vshrl.u32 %v1525, 7
        %v1527 = vsub.s32 %v1524, %v1526
        %v1528 = vrot.slane %v285, %v1527
        %v1530 = vunpack.c.l.s4 1966171168
        %v1531 = vunpack.c.0.s8 %v1530
        %v1532 = vlaneseq
        %v1533 = vshrl.u32 %v1532, 7
        %v1534 = vsub.s32 %v1531, %v1533
        %v1535 = vrot.slane %v1521, %v1534
        %v1536 = vcombine.high %v1528, %v1528
        %v1537 = vcombine.high %v1535, %v1535
        %v1539 = vunpack.c.l.s4 1966171168
        %v1540 = vunpack.c.0.s8 %v1539
        %v1541 = vlaneseq
        %v1542 = vshrl.u32 %v1541, 7
        %v1543 = vsub.s32 %v1540, %v1542
        %v1544 = vrot.slane %v1528, %v1543
        %v1546 = vunpack.c.l.s4 1966171168
        %v1547 = vunpack.c.0.s8 %v1546
        %v1548 = vlaneseq
        %v1549 = vshrl.u32 %v1548, 7
        %v1550 = vsub.s32 %v1547, %v1549
        %v1551 = vrot.slane %v1535, %v1550
        %v1553 = vunpack.c.l.s4 1966171168
        %v1554 = vunpack.c.0.s8 %v1553
        %v1555 = vlaneseq
        %v1556 = vshrl.u32 %v1555, 7
        %v1557 = vsub.s32 %v1554, %v1556
        %v1558 = vrot.slane %v1536, %v1557
        %v1560 = vunpack.c.l.s4 1966171168
        %v1561 = vunpack.c.0.s8 %v1560
        %v1562 = vlaneseq
        %v1563 = vshrl.u32 %v1562, 7
        %v1564 = vsub.s32 %v1561, %v1563
        %v1565 = vrot.slane %v1537, %v1564
        %v1566 = vcombine.high %v1544, %v1544
        %v1567 = vcombine.high %v1551, %v1551
        %v1568 = vcombine.high %v1558, %v1558
        %v1569 = vcombine.high %v1565, %v1565
        %v1570 = vcombine.high %v286, %v286
        %v1572 = vunpack.c.l.s4 1966171168
        %v1573 = vunpack.c.0.s8 %v1572
        %v1574 = vlaneseq
        %v1575 = vshrl.u32 %v1574, 7
        %v1576 = vsub.s32 %v1573, %v1575
        %v1577 = vrot.slane %v286, %v1576
        %v1579 = vunpack.c.l.s4 1966171168
        %v1580 = vunpack.c.0.s8 %v1579
        %v1581 = vlaneseq
        %v1582 = vshrl.u32 %v1581, 7
        %v1583 = vsub.s32 %v1580, %v1582
        %v1584 = vrot.slane %v1570, %v1583
        %v1585 = vcombine.high %v1577, %v1577
        %v1586 = vcombine.high %v1584, %v1584
        %v1588 = vunpack.c.l.s4 1966171168
        %v1589 = vunpack.c.0.s8 %v1588
        %v1590 = vlaneseq
        %v1591 = vshrl.u32 %v1590, 7
        %v1592 = vsub.s32 %v1589, %v1591
        %v1593 = vrot.slane %v1577, %v1592
        %v1595 = vunpack.c.l.s4 1966171168
        %v1596 = vunpack.c.0.s8 %v1595
        %v1597 = vlaneseq
        %v1598 = vshrl.u32 %v1597, 7
        %v1599 = vsub.s32 %v1596, %v1598
        %v1600 = vrot.slane %v1584, %v1599
        %v1602 = vunpack.c.l.s4 1966171168
        %v1603 = vunpack.c.0.s8 %v1602
        %v1604 = vlaneseq
        %v1605 = vshrl.u32 %v1604, 7
        %v1606 = vsub.s32 %v1603, %v1605
        %v1607 = vrot.slane %v1585, %v1606
        %v1609 = vunpack.c.l.s4 1966171168
        %v1610 = vunpack.c.0.s8 %v1609
        %v1611 = vlaneseq
        %v1612 = vshrl.u32 %v1611, 7
        %v1613 = vsub.s32 %v1610, %v1612
        %v1614 = vrot.slane %v1586, %v1613
        %v1615 = vcombine.high %v1593, %v1593
        %v1616 = vcombine.high %v1600, %v1600
        %v1617 = vcombine.high %v1607, %v1607
        %v1618 = vcombine.high %v1614, %v1614
        %v1619 = vcombine.high %v287, %v287
        %v1621 = vunpack.c.l.s4 1966171168
        %v1622 = vunpack.c.0.s8 %v1621
        %v1623 = vlaneseq
        %v1624 = vshrl.u32 %v1623, 7
        %v1625 = vsub.s32 %v1622, %v1624
        %v1626 = vrot.slane %v287, %v1625
        %v1628 = vunpack.c.l.s4 1966171168
        %v1629 = vunpack.c.0.s8 %v1628
        %v1630 = vlaneseq
        %v1631 = vshrl.u32 %v1630, 7
        %v1632 = vsub.s32 %v1629, %v1631
        %v1633 = vrot.slane %v1619, %v1632
        %v1634 = vcombine.high %v1626, %v1626
        %v1635 = vcombine.high %v1633, %v1633
        %v1637 = vunpack.c.l.s4 1966171168
        %v1638 = vunpack.c.0.s8 %v1637
        %v1639 = vlaneseq
        %v1640 = vshrl.u32 %v1639, 7
        %v1641 = vsub.s32 %v1638, %v1640
        %v1642 = vrot.slane %v1626, %v1641
        %v1644 = vunpack.c.l.s4 1966171168
        %v1645 = vunpack.c.0.s8 %v1644
        %v1646 = vlaneseq
        %v1647 = vshrl.u32 %v1646, 7
        %v1648 = vsub.s32 %v1645, %v1647
        %v1649 = vrot.slane %v1633, %v1648
        %v1651 = vunpack.c.l.s4 1966171168
        %v1652 = vunpack.c.0.s8 %v1651
        %v1653 = vlaneseq
        %v1654 = vshrl.u32 %v1653, 7
        %v1655 = vsub.s32 %v1652, %v1654
        %v1656 = vrot.slane %v1634, %v1655
        %v1658 = vunpack.c.l.s4 1966171168
        %v1659 = vunpack.c.0.s8 %v1658
        %v1660 = vlaneseq
        %v1661 = vshrl.u32 %v1660, 7
        %v1662 = vsub.s32 %v1659, %v1661
        %v1663 = vrot.slane %v1635, %v1662
        %v1664 = vcombine.high %v1642, %v1642
        %v1665 = vcombine.high %v1656, %v1656
        %v2707 = vunpack.c.l.b16 %v288
        %v2708 = vunpack.c.l.b16 %v289
        %v2709 = vunpack.c.l.b16 %v290
        %v2710 = vunpack.c.l.b16 %v291
        %v2711 = vunpack.c.l.b16 %v292
        %v2712 = vunpack.c.l.b16 %v293
        %v2713 = vunpack.c.l.b16 %v294
        %v2714 = vunpack.c.l.b16 %v295
        %v2715 = vunpack.c.l.b16 %v296
        %v2716 = vunpack.c.l.b16 %v297
        %v2717 = vunpack.c.l.b16 %v298
        %v2718 = vunpack.c.l.b16 %v299
        %v2719 = vunpack.c.l.b16 %v300
        %v2720 = vunpack.c.l.b16 %v301
        %v2721 = vunpack.c.l.b16 %v302
        %v2722 = vunpack.c.l.b16 %v303
        %v2723 = vunpack.c.l.b16 %v304
        %v2724 = vunpack.c.l.b16 %v305
        %v2725 = vunpack.c.l.b16 %v306
        %v2726 = vunpack.c.l.b16 %v307
        %v2727 = vunpack.c.l.b16 %v308
        %v2728 = vunpack.c.l.b16 %v309
        %v2729 = vunpack.c.l.b16 %v310
        %v2730 = vunpack.c.l.b16 %v311
        %v2731 = vunpack.c.l.b16 %v312
        %v2732 = vunpack.c.l.b16 %v313
        %v2733 = vunpack.c.l.b16 %v314
        %v2734 = vunpack.c.l.b16 %v315
        %v2735 = vunpack.c.l.b16 %v316
        %v2736 = vunpack.c.l.b16 %v317
        %v2737 = vunpack.c.l.b16 %v318
        %v2738 = vunpack.c.l.b16 %v319
        %v2739 = vunpack.c.l.b16 %v320
        %v2740 = vunpack.c.l.b16 %v321
        %v2741 = vunpack.c.l.b16 %v322
        %v2742 = vunpack.c.l.b16 %v323
        %v2743 = vunpack.c.l.b16 %v324
        %v2744 = vunpack.c.l.b16 %v325
        %v2745 = vunpack.c.l.b16 %v326
        %v2746 = vunpack.c.l.b16 %v327
        %v2747 = vunpack.c.l.b16 %v328
        %v2748 = vunpack.c.l.b16 %v329
        %v2749 = vunpack.c.l.b16 %v330
        %v2750 = vunpack.c.l.b16 %v331
        %v2751 = vunpack.c.l.b16 %v332
        %v2752 = vunpack.c.l.b16 %v333
        %v2753 = vunpack.c.l.b16 %v334
        %v2754 = vunpack.c.l.b16 %v335
        %v2755 = vunpack.c.l.b16 %v336
        %v2756 = vunpack.c.l.b16 %v337
        %v2757 = vunpack.c.l.b16 %v338
        %v2758 = vunpack.c.l.b16 %v339
        %v2759 = vunpack.c.l.b16 %v340
        %v2760 = vunpack.c.l.b16 %v341
        %v2761 = vunpack.c.l.b16 %v342
        %v2762 = vunpack.c.l.b16 %v343
        %v2763 = vunpack.c.l.b16 %v344
        %v2764 = vunpack.c.l.b16 %v345
        %v2765 = vunpack.c.l.b16 %v346
        %v2766 = vunpack.c.l.b16 %v347
        %v2767 = vunpack.c.l.b16 %v348
        %v2768 = vunpack.c.l.b16 %v349
        %v2769 = vunpack.c.l.b16 %v350
        %v2770 = vunpack.c.l.b16 %v351
        %v2771 = vunpack.c.l.b16 %v352
        %v2772 = vunpack.c.l.b16 %v353
        %v2773 = vunpack.c.l.b16 %v354
        %v2774 = vunpack.c.l.b16 %v355
        %v2775 = vunpack.c.l.b16 %v356
        %v2776 = vunpack.c.l.b16 %v357
        %v2777 = vunpack.c.l.b16 %v358
        %v2778 = vunpack.c.l.b16 %v359
        %v2779 = vunpack.c.l.b16 %v360
        %v2780 = vunpack.c.l.b16 %v361
        %v2781 = vunpack.c.l.b16 %v362
        %v2782 = vunpack.c.l.b16 %v363
        %v2783 = vunpack.c.l.b16 %v364
        %v2784 = vunpack.c.l.b16 %v365
        %v2785 = vunpack.c.l.b16 %v366
        %v2786 = vunpack.c.l.b16 %v367
        %v2787 = vunpack.c.l.b16 %v368
        %v2788 = vunpack.c.l.b16 %v369
        %v2789 = vunpack.c.l.b16 %v370
        %v2790 = vunpack.c.l.b16 %v371
        %v2791 = vunpack.c.l.b16 %v372
        %v2792 = vunpack.c.l.b16 %v373
        %v2793 = vunpack.c.l.b16 %v374
        %v2794 = vunpack.c.l.b16 %v375
        %v2795 = vunpack.c.l.b16 %v376
        %v2796 = vunpack.c.l.b16 %v377
        %v2797 = vunpack.c.l.b16 %v378
        %v2798 = vunpack.c.l.b16 %v379
        %v2799 = vunpack.c.l.b16 %v380
        %v2800 = vunpack.c.l.b16 %v381
        %v2801 = vunpack.c.l.b16 %v382
        %v2802 = vunpack.c.l.b16 %v383
        %v2803 = vunpack.c.l.b16 %v384
        %v2804 = vunpack.c.l.b16 %v385
        %v2805 = vunpack.c.l.b16 %v386
        %v2806 = vunpack.c.l.b16 %v387
        %v2807 = vunpack.c.l.b16 %v388
        %v2808 = vunpack.c.l.b16 %v389
        %v2809 = vunpack.c.l.b16 %v390
        %v2810 = vunpack.c.l.b16 %v391
        %v2811 = vunpack.c.l.b16 %v392
        %v2812 = vunpack.c.l.b16 %v393
        %v2813 = vunpack.c.l.b16 %v394
        %v2814 = vunpack.c.l.b16 %v395
        %v2815 = vunpack.c.l.b16 %v396
        %v2816 = vunpack.c.l.b16 %v397
        %v2817 = vunpack.c.l.b16 %v398
        %v2818 = vunpack.c.l.b16 %v399
        %v2819 = vunpack.c.l.b16 %v400
        %v2820 = vunpack.c.l.b16 %v401
        %v2821 = vunpack.c.l.b16 %v402
        %v2822 = vunpack.c.l.b16 %v403
        %v2823 = vunpack.c.l.b16 %v404
        %v2824 = vunpack.c.l.b16 %v405
        %v2825 = vunpack.c.l.b16 %v406
        %v2826 = vunpack.c.l.b16 %v407
        %v2827 = vunpack.c.l.b16 %v408
        %v2828 = vunpack.c.l.b16 %v409
        %v2829 = vunpack.c.l.b16 %v410
        %v2830 = vunpack.c.l.b16 %v411
        %v2831 = vunpack.c.l.b16 %v412
        %v2832 = vunpack.c.l.b16 %v413
        %v2833 = vunpack.c.l.b16 %v414
        %v2834 = vunpack.c.l.b16 %v415
        %v2835 = vunpack.c.l.b16 %v416
        %v2836 = vunpack.c.l.b16 %v417
        %v2837 = vunpack.c.l.b16 %v418
        %v2838 = vunpack.c.l.b16 %v419
        %v2839 = vunpack.c.l.b16 %v420
        %v2840 = vunpack.c.l.b16 %v421
        %v2841 = vunpack.c.l.b16 %v422
        %v2842 = vunpack.c.l.b16 %v423
        %v2843 = vunpack.c.l.b16 %v424
        %v2844 = vunpack.c.l.b16 %v425
        %v2845 = vunpack.c.l.b16 %v426
        %v2846 = vunpack.c.l.b16 %v427
        %v2847 = vunpack.c.l.b16 %v428
        %v2848 = vunpack.c.l.b16 %v429
        %v2849 = vunpack.c.l.b16 %v430
        %v2850 = vunpack.c.l.b16 %v431
        %v2851 = vunpack.c.l.b16 %v432
        %v2852 = vunpack.c.l.b16 %v433
        %v2853 = vunpack.c.l.b16 %v434
        %v2854 = vunpack.c.l.b16 %v435
        %v2855 = vunpack.c.l.b16 %v436
        %v2856 = vunpack.c.l.b16 %v437
        %v2857 = vunpack.c.l.b16 %v438
        %v2858 = vunpack.c.l.b16 %v439
        %v2859 = vunpack.c.l.b16 %v440
        %v2860 = vunpack.c.l.b16 %v441
        %v2861 = vunpack.c.l.b16 %v442
        %v2862 = vunpack.c.l.b16 %v443
        %v2863 = vunpack.c.l.b16 %v444
        %v2864 = vunpack.c.l.b16 %v445
        %v2865 = vunpack.c.l.b16 %v446
        %v2866 = vunpack.c.l.b16 %v447
        %v2867 = vunpack.c.l.b16 %v448
        %v2868 = vunpack.c.l.b16 %v449
        %v2869 = vunpack.c.l.b16 %v450
        %v2870 = vunpack.c.l.b16 %v451
        %v2871 = vunpack.c.l.b16 %v452
        %v2872 = vunpack.c.l.b16 %v453
        %v2873 = vunpack.c.l.b16 %v454
        %v2874 = vunpack.c.l.b16 %v455
        %v2875 = vunpack.c.l.b16 %v456
        %v2876 = vunpack.c.l.b16 %v457
        %v2877 = vunpack.c.l.b16 %v458
        %v2878 = vunpack.c.l.b16 %v459
        %v2879 = vunpack.c.l.b16 %v460
        %v2880 = vunpack.c.l.b16 %v461
        %v2881 = vunpack.c.l.b16 %v462
        %v2882 = vunpack.c.l.b16 %v463
        %v2883 = vunpack.c.l.b16 %v464
        %v2884 = vunpack.c.l.b16 %v465
        %v2885 = vunpack.c.l.b16 %v466
        %v2886 = vunpack.c.l.b16 %v467
        %v2887 = vunpack.c.l.b16 %v468
        %v2888 = vunpack.c.l.b16 %v469
        %v2889 = vunpack.c.l.b16 %v470
        %v2890 = vunpack.c.l.b16 %v471
        %v2891 = vunpack.c.l.b16 %v472
        %v2892 = vunpack.c.l.b16 %v473
        %v2893 = vunpack.c.l.b16 %v474
        %v2894 = vunpack.c.l.b16 %v475
        %v2895 = vunpack.c.l.b16 %v476
        %v2896 = vunpack.c.l.b16 %v477
        %v2897 = vunpack.c.l.b16 %v478
        %v2898 = vunpack.c.l.b16 %v479
        %v2899 = vunpack.c.l.b16 %v480
        %v2900 = vunpack.c.l.b16 %v481
        %v2901 = vunpack.c.l.b16 %v482
        %v2902 = vunpack.c.l.b16 %v483
        %v2903 = vunpack.c.l.b16 %v484
        %v2904 = vunpack.c.l.b16 %v485
        %v2905 = vunpack.c.l.b16 %v486
        %v2906 = vunpack.c.l.b16 %v487
        %v2907 = vunpack.c.l.b16 %v488
        %v2908 = vunpack.c.l.b16 %v489
        %v2909 = vunpack.c.l.b16 %v490
        %v2910 = vunpack.c.l.b16 %v491
        %v2911 = vunpack.c.l.b16 %v492
        %v2912 = vunpack.c.l.b16 %v493
        %v2913 = vunpack.c.l.b16 %v494
        %v2914 = vunpack.c.l.b16 %v495
        %v2915 = vunpack.c.l.b16 %v496
        %v2916 = vunpack.c.l.b16 %v497
        %v2917 = vunpack.c.l.b16 %v498
        %v2918 = vunpack.c.l.b16 %v499
        %v2919 = vunpack.c.l.b16 %v500
        %v2920 = vunpack.c.l.b16 %v501
        %v2921 = vunpack.c.l.b16 %v502
        %v2922 = vunpack.c.l.b16 %v503
        %v2923 = vunpack.c.l.b16 %v504
        %v2924 = vunpack.c.l.b16 %v505
        %v2925 = vunpack.c.l.b16 %v506
        %v2926 = vunpack.c.l.b16 %v507
        %v2927 = vunpack.c.l.b16 %v508
        %v2928 = vunpack.c.l.b16 %v509
        %v2929 = vunpack.c.l.b16 %v510
        %v2930 = vunpack.c.l.b16 %v511
        %v2931 = vunpack.c.l.b16 %v512
        %v2932 = vunpack.c.l.b16 %v513
        %v2933 = vunpack.c.l.b16 %v514
        %v2934 = vunpack.c.l.b16 %v515
        %v2935 = vunpack.c.l.b16 %v516
        %v2936 = vunpack.c.l.b16 %v517
        %v2937 = vunpack.c.l.b16 %v518
        %v2938 = vunpack.c.l.b16 %v519
        %v2939 = vunpack.c.l.b16 %v520
        %v2940 = vunpack.c.l.b16 %v521
        %v2941 = vunpack.c.l.b16 %v522
        %v2942 = vunpack.c.l.b16 %v523
        %v2943 = vunpack.c.l.b16 %v524
        %v2944 = vunpack.c.l.b16 %v525
        %v2945 = vunpack.c.l.b16 %v526
        %v2946 = vunpack.c.l.b16 %v527
        %v2947 = vunpack.c.l.b16 %v528
        %v2948 = vunpack.c.l.b16 %v529
        %v2949 = vunpack.c.l.b16 %v530
        %v2950 = vunpack.c.l.b16 %v531
        %v2951 = vunpack.c.l.b16 %v532
        %v2952 = vunpack.c.l.b16 %v533
        %v2953 = vunpack.c.l.b16 %v534
        %v2954 = vunpack.c.l.b16 %v535
        %v2955 = vunpack.c.l.b16 %v536
        %v2956 = vunpack.c.l.b16 %v537
        %v2957 = vunpack.c.l.b16 %v538
        %v2958 = vunpack.c.l.b16 %v539
        %v2959 = vunpack.c.l.b16 %v540
        %v2960 = vunpack.c.l.b16 %v541
        %v2961 = vunpack.c.l.b16 %v542
        %v2962 = vunpack.c.l.b16 %v543
        %v2963 = vunpack.c.l.b16 %v544
        %v2964 = vunpack.c.l.b16 %v545
        %v2965 = vunpack.c.l.b16 %v546
        %v2966 = vunpack.c.l.b16 %v547
        %v2967 = vunpack.c.l.b16 %v548
        %v2968 = vunpack.c.l.b16 %v549
        %v2969 = vunpack.c.l.b16 %v550
        %v2970 = vunpack.c.l.b16 %v551
        %v2971 = vunpack.c.l.b16 %v552
        %v2972 = vunpack.c.l.b16 %v553
        %v2973 = vunpack.c.l.b16 %v554
        %v2974 = vunpack.c.l.b16 %v555
        %v2975 = vunpack.c.l.b16 %v556
        %v2976 = vunpack.c.l.b16 %v557
        %v2977 = vunpack.c.l.b16 %v558
        %v2978 = vunpack.c.l.b16 %v559
        %v2979 = vunpack.c.l.b16 %v560
        %v2980 = vunpack.c.l.b16 %v561
        %v2981 = vunpack.c.l.b16 %v562
        %v2982 = vunpack.c.l.b16 %v563
        %v2983 = vunpack.c.l.b16 %v564
        %v2984 = vunpack.c.l.b16 %v565
        %v2985 = vunpack.c.l.b16 %v566
        %v2986 = vunpack.c.l.b16 %v567
        %v2987 = vunpack.c.l.b16 %v568
        %v2988 = vunpack.c.l.b16 %v569
        %v2989 = vunpack.c.l.b16 %v570
        %v2990 = vunpack.c.l.b16 %v571
        %v2991 = vunpack.c.l.b16 %v572
        %v2992 = vunpack.c.l.b16 %v573
        %v2993 = vunpack.c.l.b16 %v574
        %v2994 = vunpack.c.l.b16 %v575
        %v2995 = vunpack.c.l.b16 %v576
        %v2996 = vunpack.c.l.b16 %v577
        %v2997 = vunpack.c.l.b16 %v578
        %v2998 = vunpack.c.l.b16 %v579
        %v2999 = vunpack.c.l.b16 %v580
        %v3000 = vunpack.c.l.b16 %v581
        %v3001 = vunpack.c.l.b16 %v582
        %v3002 = vunpack.c.l.b16 %v583
        %v3003 = vunpack.c.l.b16 %v584
        %v3004 = vunpack.c.l.b16 %v585
        %v3005 = vunpack.c.l.b16 %v586
        %v3006 = vunpack.c.l.b16 %v587
        %v3007 = vunpack.c.l.b16 %v588
        %v3008 = vunpack.c.l.b16 %v589
        %v3009 = vunpack.c.l.b16 %v590
        %v3010 = vunpack.c.l.b16 %v591
        %v3011 = vunpack.c.l.b16 %v592
        %v3012 = vunpack.c.l.b16 %v593
        %v3013 = vunpack.c.l.b16 %v594
        %v3014 = vunpack.c.l.b16 %v595
        %v3015 = vunpack.c.l.b16 %v596
        %v3016 = vunpack.c.l.b16 %v597
        %v3017 = vunpack.c.l.b16 %v598
        %v3018 = vunpack.c.l.b16 %v599
        %v3019 = vunpack.c.l.b16 %v600
        %v3020 = vunpack.c.l.b16 %v601
        %v3021 = vunpack.c.l.b16 %v602
        %v3022 = vunpack.c.l.b16 %v603
        %v3023 = vunpack.c.l.b16 %v604
        %v3024 = vunpack.c.l.b16 %v605
        %v3025 = vunpack.c.l.b16 %v606
        %v3026 = vunpack.c.l.b16 %v607
        %v3027 = vunpack.c.l.b16 %v608
        %v3028 = vunpack.c.l.b16 %v609
        %v3029 = vunpack.c.l.b16 %v610
        %v3030 = vunpack.c.l.b16 %v611
        %v3031 = vunpack.c.l.b16 %v612
        %v3032 = vunpack.c.l.b16 %v613
        %v3033 = vunpack.c.l.b16 %v614
        %v3034 = vunpack.c.l.b16 %v615
        %v3035 = vunpack.c.l.b16 %v616
        %v3036 = vunpack.c.l.b16 %v617
        %v3037 = vunpack.c.l.b16 %v618
        %v3038 = vunpack.c.l.b16 %v619
        %v3039 = vunpack.c.l.b16 %v620
        %v3040 = vunpack.c.l.b16 %v621
        %v3041 = vunpack.c.l.b16 %v622
        %v3042 = vunpack.c.l.b16 %v623
        %v3043 = vunpack.c.l.b16 %v624
        %v3044 = vunpack.c.l.b16 %v625
        %v3045 = vunpack.c.l.b16 %v626
        %v3046 = vunpack.c.l.b16 %v627
        %v3047 = vunpack.c.l.b16 %v628
        %v3048 = vunpack.c.l.b16 %v629
        %v3049 = vunpack.c.l.b16 %v630
        %v3050 = vunpack.c.l.b16 %v631
        %v3051 = vunpack.c.l.b16 %v632
        %v3052 = vunpack.c.l.b16 %v633
        %v3053 = vunpack.c.l.b16 %v634
        %v3054 = vunpack.c.l.b16 %v635
        %v3055 = vunpack.c.l.b16 %v636
        %v3056 = vunpack.c.l.b16 %v637
        %v3057 = vunpack.c.l.b16 %v638
        %v3058 = vunpack.c.l.b16 %v639
        %v3059 = vunpack.c.l.b16 %v640
        %v3060 = vunpack.c.l.b16 %v641
        %v3061 = vunpack.c.l.b16 %v642
        %v3062 = vunpack.c.l.b16 %v643
        %v3063 = vunpack.c.l.b16 %v644
        %v3064 = vunpack.c.l.b16 %v645
        %v3065 = vunpack.c.l.b16 %v646
        %v3066 = vunpack.c.l.b16 %v647
        %v3067 = vunpack.c.l.b16 %v648
        %v3068 = vunpack.c.l.b16 %v649
        %v3069 = vunpack.c.l.b16 %v650
        %v3070 = vunpack.c.l.b16 %v651
        %v3071 = vunpack.c.l.b16 %v652
        %v3072 = vunpack.c.l.b16 %v653
        %v3073 = vunpack.c.l.b16 %v654
        %v3074 = vunpack.c.l.b16 %v655
        %v3075 = vunpack.c.l.b16 %v656
        %v3076 = vunpack.c.l.b16 %v657
        %v3077 = vunpack.c.l.b16 %v658
        %v3078 = vunpack.c.l.b16 %v659
        %v3079 = vunpack.c.l.b16 %v660
        %v3080 = vunpack.c.l.b16 %v661
        %v3081 = vunpack.c.l.b16 %v662
        %v3082 = vunpack.c.l.b16 %v663
        %v3083 = vunpack.c.l.b16 %v664
        %v3084 = vunpack.c.l.b16 %v665
        %v3085 = vunpack.c.l.b16 %v666
        %v3086 = vunpack.c.l.b16 %v667
        %v3087 = vunpack.c.l.b16 %v668
        %v3088 = vunpack.c.l.b16 %v669
        %v3089 = vunpack.c.l.b16 %v670
        %v3090 = vunpack.c.l.b16 %v671
        %v3091 = vunpack.c.l.b16 %v672
        %v3092 = vunpack.c.l.b16 %v673
        %v3093 = vunpack.c.l.b16 %v674
        %v3094 = vunpack.c.l.b16 %v675
        %v3095 = vunpack.c.l.b16 %v676
        %v3096 = vunpack.c.l.b16 %v677
        %v3097 = vunpack.c.l.b16 %v678
        %v3098 = vunpack.c.l.b16 %v679
        %v3099 = vunpack.c.l.b16 %v680
        %v3100 = vunpack.c.l.b16 %v681
        %v3101 = vunpack.c.l.b16 %v682
        %v3102 = vunpack.c.l.b16 %v683
        %v3103 = vunpack.c.l.b16 %v684
        %v3104 = vunpack.c.l.b16 %v685
        %v3105 = vunpack.c.l.b16 %v686
        %v3106 = vunpack.c.l.b16 %v687
        %v3107 = vunpack.c.l.b16 %v688
        %v3108 = vunpack.c.l.b16 %v689
        %v3109 = vunpack.c.l.b16 %v690
        %v3110 = vunpack.c.l.b16 %v691
        %v3111 = vunpack.c.l.b16 %v692
        %v3112 = vunpack.c.l.b16 %v693
        %v3113 = vunpack.c.l.b16 %v694
        %v3114 = vunpack.c.l.b16 %v695
        %v3115 = vunpack.c.l.b16 %v696
        %v3116 = vunpack.c.l.b16 %v697
        %v3117 = vunpack.c.l.b16 %v698
        %v3118 = vunpack.c.l.b16 %v699
        %v3119 = vunpack.c.l.b16 %v700
        %v3120 = vunpack.c.l.b16 %v701
        %v3121 = vunpack.c.l.b16 %v702
        %v3122 = vunpack.c.l.b16 %v703
        %v3123 = vunpack.c.l.b16 %v704
        %v3124 = vunpack.c.l.b16 %v705
        %v3125 = vunpack.c.l.b16 %v706
        %v3126 = vunpack.c.l.b16 %v707
        %v3127 = vunpack.c.l.b16 %v708
        %v3128 = vunpack.c.l.b16 %v709
        %v3129 = vunpack.c.l.b16 %v710
        %v3130 = vunpack.c.l.b16 %v711
        %v3131 = vunpack.c.l.b16 %v712
        %v3132 = vunpack.c.l.b16 %v713
        %v3133 = vunpack.c.l.b16 %v714
        %v3134 = vunpack.c.l.b16 %v715
        %v3135 = vunpack.c.l.b16 %v716
        %v3136 = vunpack.c.l.b16 %v717
        %v3137 = vunpack.c.l.b16 %v718
        %v3138 = vunpack.c.l.b16 %v719
        %v3139 = vunpack.c.l.b16 %v720
        %v3140 = vunpack.c.l.b16 %v721
        %v3141 = vunpack.c.l.b16 %v722
        %v3142 = vunpack.c.l.b16 %v723
        %v3143 = vunpack.c.l.b16 %v724
        %v3144 = vunpack.c.l.b16 %v725
        %v3145 = vunpack.c.l.b16 %v726
        %v3146 = vunpack.c.l.b16 %v727
        %v3147 = vunpack.c.l.b16 %v728
        %v3148 = vunpack.c.l.b16 %v729
        %v3149 = vunpack.c.l.b16 %v730
        %v3150 = vunpack.c.l.b16 %v731
        %v3151 = vunpack.c.l.b16 %v732
        %v3152 = vunpack.c.l.b16 %v733
        %v3153 = vunpack.c.l.b16 %v734
        %v3154 = vunpack.c.l.b16 %v735
        %v3155 = vunpack.c.l.b16 %v736
        %v3156 = vunpack.c.l.b16 %v737
        %v3157 = vunpack.c.l.b16 %v738
        %v3158 = vunpack.c.l.b16 %v739
        %v3159 = vunpack.c.l.b16 %v740
        %v3160 = vunpack.c.l.b16 %v741
        %v3161 = vunpack.c.l.b16 %v742
        %v3162 = vunpack.c.l.b16 %v743
        %v3163 = vunpack.c.l.b16 %v744
        %v3164 = vunpack.c.l.b16 %v745
        %v3165 = vunpack.c.l.b16 %v746
        %v3166 = vunpack.c.l.b16 %v747
        %v3167 = vunpack.c.l.b16 %v748
        %v3168 = vunpack.c.l.b16 %v749
        %v3169 = vunpack.c.l.b16 %v750
        %v3170 = vunpack.c.l.b16 %v751
        %v3171 = vunpack.c.l.b16 %v752
        %v3172 = vunpack.c.l.b16 %v753
        %v3173 = vunpack.c.l.b16 %v754
        %v3174 = vunpack.c.l.b16 %v755
        %v3175 = vunpack.c.l.b16 %v756
        %v3176 = vunpack.c.l.b16 %v757
        %v3177 = vunpack.c.l.b16 %v758
        %v3178 = vunpack.c.l.b16 %v759
        %v3179 = vunpack.c.l.b16 %v760
        %v3180 = vunpack.c.l.b16 %v761
        %v3181 = vunpack.c.l.b16 %v762
        %v3182 = vunpack.c.l.b16 %v763
        %v3183 = vunpack.c.l.b16 %v764
        %v3184 = vunpack.c.l.b16 %v765
        %v3185 = vunpack.c.l.b16 %v766
        %v3186 = vunpack.c.l.b16 %v767
        %v3187 = vunpack.c.l.b16 %v768
        %v3188 = vunpack.c.l.b16 %v769
        %v3189 = vunpack.c.l.b16 %v770
        %v3190 = vunpack.c.l.b16 %v771
        %v3191 = vunpack.c.l.b16 %v772
        %v3192 = vunpack.c.l.b16 %v773
        %v3193 = vunpack.c.l.b16 %v774
        %v3194 = vunpack.c.l.b16 %v775
        %v3195 = vunpack.c.l.b16 %v776
        %v3196 = vunpack.c.l.b16 %v777
        %v3197 = vunpack.c.l.b16 %v778
        %v3198 = vunpack.c.l.b16 %v779
        %v3199 = vunpack.c.l.b16 %v780
        %v3200 = vunpack.c.l.b16 %v781
        %v3201 = vunpack.c.l.b16 %v782
        %v3202 = vunpack.c.l.b16 %v783
        %v3203 = vunpack.c.l.b16 %v784
        %v3204 = vunpack.c.l.b16 %v785
        %v3205 = vunpack.c.l.b16 %v786
        %v3206 = vunpack.c.l.b16 %v787
        %v3207 = vunpack.c.l.b16 %v788
        %v3208 = vunpack.c.l.b16 %v789
        %v3209 = vunpack.c.l.b16 %v790
        %v3210 = vunpack.c.l.b16 %v791
        %v3211 = vunpack.c.l.b16 %v792
        %v3212 = vunpack.c.l.b16 %v793
        %v3213 = vunpack.c.l.b16 %v794
        %v3214 = vunpack.c.l.b16 %v795
        %v3215 = vunpack.c.l.b16 %v796
        %v3216 = vunpack.c.l.b16 %v797
        %v3217 = vunpack.c.l.b16 %v798
        %v3218 = vunpack.c.l.b16 %v799
        %v3219 = vunpack.c.l.b16 %v800
        %v3220 = vunpack.c.l.b16 %v801
        %v3221 = vunpack.c.l.b16 %v802
        %v3222 = vunpack.c.l.b16 %v803
        %v3223 = vunpack.c.l.b16 %v804
        %v3224 = vunpack.c.l.b16 %v805
        %v3225 = vunpack.c.l.b16 %v806
        %v3226 = vunpack.c.l.b16 %v807
        %v3227 = vunpack.c.l.b16 %v808
        %v3228 = vunpack.c.l.b16 %v809
        %v3229 = vunpack.c.l.b16 %v810
        %v3230 = vunpack.c.l.b16 %v811
        %v3231 = vunpack.c.l.b16 %v812
        %v3232 = vunpack.c.l.b16 %v813
        %v3233 = vunpack.c.l.b16 %v814
        %v3234 = vunpack.c.l.b16 %v815
        %v3235 = vunpack.c.l.b16 %v816
        %v3236 = vunpack.c.l.b16 %v817
        %v3237 = vunpack.c.l.b16 %v818
        %v3238 = vunpack.c.l.b16 %v819
        %v3239 = vunpack.c.l.b16 %v820
        %v3240 = vunpack.c.l.b16 %v821
        %v3241 = vunpack.c.l.b16 %v822
        %v3242 = vunpack.c.l.b16 %v823
        %v3243 = vunpack.c.l.b16 %v824
        %v3244 = vunpack.c.l.b16 %v825
        %v3245 = vunpack.c.l.b16 %v826
        %v3246 = vunpack.c.l.b16 %v827
        %v3247 = vunpack.c.l.b16 %v828
        %v3248 = vunpack.c.l.b16 %v829
        %v3249 = vunpack.c.l.b16 %v830
        %v3250 = vunpack.c.l.b16 %v831
        %v3251 = vunpack.c.l.b16 %v832
        %v3252 = vunpack.c.l.b16 %v833
        %v3253 = vunpack.c.l.b16 %v834
        %v3254 = vunpack.c.l.b16 %v835
        %v3255 = vunpack.c.l.b16 %v836
        %v3256 = vunpack.c.l.b16 %v837
        %v3257 = vunpack.c.l.b16 %v838
        %v3258 = vunpack.c.l.b16 %v839
        %v3259 = vunpack.c.l.b16 %v840
        %v3260 = vunpack.c.l.b16 %v841
        %v3261 = vunpack.c.l.b16 %v842
        %v3262 = vunpack.c.l.b16 %v843
        %v3263 = vunpack.c.l.b16 %v844
        %v3264 = vunpack.c.l.b16 %v845
        %v3265 = vunpack.c.l.b16 %v846
        %v3266 = vunpack.c.l.b16 %v847
        %v3267 = vunpack.c.l.b16 %v848
        %v3268 = vunpack.c.l.b16 %v849
        %v3269 = vunpack.c.l.b16 %v850
        %v3270 = vunpack.c.l.b16 %v851
        %v3271 = vunpack.c.l.b16 %v852
        %v3272 = vunpack.c.l.b16 %v853
        %v3273 = vunpack.c.l.b16 %v854
        %v3274 = vunpack.c.l.b16 %v855
        %v3275 = vunpack.c.l.b16 %v856
        %v3276 = vunpack.c.l.b16 %v857
        %v3277 = vunpack.c.l.b16 %v858
        %v3278 = vunpack.c.l.b16 %v859
        %v3279 = vunpack.c.l.b16 %v860
        %v3280 = vunpack.c.l.b16 %v861
        %v3281 = vunpack.c.l.b16 %v862
        %v3282 = vunpack.c.l.b16 %v863
        %v3283 = vunpack.c.l.b16 %v864
        %v3284 = vunpack.c.l.b16 %v865
        %v3285 = vunpack.c.l.b16 %v866
        %v3286 = vunpack.c.l.b16 %v867
        %v3287 = vunpack.c.l.b16 %v868
        %v3288 = vunpack.c.l.b16 %v869
        %v3289 = vunpack.c.l.b16 %v870
        %v3290 = vunpack.c.l.b16 %v871
        %v3291 = vunpack.c.l.b16 %v872
        %v3292 = vunpack.c.l.b16 %v873
        %v3293 = vunpack.c.l.b16 %v874
        %v3294 = vunpack.c.l.b16 %v875
        %v3295 = vunpack.c.l.b16 %v876
        %v3296 = vunpack.c.l.b16 %v877
        %v3297 = vunpack.c.l.b16 %v878
        %v3298 = vunpack.c.l.b16 %v879
        %v3299 = vunpack.c.l.b16 %v880
        %v3300 = vunpack.c.l.b16 %v881
        %v3301 = vunpack.c.l.b16 %v882
        %v3302 = vunpack.c.l.b16 %v883
        %v3303 = vunpack.c.l.b16 %v884
        %v3304 = vunpack.c.l.b16 %v885
        %v3305 = vunpack.c.l.b16 %v886
        %v3306 = vunpack.c.l.b16 %v887
        %v3307 = vunpack.c.l.b16 %v888
        %v3308 = vunpack.c.l.b16 %v889
        %v3309 = vunpack.c.l.b16 %v890
        %v3310 = vunpack.c.l.b16 %v891
        %v3311 = vunpack.c.l.b16 %v892
        %v3312 = vunpack.c.l.b16 %v893
        %v3313 = vunpack.c.l.b16 %v894
        %v3314 = vunpack.c.l.b16 %v895
        %v3315 = vunpack.c.l.b16 %v896
        %v3316 = vunpack.c.l.b16 %v897
        %v3317 = vunpack.c.l.b16 %v898
        %v3318 = vunpack.c.l.b16 %v899
        %v3319 = vunpack.c.l.b16 %v900
        %v3320 = vunpack.c.l.b16 %v901
        %v3321 = vunpack.c.l.b16 %v902
        %v3322 = vunpack.c.l.b16 %v903
        %v3323 = vunpack.c.l.b16 %v904
        %v3324 = vunpack.c.l.b16 %v905
        %v3325 = vunpack.c.l.b16 %v906
        %v3326 = vunpack.c.l.b16 %v907
        %v3327 = vunpack.c.l.b16 %v908
        %v3328 = vunpack.c.l.b16 %v909
        %v3329 = vunpack.c.l.b16 %v910
        %v3330 = vunpack.c.l.b16 %v911
        %v3331 = vunpack.c.l.b16 %v912
        %v3332 = vunpack.c.l.b16 %v913
        %v3333 = vunpack.c.l.b16 %v914
        %v3334 = vunpack.c.l.b16 %v915
        %v3335 = vunpack.c.l.b16 %v916
        %v3336 = vunpack.c.l.b16 %v917
        %v3337 = vunpack.c.l.b16 %v918
        %v3338 = vunpack.c.l.b16 %v919
        %v3339 = vunpack.c.l.b16 %v920
        %v3340 = vunpack.c.l.b16 %v921
        %v3341 = vunpack.c.l.b16 %v922
        %v3342 = vunpack.c.l.b16 %v923
        %v3343 = vunpack.c.l.b16 %v924
        %v3344 = vunpack.c.l.b16 %v925
        %v3345 = vunpack.c.l.b16 %v926
        %v3346 = vunpack.c.l.b16 %v927
        %v3347 = vunpack.c.l.b16 %v928
        %v3348 = vunpack.c.l.b16 %v929
        %v3349 = vunpack.c.l.b16 %v930
        %v3350 = vunpack.c.l.b16 %v931
        %v3351 = vunpack.c.l.b16 %v932
        %v3352 = vunpack.c.l.b16 %v933
        %v3353 = vunpack.c.l.b16 %v934
        %v3354 = vunpack.c.l.b16 %v935
        %v3355 = vunpack.c.l.b16 %v936
        %v3356 = vunpack.c.l.b16 %v937
        %v3357 = vunpack.c.l.b16 %v938
        %v3358 = vunpack.c.l.b16 %v939
        %v3359 = vunpack.c.l.b16 %v940
        %v3360 = vunpack.c.l.b16 %v941
        %v3361 = vunpack.c.l.b16 %v942
        %v3362 = vunpack.c.l.b16 %v943
        %v3363 = vunpack.c.l.b16 %v944
        %v3364 = vunpack.c.l.b16 %v945
        %v3365 = vunpack.c.l.b16 %v946
        %v3366 = vunpack.c.l.b16 %v947
        %v3367 = vunpack.c.l.b16 %v948
        %v3368 = vunpack.c.l.b16 %v949
        %v3369 = vunpack.c.l.b16 %v950
        %v3370 = vunpack.c.l.b16 %v951
        %v3371 = vunpack.c.l.b16 %v952
        %v3372 = vunpack.c.l.b16 %v953
        %v3373 = vunpack.c.l.b16 %v954
        %v3374 = vunpack.c.l.b16 %v955
        %v3375 = vunpack.c.l.b16 %v956
        %v3376 = vunpack.c.l.b16 %v957
        %v3377 = vunpack.c.l.b16 %v958
        %v3378 = vunpack.c.l.b16 %v959
        %v3379 = vunpack.c.l.b16 %v960
        %v3380 = vunpack.c.l.b16 %v961
        %v3381 = vunpack.c.l.b16 %v962
        %v3382 = vunpack.c.l.b16 %v963
        %v3383 = vunpack.c.l.b16 %v964
        %v3384 = vunpack.c.l.b16 %v965
        %v3385 = vunpack.c.l.b16 %v966
        %v3386 = vunpack.c.l.b16 %v967
        %v3387 = vunpack.c.l.b16 %v968
        %v3388 = vunpack.c.l.b16 %v969
        %v3389 = vunpack.c.l.b16 %v970
        %v3390 = vunpack.c.l.b16 %v971
        %v3391 = vunpack.c.l.b16 %v972
        %v3392 = vunpack.c.l.b16 %v973
        %v3393 = vunpack.c.l.b16 %v974
        %v3394 = vunpack.c.l.b16 %v975
        %v3395 = vunpack.c.l.b16 %v976
        %v3396 = vunpack.c.l.b16 %v977
        %v3397 = vunpack.c.l.b16 %v978
        %v3398 = vunpack.c.l.b16 %v979
        %v3399 = vunpack.c.l.b16 %v980
        %v3400 = vunpack.c.l.b16 %v981
        %v3401 = vunpack.c.l.b16 %v982
        %v3402 = vunpack.c.l.b16 %v983
        %v3403 = vunpack.c.l.b16 %v984
        %v3404 = vunpack.c.l.b16 %v985
        %v3405 = vunpack.c.l.b16 %v986
        %v3406 = vunpack.c.l.b16 %v987
        %v3407 = vunpack.c.l.b16 %v988
        %v3408 = vunpack.c.l.b16 %v989
        %v3409 = vunpack.c.l.b16 %v990
        %v3410 = vunpack.c.l.b16 %v991
        %v3411 = vunpack.c.l.b16 %v992
        %v3412 = vunpack.c.l.b16 %v993
        %v3413 = vunpack.c.l.b16 %v994
        %v3414 = vunpack.c.l.b16 %v995
        %v3415 = vunpack.c.l.b16 %v996
        %v3416 = vunpack.c.l.b16 %v997
        %v3417 = vunpack.c.l.b16 %v998
        %v3418 = vunpack.c.l.b16 %v999
        %v3419 = vunpack.c.l.b16 %v1000
        %v3420 = vunpack.c.l.b16 %v1001
        %v3421 = vunpack.c.l.b16 %v1002
        %v3422 = vunpack.c.l.b16 %v1003
        %v3423 = vunpack.c.l.b16 %v1004
        %v3424 = vunpack.c.l.b16 %v1005
        %v3425 = vunpack.c.l.b16 %v1006
        %v3426 = vunpack.c.l.b16 %v1007
        %v3427 = vunpack.c.l.b16 %v1008
        %v3428 = vunpack.c.l.b16 %v1009
        %v3429 = vunpack.c.l.b16 %v1010
        %v3430 = vunpack.c.l.b16 %v1011
        %v3431 = vunpack.c.l.b16 %v1012
        %v3432 = vunpack.c.l.b16 %v1013
        %v3433 = vunpack.c.l.b16 %v1014
        %v3434 = vunpack.c.l.b16 %v1015
        %v3435 = vunpack.c.l.b16 %v1016
        %v3436 = vunpack.c.l.b16 %v1017
        %v3437 = vunpack.c.l.b16 %v1018
        %v3438 = vunpack.c.l.b16 %v1019
        %v3439 = vunpack.c.l.b16 %v1020
        %v3440 = vunpack.c.l.b16 %v1021
        %v3441 = vunpack.c.l.b16 %v1022
        %v3442 = vunpack.c.l.b16 %v1023
        %v3443 = vunpack.c.l.b16 %v1024
        %v3444 = vunpack.c.l.b16 %v1025
        %v3445 = vunpack.c.l.b16 %v1026
        %v3446 = vunpack.c.l.b16 %v1027
        %v3447 = vunpack.c.l.b16 %v1028
        %v3448 = vunpack.c.l.b16 %v1029
        %v3449 = vunpack.c.l.b16 %v1030
        %v3450 = vunpack.c.l.b16 %v1031
        %v3451 = vunpack.c.l.b16 %v1032
        %v3452 = vunpack.c.l.b16 %v1033
        %v3453 = vunpack.c.l.b16 %v1034
        %v3454 = vunpack.c.l.b16 %v1035
        %v3455 = vunpack.c.l.b16 %v1036
        %v3456 = vunpack.c.l.b16 %v1037
        %v3457 = vunpack.c.l.b16 %v1038
        %v3458 = vunpack.c.l.b16 %v1039
        %v3459 = vunpack.c.l.b16 %v1040
        %v3460 = vunpack.c.l.b16 %v1041
        %v3461 = vunpack.c.l.b16 %v1042
        %v3462 = vunpack.c.l.b16 %v1043
        %v3463 = vunpack.c.l.b16 %v1044
        %v3464 = vunpack.c.l.b16 %v1045
        %v3465 = vunpack.c.l.b16 %v1046
        %v3466 = vunpack.c.l.b16 %v1047
        %v3467 = vunpack.c.l.b16 %v1048
        %v3468 = vunpack.c.l.b16 %v1049
        %v3469 = vunpack.c.l.b16 %v1050
        %v3470 = vunpack.c.l.b16 %v1051
        %v3471 = vunpack.c.l.b16 %v1052
        %v3472 = vunpack.c.l.b16 %v1053
        %v3473 = vunpack.c.l.b16 %v1054
        %v3474 = vunpack.c.l.b16 %v1055
        %v3475 = vunpack.c.l.b16 %v1056
        %v3476 = vunpack.c.l.b16 %v1057
        %v3477 = vunpack.c.l.b16 %v1058
        %v3478 = vunpack.c.l.b16 %v1059
        %v3479 = vunpack.c.l.b16 %v1060
        %v3480 = vunpack.c.l.b16 %v1061
        %v3481 = vunpack.c.l.b16 %v1062
        %v3482 = vunpack.c.l.b16 %v1063
        %v3483 = vunpack.c.l.b16 %v1064
        %v3484 = vunpack.c.l.b16 %v1065
        %v3485 = vunpack.c.l.b16 %v1066
        %v3486 = vunpack.c.l.b16 %v1067
        %v3487 = vunpack.c.l.b16 %v1068
        %v3488 = vunpack.c.l.b16 %v1069
        %v3489 = vunpack.c.l.b16 %v1070
        %v3490 = vunpack.c.l.b16 %v1071
        %v3491 = vunpack.c.l.b16 %v1072
        %v3492 = vunpack.c.l.b16 %v1073
        %v3493 = vunpack.c.l.b16 %v1074
        %v3494 = vunpack.c.l.b16 %v1075
        %v3495 = vunpack.c.l.b16 %v1076
        %v3496 = vunpack.c.l.b16 %v1077
        %v3497 = vunpack.c.l.b16 %v1078
        %v3498 = vunpack.c.l.b16 %v1079
        %v3499 = vunpack.c.l.b16 %v1080
        %v3500 = vunpack.c.l.b16 %v1081
        %v3501 = vunpack.c.l.b16 %v1082
        %v3502 = vunpack.c.l.b16 %v1083
        %v3503 = vunpack.c.l.b16 %v1084
        %v3504 = vunpack.c.l.b16 %v1085
        %v3505 = vunpack.c.l.b16 %v1086
        %v3506 = vunpack.c.l.b16 %v1087
        %v3507 = vunpack.c.l.b16 %v1088
        %v3508 = vunpack.c.l.b16 %v1089
        %v3509 = vunpack.c.l.b16 %v1090
        %v3510 = vunpack.c.l.b16 %v1091
        %v3511 = vunpack.c.l.b16 %v1092
        %v3512 = vunpack.c.l.b16 %v1093
        %v3513 = vunpack.c.l.b16 %v1094
        %v3514 = vunpack.c.l.b16 %v1095
        %v3515 = vunpack.c.l.b16 %v1096
        %v3516 = vunpack.c.l.b16 %v1097
        %v3517 = vunpack.c.l.b16 %v1098
        %v3518 = vunpack.c.l.b16 %v1099
        %v3519 = vunpack.c.l.b16 %v1100
        %v3520 = vunpack.c.l.b16 %v1101
        %v3521 = vunpack.c.l.b16 %v1102
        %v3522 = vunpack.c.l.b16 %v1103
        %v3523 = vunpack.c.l.b16 %v1104
        %v3524 = vunpack.c.l.b16 %v1105
        %v3525 = vunpack.c.l.b16 %v1106
        %v3526 = vunpack.c.l.b16 %v1107
        %v3527 = vunpack.c.l.b16 %v1108
        %v3528 = vunpack.c.l.b16 %v1109
        %v3529 = vunpack.c.l.b16 %v1110
        %v3530 = vunpack.c.l.b16 %v1111
        %v3531 = vunpack.c.l.b16 %v1112
        %v3532 = vunpack.c.l.b16 %v1113
        %v3533 = vunpack.c.l.b16 %v1114
        %v3534 = vunpack.c.l.b16 %v1115
        %v3535 = vunpack.c.l.b16 %v1116
        %v3536 = vunpack.c.l.b16 %v1117
        %v3537 = vunpack.c.l.b16 %v1118
        %v3538 = vunpack.c.l.b16 %v1119
        %v3539 = vunpack.c.l.b16 %v1120
        %v3540 = vunpack.c.l.b16 %v1121
        %v3541 = vunpack.c.l.b16 %v1122
        %v3542 = vunpack.c.l.b16 %v1123
        %v3543 = vunpack.c.l.b16 %v1124
        %v3544 = vunpack.c.l.b16 %v1125
        %v3545 = vunpack.c.l.b16 %v1126
        %v3546 = vunpack.c.l.b16 %v1127
        %v3547 = vunpack.c.l.b16 %v1128
        %v3548 = vunpack.c.l.b16 %v1129
        %v3549 = vunpack.c.l.b16 %v1130
        %v3550 = vunpack.c.l.b16 %v1131
        %v3551 = vunpack.c.l.b16 %v1132
        %v3552 = vunpack.c.l.b16 %v1133
        %v3553 = vunpack.c.l.b16 %v1134
        %v3554 = vunpack.c.l.b16 %v1135
        %v3555 = vunpack.c.l.b16 %v1136
        %v3556 = vunpack.c.l.b16 %v1137
        %v3557 = vunpack.c.l.b16 %v1138
        %v3558 = vunpack.c.l.b16 %v1139
        %v3559 = vunpack.c.l.b16 %v1140
        %v3560 = vunpack.c.l.b16 %v1141
        %v3561 = vunpack.c.l.b16 %v1142
        %v3562 = vunpack.c.l.b16 %v1143
        %v3563 = vunpack.c.l.b16 %v1144
        %v3564 = vunpack.c.l.b16 %v1145
        %v3565 = vunpack.c.l.b16 %v1146
        %v3566 = vunpack.c.l.b16 %v1147
        %v3567 = vunpack.c.l.b16 %v1148
        %v3568 = vunpack.c.l.b16 %v1149
        %v3569 = vunpack.c.l.b16 %v1150
        %v3570 = vunpack.c.l.b16 %v1151
        %v3571 = vunpack.c.l.b16 %v1152
        %v3572 = vunpack.c.l.b16 %v1153
        %v3573 = vunpack.c.l.b16 %v1154
        %v3574 = vunpack.c.l.b16 %v1155
        %v3575 = vunpack.c.l.b16 %v1156
        %v3576 = vunpack.c.l.b16 %v1157
        %v3577 = vunpack.c.l.b16 %v1158
        %v3578 = vunpack.c.l.b16 %v1159
        %v3579 = vunpack.c.l.b16 %v1160
        %v3580 = vunpack.c.l.b16 %v1161
        %v3581 = vunpack.c.l.b16 %v1162
        %v3582 = vunpack.c.l.b16 %v1163
        %v3583 = vunpack.c.l.b16 %v1164
        %v3584 = vunpack.c.l.b16 %v1165
        %v3585 = vunpack.c.l.b16 %v1166
        %v3586 = vunpack.c.l.b16 %v1167
        %v3587 = vunpack.c.l.b16 %v1168
        %v3588 = vunpack.c.l.b16 %v1169
        %v3589 = vunpack.c.l.b16 %v1170
        %v3590 = vunpack.c.l.b16 %v1171
        %v3591 = vunpack.c.l.b16 %v1172
        %v3592 = vunpack.c.l.b16 %v1173
        %v3593 = vunpack.c.l.b16 %v1174
        %v3594 = vunpack.c.l.b16 %v1175
        %v3595 = vunpack.c.l.b16 %v1176
        %v3596 = vunpack.c.l.b16 %v1177
        %v3597 = vunpack.c.l.b16 %v1178
        %v3598 = vunpack.c.l.b16 %v1179
        %v3599 = vunpack.c.l.b16 %v1180
        %v3600 = vunpack.c.l.b16 %v1181
        %v3601 = vunpack.c.l.b16 %v1182
        %v3602 = vunpack.c.l.b16 %v1183
        %v3603 = vunpack.c.l.b16 %v1184
        %v3604 = vunpack.c.l.b16 %v1185
        %v3605 = vunpack.c.l.b16 %v1186
        %v3606 = vunpack.c.l.b16 %v1187
        %v3607 = vunpack.c.l.b16 %v1188
        %v3608 = vunpack.c.l.b16 %v1189
        %v3609 = vunpack.c.l.b16 %v1190
        %v3610 = vunpack.c.l.b16 %v1191
        %v3611 = vunpack.c.l.b16 %v1192
        %v3612 = vunpack.c.l.b16 %v1193
        %v3613 = vunpack.c.l.b16 %v1194
        %v3614 = vunpack.c.l.b16 %v1195
        %v3615 = vunpack.c.l.b16 %v1196
        %v3616 = vunpack.c.l.b16 %v1197
        %v3617 = vunpack.c.l.b16 %v1198
        %v3618 = vunpack.c.l.b16 %v1199
        %v3619 = vunpack.c.l.b16 %v1200
        %v3620 = vunpack.c.l.b16 %v1201
        %v3621 = vunpack.c.l.b16 %v1202
        %v3622 = vunpack.c.l.b16 %v1203
        %v3623 = vunpack.c.l.b16 %v1204
        %v3624 = vunpack.c.l.b16 %v1205
        %v3625 = vunpack.c.l.b16 %v1206
        %v3626 = vunpack.c.l.b16 %v1207
        %v3627 = vunpack.c.l.b16 %v1208
        %v3628 = vunpack.c.l.b16 %v1209
        %v3629 = vunpack.c.l.b16 %v1210
        %v3630 = vunpack.c.l.b16 %v1211
        %v3631 = vunpack.c.l.b16 %v1212
        %v3632 = vunpack.c.l.b16 %v1213
        %v3633 = vunpack.c.l.b16 %v1214
        %v3634 = vunpack.c.l.b16 %v1215
        %v3635 = vunpack.c.l.b16 %v1216
        %v3636 = vunpack.c.l.b16 %v1217
        %v3637 = vunpack.c.l.b16 %v1218
        %v3638 = vunpack.c.l.b16 %v1219
        %v3639 = vunpack.c.l.b16 %v1220
        %v3640 = vunpack.c.l.b16 %v1221
        %v3641 = vunpack.c.l.b16 %v1222
        %v3642 = vunpack.c.l.b16 %v1223
        %v3643 = vunpack.c.l.b16 %v1224
        %v3644 = vunpack.c.l.b16 %v1225
        %v3645 = vunpack.c.l.b16 %v1226
        %v3646 = vunpack.c.l.b16 %v1227
        %v3647 = vunpack.c.l.b16 %v1228
        %v3648 = vunpack.c.l.b16 %v1229
        %v3649 = vunpack.c.l.b16 %v1230
        %v3650 = vunpack.c.l.b16 %v1231
        %v3651 = vunpack.c.l.b16 %v1232
        %v3652 = vunpack.c.l.b16 %v1233
        %v3653 = vunpack.c.l.b16 %v1234
        %v3654 = vunpack.c.l.b16 %v1235
        %v3655 = vunpack.c.l.b16 %v1236
        %v3656 = vunpack.c.l.b16 %v1237
        %v3657 = vunpack.c.l.b16 %v1238
        %v3658 = vunpack.c.l.b16 %v1239
        %v3659 = vunpack.c.l.b16 %v1240
        %v3660 = vunpack.c.l.b16 %v1241
        %v3661 = vunpack.c.l.b16 %v1242
        %v3662 = vunpack.c.l.b16 %v1243
        %v3663 = vunpack.c.l.b16 %v1244
        %v3664 = vunpack.c.l.b16 %v1245
        %v3665 = vunpack.c.l.b16 %v1246
        %v3666 = vunpack.c.l.b16 %v1247
        %v3667 = vunpack.c.l.b16 %v1248
        %v3668 = vunpack.c.l.b16 %v1249
        %v3669 = vunpack.c.l.b16 %v1250
        %v3670 = vunpack.c.l.b16 %v1251
        %v3671 = vunpack.c.l.b16 %v1252
        %v3672 = vunpack.c.l.b16 %v1253
        %v3673 = vunpack.c.l.b16 %v1254
        %v3674 = vunpack.c.l.b16 %v1255
        %v3675 = vunpack.c.l.b16 %v1256
        %v3676 = vunpack.c.l.b16 %v1257
        %v3677 = vunpack.c.l.b16 %v1258
        %v3678 = vunpack.c.l.b16 %v1259
        %v3679 = vunpack.c.l.b16 %v1260
        %v3680 = vunpack.c.l.b16 %v1261
        %v3681 = vunpack.c.l.b16 %v1262
        %v3682 = vunpack.c.l.b16 %v1263
        %v3683 = vunpack.c.l.b16 %v1264
        %v3684 = vunpack.c.l.b16 %v1265
        %v3685 = vunpack.c.l.b16 %v1266
        %v3686 = vunpack.c.l.b16 %v1267
        %v3687 = vpack.c.b16 %v2708, %v2707
        %v3688 = vpack.c.b16 %v2710, %v2709
        %v3689 = vpack.c.b16 %v2712, %v2711
        %v3690 = vpack.c.b16 %v2714, %v2713
        %v3691 = vpack.c.b16 %v2716, %v2715
        %v3692 = vpack.c.b16 %v2718, %v2717
        %v3693 = vpack.c.b16 %v2720, %v2719
        %v3694 = vpack.c.b16 %v2722, %v2721
        %v3695 = vpack.c.b16 %v2724, %v2723
        %v3696 = vpack.c.b16 %v2726, %v2725
        %v3697 = vpack.c.b16 %v2728, %v2727
        %v3698 = vpack.c.b16 %v2730, %v2729
        %v3699 = vpack.c.b16 %v2732, %v2731
        %v3700 = vpack.c.b16 %v2734, %v2733
        %v3701 = vpack.c.b16 %v2736, %v2735
        %v3702 = vpack.c.b16 %v2738, %v2737
        %v3703 = vpack.c.b16 %v2740, %v2739
        %v3704 = vpack.c.b16 %v2742, %v2741
        %v3705 = vpack.c.b16 %v2744, %v2743
        %v3706 = vpack.c.b16 %v2746, %v2745
        %v3707 = vpack.c.b16 %v2748, %v2747
        %v3708 = vpack.c.b16 %v2750, %v2749
        %v3709 = vpack.c.b16 %v2752, %v2751
        %v3710 = vpack.c.b16 %v2754, %v2753
        %v3711 = vpack.c.b16 %v2756, %v2755
        %v3712 = vpack.c.b16 %v2758, %v2757
        %v3713 = vpack.c.b16 %v2760, %v2759
        %v3714 = vpack.c.b16 %v2762, %v2761
        %v3715 = vpack.c.b16 %v2764, %v2763
        %v3716 = vpack.c.b16 %v2766, %v2765
        %v3717 = vpack.c.b16 %v2768, %v2767
        %v3718 = vpack.c.b16 %v2770, %v2769
        %v3719 = vpack.c.b16 %v2772, %v2771
        %v3720 = vpack.c.b16 %v2774, %v2773
        %v3721 = vpack.c.b16 %v2776, %v2775
        %v3722 = vpack.c.b16 %v2778, %v2777
        %v3723 = vpack.c.b16 %v2780, %v2779
        %v3724 = vpack.c.b16 %v2782, %v2781
        %v3725 = vpack.c.b16 %v2784, %v2783
        %v3726 = vpack.c.b16 %v2786, %v2785
        %v3727 = vpack.c.b16 %v2788, %v2787
        %v3728 = vpack.c.b16 %v2790, %v2789
        %v3729 = vpack.c.b16 %v2792, %v2791
        %v3730 = vpack.c.b16 %v2794, %v2793
        %v3731 = vpack.c.b16 %v2796, %v2795
        %v3732 = vpack.c.b16 %v2798, %v2797
        %v3733 = vpack.c.b16 %v2800, %v2799
        %v3734 = vpack.c.b16 %v2802, %v2801
        %v3735 = vpack.c.b16 %v2804, %v2803
        %v3736 = vpack.c.b16 %v2806, %v2805
        %v3737 = vpack.c.b16 %v2808, %v2807
        %v3738 = vpack.c.b16 %v2810, %v2809
        %v3739 = vpack.c.b16 %v2812, %v2811
        %v3740 = vpack.c.b16 %v2814, %v2813
        %v3741 = vpack.c.b16 %v2816, %v2815
        %v3742 = vpack.c.b16 %v2818, %v2817
        %v3743 = vpack.c.b16 %v2820, %v2819
        %v3744 = vpack.c.b16 %v2822, %v2821
        %v3745 = vpack.c.b16 %v2824, %v2823
        %v3746 = vpack.c.b16 %v2826, %v2825
        %v3747 = vpack.c.b16 %v2828, %v2827
        %v3748 = vpack.c.b16 %v2830, %v2829
        %v3749 = vpack.c.b16 %v2832, %v2831
        %v3750 = vpack.c.b16 %v2834, %v2833
        %v3751 = vpack.c.b16 %v2836, %v2835
        %v3752 = vpack.c.b16 %v2838, %v2837
        %v3753 = vpack.c.b16 %v2840, %v2839
        %v3754 = vpack.c.b16 %v2842, %v2841
        %v3755 = vpack.c.b16 %v2844, %v2843
        %v3756 = vpack.c.b16 %v2846, %v2845
        %v3757 = vpack.c.b16 %v2848, %v2847
        %v3758 = vpack.c.b16 %v2850, %v2849
        %v3759 = vpack.c.b16 %v2852, %v2851
        %v3760 = vpack.c.b16 %v2854, %v2853
        %v3761 = vpack.c.b16 %v2856, %v2855
        %v3762 = vpack.c.b16 %v2858, %v2857
        %v3763 = vpack.c.b16 %v2860, %v2859
        %v3764 = vpack.c.b16 %v2862, %v2861
        %v3765 = vpack.c.b16 %v2864, %v2863
        %v3766 = vpack.c.b16 %v2866, %v2865
        %v3767 = vpack.c.b16 %v2868, %v2867
        %v3768 = vpack.c.b16 %v2870, %v2869
        %v3769 = vpack.c.b16 %v2872, %v2871
        %v3770 = vpack.c.b16 %v2874, %v2873
        %v3771 = vpack.c.b16 %v2876, %v2875
        %v3772 = vpack.c.b16 %v2878, %v2877
        %v3773 = vpack.c.b16 %v2880, %v2879
        %v3774 = vpack.c.b16 %v2882, %v2881
        %v3775 = vpack.c.b16 %v2884, %v2883
        %v3776 = vpack.c.b16 %v2886, %v2885
        %v3777 = vpack.c.b16 %v2888, %v2887
        %v3778 = vpack.c.b16 %v2890, %v2889
        %v3779 = vpack.c.b16 %v2892, %v2891
        %v3780 = vpack.c.b16 %v2894, %v2893
        %v3781 = vpack.c.b16 %v2896, %v2895
        %v3782 = vpack.c.b16 %v2898, %v2897
        %v3783 = vpack.c.b16 %v2900, %v2899
        %v3784 = vpack.c.b16 %v2902, %v2901
        %v3785 = vpack.c.b16 %v2904, %v2903
        %v3786 = vpack.c.b16 %v2906, %v2905
        %v3787 = vpack.c.b16 %v2908, %v2907
        %v3788 = vpack.c.b16 %v2910, %v2909
        %v3789 = vpack.c.b16 %v2912, %v2911
        %v3790 = vpack.c.b16 %v2914, %v2913
        %v3791 = vpack.c.b16 %v2916, %v2915
        %v3792 = vpack.c.b16 %v2918, %v2917
        %v3793 = vpack.c.b16 %v2920, %v2919
        %v3794 = vpack.c.b16 %v2922, %v2921
        %v3795 = vpack.c.b16 %v2924, %v2923
        %v3796 = vpack.c.b16 %v2926, %v2925
        %v3797 = vpack.c.b16 %v2928, %v2927
        %v3798 = vpack.c.b16 %v2930, %v2929
        %v3799 = vpack.c.b16 %v2932, %v2931
        %v3800 = vpack.c.b16 %v2934, %v2933
        %v3801 = vpack.c.b16 %v2936, %v2935
        %v3802 = vpack.c.b16 %v2938, %v2937
        %v3803 = vpack.c.b16 %v2940, %v2939
        %v3804 = vpack.c.b16 %v2942, %v2941
        %v3805 = vpack.c.b16 %v2944, %v2943
        %v3806 = vpack.c.b16 %v2946, %v2945
        %v3807 = vpack.c.b16 %v2948, %v2947
        %v3808 = vpack.c.b16 %v2950, %v2949
        %v3809 = vpack.c.b16 %v2952, %v2951
        %v3810 = vpack.c.b16 %v2954, %v2953
        %v3811 = vpack.c.b16 %v2956, %v2955
        %v3812 = vpack.c.b16 %v2958, %v2957
        %v3813 = vpack.c.b16 %v2960, %v2959
        %v3814 = vpack.c.b16 %v2962, %v2961
        %v3815 = vpack.c.b16 %v2964, %v2963
        %v3816 = vpack.c.b16 %v2966, %v2965
        %v3817 = vpack.c.b16 %v2968, %v2967
        %v3818 = vpack.c.b16 %v2970, %v2969
        %v3819 = vpack.c.b16 %v2972, %v2971
        %v3820 = vpack.c.b16 %v2974, %v2973
        %v3821 = vpack.c.b16 %v2976, %v2975
        %v3822 = vpack.c.b16 %v2978, %v2977
        %v3823 = vpack.c.b16 %v2980, %v2979
        %v3824 = vpack.c.b16 %v2982, %v2981
        %v3825 = vpack.c.b16 %v2984, %v2983
        %v3826 = vpack.c.b16 %v2986, %v2985
        %v3827 = vpack.c.b16 %v2988, %v2987
        %v3828 = vpack.c.b16 %v2990, %v2989
        %v3829 = vpack.c.b16 %v2992, %v2991
        %v3830 = vpack.c.b16 %v2994, %v2993
        %v3831 = vpack.c.b16 %v2996, %v2995
        %v3832 = vpack.c.b16 %v2998, %v2997
        %v3833 = vpack.c.b16 %v3000, %v2999
        %v3834 = vpack.c.b16 %v3002, %v3001
        %v3835 = vpack.c.b16 %v3004, %v3003
        %v3836 = vpack.c.b16 %v3006, %v3005
        %v3837 = vpack.c.b16 %v3008, %v3007
        %v3838 = vpack.c.b16 %v3010, %v3009
        %v3839 = vpack.c.b16 %v3012, %v3011
        %v3840 = vpack.c.b16 %v3014, %v3013
        %v3841 = vpack.c.b16 %v3016, %v3015
        %v3842 = vpack.c.b16 %v3018, %v3017
        %v3843 = vpack.c.b16 %v3020, %v3019
        %v3844 = vpack.c.b16 %v3022, %v3021
        %v3845 = vpack.c.b16 %v3024, %v3023
        %v3846 = vpack.c.b16 %v3026, %v3025
        %v3847 = vpack.c.b16 %v3028, %v3027
        %v3848 = vpack.c.b16 %v3030, %v3029
        %v3849 = vpack.c.b16 %v3032, %v3031
        %v3850 = vpack.c.b16 %v3034, %v3033
        %v3851 = vpack.c.b16 %v3036, %v3035
        %v3852 = vpack.c.b16 %v3038, %v3037
        %v3853 = vpack.c.b16 %v3040, %v3039
        %v3854 = vpack.c.b16 %v3042, %v3041
        %v3855 = vpack.c.b16 %v3044, %v3043
        %v3856 = vpack.c.b16 %v3046, %v3045
        %v3857 = vpack.c.b16 %v3048, %v3047
        %v3858 = vpack.c.b16 %v3050, %v3049
        %v3859 = vpack.c.b16 %v3052, %v3051
        %v3860 = vpack.c.b16 %v3054, %v3053
        %v3861 = vpack.c.b16 %v3056, %v3055
        %v3862 = vpack.c.b16 %v3058, %v3057
        %v3863 = vpack.c.b16 %v3060, %v3059
        %v3864 = vpack.c.b16 %v3062, %v3061
        %v3865 = vpack.c.b16 %v3064, %v3063
        %v3866 = vpack.c.b16 %v3066, %v3065
        %v3867 = vpack.c.b16 %v3068, %v3067
        %v3868 = vpack.c.b16 %v3070, %v3069
        %v3869 = vpack.c.b16 %v3072, %v3071
        %v3870 = vpack.c.b16 %v3074, %v3073
        %v3871 = vpack.c.b16 %v3076, %v3075
        %v3872 = vpack.c.b16 %v3078, %v3077
        %v3873 = vpack.c.b16 %v3080, %v3079
        %v3874 = vpack.c.b16 %v3082, %v3081
        %v3875 = vpack.c.b16 %v3084, %v3083
        %v3876 = vpack.c.b16 %v3086, %v3085
        %v3877 = vpack.c.b16 %v3088, %v3087
        %v3878 = vpack.c.b16 %v3090, %v3089
        %v3879 = vpack.c.b16 %v3092, %v3091
        %v3880 = vpack.c.b16 %v3094, %v3093
        %v3881 = vpack.c.b16 %v3096, %v3095
        %v3882 = vpack.c.b16 %v3098, %v3097
        %v3883 = vpack.c.b16 %v3100, %v3099
        %v3884 = vpack.c.b16 %v3102, %v3101
        %v3885 = vpack.c.b16 %v3104, %v3103
        %v3886 = vpack.c.b16 %v3106, %v3105
        %v3887 = vpack.c.b16 %v3108, %v3107
        %v3888 = vpack.c.b16 %v3110, %v3109
        %v3889 = vpack.c.b16 %v3112, %v3111
        %v3890 = vpack.c.b16 %v3114, %v3113
        %v3891 = vpack.c.b16 %v3116, %v3115
        %v3892 = vpack.c.b16 %v3118, %v3117
        %v3893 = vpack.c.b16 %v3120, %v3119
        %v3894 = vpack.c.b16 %v3122, %v3121
        %v3895 = vpack.c.b16 %v3124, %v3123
        %v3896 = vpack.c.b16 %v3126, %v3125
        %v3897 = vpack.c.b16 %v3128, %v3127
        %v3898 = vpack.c.b16 %v3130, %v3129
        %v3899 = vpack.c.b16 %v3132, %v3131
        %v3900 = vpack.c.b16 %v3134, %v3133
        %v3901 = vpack.c.b16 %v3136, %v3135
        %v3902 = vpack.c.b16 %v3138, %v3137
        %v3903 = vpack.c.b16 %v3140, %v3139
        %v3904 = vpack.c.b16 %v3142, %v3141
        %v3905 = vpack.c.b16 %v3144, %v3143
        %v3906 = vpack.c.b16 %v3146, %v3145
        %v3907 = vpack.c.b16 %v3148, %v3147
        %v3908 = vpack.c.b16 %v3150, %v3149
        %v3909 = vpack.c.b16 %v3152, %v3151
        %v3910 = vpack.c.b16 %v3154, %v3153
        %v3911 = vpack.c.b16 %v3156, %v3155
        %v3912 = vpack.c.b16 %v3158, %v3157
        %v3913 = vpack.c.b16 %v3160, %v3159
        %v3914 = vpack.c.b16 %v3162, %v3161
        %v3915 = vpack.c.b16 %v3164, %v3163
        %v3916 = vpack.c.b16 %v3166, %v3165
        %v3917 = vpack.c.b16 %v3168, %v3167
        %v3918 = vpack.c.b16 %v3170, %v3169
        %v3919 = vpack.c.b16 %v3172, %v3171
        %v3920 = vpack.c.b16 %v3174, %v3173
        %v3921 = vpack.c.b16 %v3176, %v3175
        %v3922 = vpack.c.b16 %v3178, %v3177
        %v3923 = vpack.c.b16 %v3180, %v3179
        %v3924 = vpack.c.b16 %v3182, %v3181
        %v3925 = vpack.c.b16 %v3184, %v3183
        %v3926 = vpack.c.b16 %v3186, %v3185
        %v3927 = vpack.c.b16 %v3188, %v3187
        %v3928 = vpack.c.b16 %v3190, %v3189
        %v3929 = vpack.c.b16 %v3192, %v3191
        %v3930 = vpack.c.b16 %v3194, %v3193
        %v3931 = vpack.c.b16 %v3196, %v3195
        %v3932 = vpack.c.b16 %v3198, %v3197
        %v3933 = vpack.c.b16 %v3200, %v3199
        %v3934 = vpack.c.b16 %v3202, %v3201
        %v3935 = vpack.c.b16 %v3204, %v3203
        %v3936 = vpack.c.b16 %v3206, %v3205
        %v3937 = vpack.c.b16 %v3208, %v3207
        %v3938 = vpack.c.b16 %v3210, %v3209
        %v3939 = vpack.c.b16 %v3212, %v3211
        %v3940 = vpack.c.b16 %v3214, %v3213
        %v3941 = vpack.c.b16 %v3216, %v3215
        %v3942 = vpack.c.b16 %v3218, %v3217
        %v3943 = vpack.c.b16 %v3220, %v3219
        %v3944 = vpack.c.b16 %v3222, %v3221
        %v3945 = vpack.c.b16 %v3224, %v3223
        %v3946 = vpack.c.b16 %v3226, %v3225
        %v3947 = vpack.c.b16 %v3228, %v3227
        %v3948 = vpack.c.b16 %v3230, %v3229
        %v3949 = vpack.c.b16 %v3232, %v3231
        %v3950 = vpack.c.b16 %v3234, %v3233
        %v3951 = vpack.c.b16 %v3236, %v3235
        %v3952 = vpack.c.b16 %v3238, %v3237
        %v3953 = vpack.c.b16 %v3240, %v3239
        %v3954 = vpack.c.b16 %v3242, %v3241
        %v3955 = vpack.c.b16 %v3244, %v3243
        %v3956 = vpack.c.b16 %v3246, %v3245
        %v3957 = vpack.c.b16 %v3248, %v3247
        %v3958 = vpack.c.b16 %v3250, %v3249
        %v3959 = vpack.c.b16 %v3252, %v3251
        %v3960 = vpack.c.b16 %v3254, %v3253
        %v3961 = vpack.c.b16 %v3256, %v3255
        %v3962 = vpack.c.b16 %v3258, %v3257
        %v3963 = vpack.c.b16 %v3260, %v3259
        %v3964 = vpack.c.b16 %v3262, %v3261
        %v3965 = vpack.c.b16 %v3264, %v3263
        %v3966 = vpack.c.b16 %v3266, %v3265
        %v3967 = vpack.c.b16 %v3268, %v3267
        %v3968 = vpack.c.b16 %v3270, %v3269
        %v3969 = vpack.c.b16 %v3272, %v3271
        %v3970 = vpack.c.b16 %v3274, %v3273
        %v3971 = vpack.c.b16 %v3276, %v3275
        %v3972 = vpack.c.b16 %v3278, %v3277
        %v3973 = vpack.c.b16 %v3280, %v3279
        %v3974 = vpack.c.b16 %v3282, %v3281
        %v3975 = vpack.c.b16 %v3284, %v3283
        %v3976 = vpack.c.b16 %v3286, %v3285
        %v3977 = vpack.c.b16 %v3288, %v3287
        %v3978 = vpack.c.b16 %v3290, %v3289
        %v3979 = vpack.c.b16 %v3292, %v3291
        %v3980 = vpack.c.b16 %v3294, %v3293
        %v3981 = vpack.c.b16 %v3296, %v3295
        %v3982 = vpack.c.b16 %v3298, %v3297
        %v3983 = vpack.c.b16 %v3300, %v3299
        %v3984 = vpack.c.b16 %v3302, %v3301
        %v3985 = vpack.c.b16 %v3304, %v3303
        %v3986 = vpack.c.b16 %v3306, %v3305
        %v3987 = vpack.c.b16 %v3308, %v3307
        %v3988 = vpack.c.b16 %v3310, %v3309
        %v3989 = vpack.c.b16 %v3312, %v3311
        %v3990 = vpack.c.b16 %v3314, %v3313
        %v3991 = vpack.c.b16 %v3316, %v3315
        %v3992 = vpack.c.b16 %v3318, %v3317
        %v3993 = vpack.c.b16 %v3320, %v3319
        %v3994 = vpack.c.b16 %v3322, %v3321
        %v3995 = vpack.c.b16 %v3324, %v3323
        %v3996 = vpack.c.b16 %v3326, %v3325
        %v3997 = vpack.c.b16 %v3328, %v3327
        %v3998 = vpack.c.b16 %v3330, %v3329
        %v3999 = vpack.c.b16 %v3332, %v3331
        %v4000 = vpack.c.b16 %v3334, %v3333
        %v4001 = vpack.c.b16 %v3336, %v3335
        %v4002 = vpack.c.b16 %v3338, %v3337
        %v4003 = vpack.c.b16 %v3340, %v3339
        %v4004 = vpack.c.b16 %v3342, %v3341
        %v4005 = vpack.c.b16 %v3344, %v3343
        %v4006 = vpack.c.b16 %v3346, %v3345
        %v4007 = vpack.c.b16 %v3348, %v3347
        %v4008 = vpack.c.b16 %v3350, %v3349
        %v4009 = vpack.c.b16 %v3352, %v3351
        %v4010 = vpack.c.b16 %v3354, %v3353
        %v4011 = vpack.c.b16 %v3356, %v3355
        %v4012 = vpack.c.b16 %v3358, %v3357
        %v4013 = vpack.c.b16 %v3360, %v3359
        %v4014 = vpack.c.b16 %v3362, %v3361
        %v4015 = vpack.c.b16 %v3364, %v3363
        %v4016 = vpack.c.b16 %v3366, %v3365
        %v4017 = vpack.c.b16 %v3368, %v3367
        %v4018 = vpack.c.b16 %v3370, %v3369
        %v4019 = vpack.c.b16 %v3372, %v3371
        %v4020 = vpack.c.b16 %v3374, %v3373
        %v4021 = vpack.c.b16 %v3376, %v3375
        %v4022 = vpack.c.b16 %v3378, %v3377
        %v4023 = vpack.c.b16 %v3380, %v3379
        %v4024 = vpack.c.b16 %v3382, %v3381
        %v4025 = vpack.c.b16 %v3384, %v3383
        %v4026 = vpack.c.b16 %v3386, %v3385
        %v4027 = vpack.c.b16 %v3388, %v3387
        %v4028 = vpack.c.b16 %v3390, %v3389
        %v4029 = vpack.c.b16 %v3392, %v3391
        %v4030 = vpack.c.b16 %v3394, %v3393
        %v4031 = vpack.c.b16 %v3396, %v3395
        %v4032 = vpack.c.b16 %v3398, %v3397
        %v4033 = vpack.c.b16 %v3400, %v3399
        %v4034 = vpack.c.b16 %v3402, %v3401
        %v4035 = vpack.c.b16 %v3404, %v3403
        %v4036 = vpack.c.b16 %v3406, %v3405
        %v4037 = vpack.c.b16 %v3408, %v3407
        %v4038 = vpack.c.b16 %v3410, %v3409
        %v4039 = vpack.c.b16 %v3412, %v3411
        %v4040 = vpack.c.b16 %v3414, %v3413
        %v4041 = vpack.c.b16 %v3416, %v3415
        %v4042 = vpack.c.b16 %v3418, %v3417
        %v4043 = vpack.c.b16 %v3420, %v3419
        %v4044 = vpack.c.b16 %v3422, %v3421
        %v4045 = vpack.c.b16 %v3424, %v3423
        %v4046 = vpack.c.b16 %v3426, %v3425
        %v4047 = vpack.c.b16 %v3428, %v3427
        %v4048 = vpack.c.b16 %v3430, %v3429
        %v4049 = vpack.c.b16 %v3432, %v3431
        %v4050 = vpack.c.b16 %v3434, %v3433
        %v4051 = vpack.c.b16 %v3436, %v3435
        %v4052 = vpack.c.b16 %v3438, %v3437
        %v4053 = vpack.c.b16 %v3440, %v3439
        %v4054 = vpack.c.b16 %v3442, %v3441
        %v4055 = vpack.c.b16 %v3444, %v3443
        %v4056 = vpack.c.b16 %v3446, %v3445
        %v4057 = vpack.c.b16 %v3448, %v3447
        %v4058 = vpack.c.b16 %v3450, %v3449
        %v4059 = vpack.c.b16 %v3452, %v3451
        %v4060 = vpack.c.b16 %v3454, %v3453
        %v4061 = vpack.c.b16 %v3456, %v3455
        %v4062 = vpack.c.b16 %v3458, %v3457
        %v4063 = vpack.c.b16 %v3460, %v3459
        %v4064 = vpack.c.b16 %v3462, %v3461
        %v4065 = vpack.c.b16 %v3464, %v3463
        %v4066 = vpack.c.b16 %v3466, %v3465
        %v4067 = vpack.c.b16 %v3468, %v3467
        %v4068 = vpack.c.b16 %v3470, %v3469
        %v4069 = vpack.c.b16 %v3472, %v3471
        %v4070 = vpack.c.b16 %v3474, %v3473
        %v4071 = vpack.c.b16 %v3476, %v3475
        %v4072 = vpack.c.b16 %v3478, %v3477
        %v4073 = vpack.c.b16 %v3480, %v3479
        %v4074 = vpack.c.b16 %v3482, %v3481
        %v4075 = vpack.c.b16 %v3484, %v3483
        %v4076 = vpack.c.b16 %v3486, %v3485
        %v4077 = vpack.c.b16 %v3488, %v3487
        %v4078 = vpack.c.b16 %v3490, %v3489
        %v4079 = vpack.c.b16 %v3492, %v3491
        %v4080 = vpack.c.b16 %v3494, %v3493
        %v4081 = vpack.c.b16 %v3496, %v3495
        %v4082 = vpack.c.b16 %v3498, %v3497
        %v4083 = vpack.c.b16 %v3500, %v3499
        %v4084 = vpack.c.b16 %v3502, %v3501
        %v4085 = vpack.c.b16 %v3504, %v3503
        %v4086 = vpack.c.b16 %v3506, %v3505
        %v4087 = vpack.c.b16 %v3508, %v3507
        %v4088 = vpack.c.b16 %v3510, %v3509
        %v4089 = vpack.c.b16 %v3512, %v3511
        %v4090 = vpack.c.b16 %v3514, %v3513
        %v4091 = vpack.c.b16 %v3516, %v3515
        %v4092 = vpack.c.b16 %v3518, %v3517
        %v4093 = vpack.c.b16 %v3520, %v3519
        %v4094 = vpack.c.b16 %v3522, %v3521
        %v4095 = vpack.c.b16 %v3524, %v3523
        %v4096 = vpack.c.b16 %v3526, %v3525
        %v4097 = vpack.c.b16 %v3528, %v3527
        %v4098 = vpack.c.b16 %v3530, %v3529
        %v4099 = vpack.c.b16 %v3532, %v3531
        %v4100 = vpack.c.b16 %v3534, %v3533
        %v4101 = vpack.c.b16 %v3536, %v3535
        %v4102 = vpack.c.b16 %v3538, %v3537
        %v4103 = vpack.c.b16 %v3540, %v3539
        %v4104 = vpack.c.b16 %v3542, %v3541
        %v4105 = vpack.c.b16 %v3544, %v3543
        %v4106 = vpack.c.b16 %v3546, %v3545
        %v4107 = vpack.c.b16 %v3548, %v3547
        %v4108 = vpack.c.b16 %v3550, %v3549
        %v4109 = vpack.c.b16 %v3552, %v3551
        %v4110 = vpack.c.b16 %v3554, %v3553
        %v4111 = vpack.c.b16 %v3556, %v3555
        %v4112 = vpack.c.b16 %v3558, %v3557
        %v4113 = vpack.c.b16 %v3560, %v3559
        %v4114 = vpack.c.b16 %v3562, %v3561
        %v4115 = vpack.c.b16 %v3564, %v3563
        %v4116 = vpack.c.b16 %v3566, %v3565
        %v4117 = vpack.c.b16 %v3568, %v3567
        %v4118 = vpack.c.b16 %v3570, %v3569
        %v4119 = vpack.c.b16 %v3572, %v3571
        %v4120 = vpack.c.b16 %v3574, %v3573
        %v4121 = vpack.c.b16 %v3576, %v3575
        %v4122 = vpack.c.b16 %v3578, %v3577
        %v4123 = vpack.c.b16 %v3580, %v3579
        %v4124 = vpack.c.b16 %v3582, %v3581
        %v4125 = vpack.c.b16 %v3584, %v3583
        %v4126 = vpack.c.b16 %v3586, %v3585
        %v4127 = vpack.c.b16 %v3588, %v3587
        %v4128 = vpack.c.b16 %v3590, %v3589
        %v4129 = vpack.c.b16 %v3592, %v3591
        %v4130 = vpack.c.b16 %v3594, %v3593
        %v4131 = vpack.c.b16 %v3596, %v3595
        %v4132 = vpack.c.b16 %v3598, %v3597
        %v4133 = vpack.c.b16 %v3600, %v3599
        %v4134 = vpack.c.b16 %v3602, %v3601
        %v4135 = vpack.c.b16 %v3604, %v3603
        %v4136 = vpack.c.b16 %v3606, %v3605
        %v4137 = vpack.c.b16 %v3608, %v3607
        %v4138 = vpack.c.b16 %v3610, %v3609
        %v4139 = vpack.c.b16 %v3612, %v3611
        %v4140 = vpack.c.b16 %v3614, %v3613
        %v4141 = vpack.c.b16 %v3616, %v3615
        %v4142 = vpack.c.b16 %v3618, %v3617
        %v4143 = vpack.c.b16 %v3620, %v3619
        %v4144 = vpack.c.b16 %v3622, %v3621
        %v4145 = vpack.c.b16 %v3624, %v3623
        %v4146 = vpack.c.b16 %v3626, %v3625
        %v4147 = vpack.c.b16 %v3628, %v3627
        %v4148 = vpack.c.b16 %v3630, %v3629
        %v4149 = vpack.c.b16 %v3632, %v3631
        %v4150 = vpack.c.b16 %v3634, %v3633
        %v4151 = vpack.c.b16 %v3636, %v3635
        %v4152 = vpack.c.b16 %v3638, %v3637
        %v4153 = vpack.c.b16 %v3640, %v3639
        %v4154 = vpack.c.b16 %v3642, %v3641
        %v4155 = vpack.c.b16 %v3644, %v3643
        %v4156 = vpack.c.b16 %v3646, %v3645
        %v4157 = vpack.c.b16 %v3648, %v3647
        %v4158 = vpack.c.b16 %v3650, %v3649
        %v4159 = vpack.c.b16 %v3652, %v3651
        %v4160 = vpack.c.b16 %v3654, %v3653
        %v4161 = vpack.c.b16 %v3656, %v3655
        %v4162 = vpack.c.b16 %v3658, %v3657
        %v4163 = vpack.c.b16 %v3660, %v3659
        %v4164 = vpack.c.b16 %v3662, %v3661
        %v4165 = vpack.c.b16 %v3664, %v3663
        %v4166 = vpack.c.b16 %v3666, %v3665
        %v4167 = vpack.c.b16 %v3668, %v3667
        %v4168 = vpack.c.b16 %v3670, %v3669
        %v4169 = vpack.c.b16 %v3672, %v3671
        %v4170 = vpack.c.b16 %v3674, %v3673
        %v4171 = vpack.c.b16 %v3676, %v3675
        %v4172 = vpack.c.b16 %v3678, %v3677
        %v4173 = vpack.c.b16 %v3680, %v3679
        %v4174 = vpack.c.b16 %v3682, %v3681
        %v4175 = vpack.c.b16 %v3684, %v3683
        %v4176 = vpack.c.b16 %v3686, %v3685
        %vm4667 = vcmask 261120
        %v4669 = vsel %vm4667, %v1663, 0
        %4671 = vmatprep.subr.bf16.mxu0 0
        %4672 = vmatpush1.bf16.msra.mxu0 %v3694
        %4673 = vmatprep.subr.bf16.mxu0 0
        %4674 = vmatpush1.bf16.msra.mxu0 %v3693
        %4675 = vmatprep.subr.bf16.mxu0 0
        %4676 = vmatpush1.bf16.msra.mxu0 %v3692
        %4677 = vmatprep.subr.bf16.mxu0 0
        %4678 = vmatpush1.bf16.msra.mxu0 %v3691
        %4679 = vmatprep.subr.bf16.mxu0 0
        %4680 = vmatpush1.bf16.msra.mxu0 %v3690
        %4681 = vmatprep.subr.bf16.mxu0 0
        %4682 = vmatpush1.bf16.msra.mxu0 %v3689
        %4683 = vmatprep.subr.bf16.mxu0 0
        %4684 = vmatpush1.bf16.msra.mxu0 %v3688
        %4685 = vmatprep.subr.bf16.mxu0 0
        %4686 = vmatpush1.bf16.msra.mxu0 %v3687
        %4687 = vmatprep.subr.bf16.mxu0 0
        %4688 = vmatpush2.bf16.msra.mxu0 %v3702
        %4689 = vmatprep.subr.bf16.mxu0 0
        %4690 = vmatpush2.bf16.msra.mxu0 %v3701
        %4691 = vmatprep.subr.bf16.mxu0 0
        %4692 = vmatpush2.bf16.msra.mxu0 %v3700
        %4693 = vmatprep.subr.bf16.mxu0 0
        %4694 = vmatpush2.bf16.msra.mxu0 %v3699
        %4695 = vmatprep.subr.bf16.mxu0 0
        %4696 = vmatpush2.bf16.msra.mxu0 %v3698
        %4697 = vmatprep.subr.bf16.mxu0 0
        %4698 = vmatpush2.bf16.msra.mxu0 %v3697
        %4699 = vmatprep.subr.bf16.mxu0 0
        %4700 = vmatpush2.bf16.msra.mxu0 %v3696
        %4701 = vmatprep.subr.bf16.mxu0 0
        %4702 = vmatpush2.bf16.msra.mxu0 %v3695
        %4703 = vmatprep.mubr.bf16.mxu0 %v1313
        %4704 = vmatmul.mubr.bf16.gmra.mxu0 %v1299
        %v4705 = vpop.f32.mrf.mxu0
        %v4706 = vadd.f32 0.0, %v4705
        %v4707 = vpop.f32.mrf.mxu0
        %v4708 = vpop.f32.mrf.mxu0
        %v4709 = vpop.f32.mrf.mxu0
        %4710 = vdwg.mxu0
        %4711 = vmatprep.subr.bf16.mxu0 0
        %4712 = vmatpush1.bf16.msra.mxu0 %v3710
        %4713 = vmatprep.subr.bf16.mxu0 0
        %4714 = vmatpush1.bf16.msra.mxu0 %v3709
        %4715 = vmatprep.subr.bf16.mxu0 0
        %4716 = vmatpush1.bf16.msra.mxu0 %v3708
        %4717 = vmatprep.subr.bf16.mxu0 0
        %4718 = vmatpush1.bf16.msra.mxu0 %v3707
        %4719 = vmatprep.subr.bf16.mxu0 0
        %4720 = vmatpush1.bf16.msra.mxu0 %v3706
        %4721 = vmatprep.subr.bf16.mxu0 0
        %4722 = vmatpush1.bf16.msra.mxu0 %v3705
        %4723 = vmatprep.subr.bf16.mxu0 0
        %4724 = vmatpush1.bf16.msra.mxu0 %v3704
        %4725 = vmatprep.subr.bf16.mxu0 0
        %4726 = vmatpush1.bf16.msra.mxu0 %v3703
        %4727 = vmatprep.subr.bf16.mxu0 0
        %4728 = vmatpush2.bf16.msra.mxu0 %v3718
        %4729 = vmatprep.subr.bf16.mxu0 0
        %4730 = vmatpush2.bf16.msra.mxu0 %v3717
        %4731 = vmatprep.subr.bf16.mxu0 0
        %4732 = vmatpush2.bf16.msra.mxu0 %v3716
        %4733 = vmatprep.subr.bf16.mxu0 0
        %4734 = vmatpush2.bf16.msra.mxu0 %v3715
        %4735 = vmatprep.subr.bf16.mxu0 0
        %4736 = vmatpush2.bf16.msra.mxu0 %v3714
        %4737 = vmatprep.subr.bf16.mxu0 0
        %4738 = vmatpush2.bf16.msra.mxu0 %v3713
        %4739 = vmatprep.subr.bf16.mxu0 0
        %4740 = vmatpush2.bf16.msra.mxu0 %v3712
        %4741 = vmatprep.subr.bf16.mxu0 0
        %4742 = vmatpush2.bf16.msra.mxu0 %v3711
        %4743 = vmatprep.mubr.bf16.mxu0 %v1323
        %4744 = vmatmul.mubr.bf16.gmra.mxu0 %v1321
        %v4745 = vpop.f32.mrf.mxu0
        %v4746 = vadd.f32 %v4706, %v4745
        %v4747 = vpop.f32.mrf.mxu0
        %v4748 = vpop.f32.mrf.mxu0
        %v4749 = vpop.f32.mrf.mxu0
        %4750 = vdwg.mxu0
        %4751 = vmatprep.subr.bf16.mxu0 0
        %4752 = vmatpush1.bf16.msra.mxu0 %v3726
        %4753 = vmatprep.subr.bf16.mxu0 0
        %4754 = vmatpush1.bf16.msra.mxu0 %v3725
        %4755 = vmatprep.subr.bf16.mxu0 0
        %4756 = vmatpush1.bf16.msra.mxu0 %v3724
        %4757 = vmatprep.subr.bf16.mxu0 0
        %4758 = vmatpush1.bf16.msra.mxu0 %v3723
        %4759 = vmatprep.subr.bf16.mxu0 0
        %4760 = vmatpush1.bf16.msra.mxu0 %v3722
        %4761 = vmatprep.subr.bf16.mxu0 0
        %4762 = vmatpush1.bf16.msra.mxu0 %v3721
        %4763 = vmatprep.subr.bf16.mxu0 0
        %4764 = vmatpush1.bf16.msra.mxu0 %v3720
        %4765 = vmatprep.subr.bf16.mxu0 0
        %4766 = vmatpush1.bf16.msra.mxu0 %v3719
        %4767 = vmatprep.subr.bf16.mxu0 0
        %4768 = vmatpush2.bf16.msra.mxu0 %v3734
        %4769 = vmatprep.subr.bf16.mxu0 0
        %4770 = vmatpush2.bf16.msra.mxu0 %v3733
        %4771 = vmatprep.subr.bf16.mxu0 0
        %4772 = vmatpush2.bf16.msra.mxu0 %v3732
        %4773 = vmatprep.subr.bf16.mxu0 0
        %4774 = vmatpush2.bf16.msra.mxu0 %v3731
        %4775 = vmatprep.subr.bf16.mxu0 0
        %4776 = vmatpush2.bf16.msra.mxu0 %v3730
        %4777 = vmatprep.subr.bf16.mxu0 0
        %4778 = vmatpush2.bf16.msra.mxu0 %v3729
        %4779 = vmatprep.subr.bf16.mxu0 0
        %4780 = vmatpush2.bf16.msra.mxu0 %v3728
        %4781 = vmatprep.subr.bf16.mxu0 0
        %4782 = vmatpush2.bf16.msra.mxu0 %v3727
        %4783 = vmatprep.mubr.bf16.mxu0 %v1320
        %4784 = vmatmul.mubr.bf16.gmra.mxu0 %v1306
        %v4785 = vpop.f32.mrf.mxu0
        %v4786 = vadd.f32 %v4746, %v4785
        %v4787 = vpop.f32.mrf.mxu0
        %v4788 = vpop.f32.mrf.mxu0
        %v4789 = vpop.f32.mrf.mxu0
        %4790 = vdwg.mxu0
        %4791 = vmatprep.subr.bf16.mxu0 0
        %4792 = vmatpush1.bf16.msra.mxu0 %v3742
        %4793 = vmatprep.subr.bf16.mxu0 0
        %4794 = vmatpush1.bf16.msra.mxu0 %v3741
        %4795 = vmatprep.subr.bf16.mxu0 0
        %4796 = vmatpush1.bf16.msra.mxu0 %v3740
        %4797 = vmatprep.subr.bf16.mxu0 0
        %4798 = vmatpush1.bf16.msra.mxu0 %v3739
        %4799 = vmatprep.subr.bf16.mxu0 0
        %4800 = vmatpush1.bf16.msra.mxu0 %v3738
        %4801 = vmatprep.subr.bf16.mxu0 0
        %4802 = vmatpush1.bf16.msra.mxu0 %v3737
        %4803 = vmatprep.subr.bf16.mxu0 0
        %4804 = vmatpush1.bf16.msra.mxu0 %v3736
        %4805 = vmatprep.subr.bf16.mxu0 0
        %4806 = vmatpush1.bf16.msra.mxu0 %v3735
        %4807 = vmatprep.subr.bf16.mxu0 0
        %4808 = vmatpush2.bf16.msra.mxu0 %v3750
        %4809 = vmatprep.subr.bf16.mxu0 0
        %4810 = vmatpush2.bf16.msra.mxu0 %v3749
        %4811 = vmatprep.subr.bf16.mxu0 0
        %4812 = vmatpush2.bf16.msra.mxu0 %v3748
        %4813 = vmatprep.subr.bf16.mxu0 0
        %4814 = vmatpush2.bf16.msra.mxu0 %v3747
        %4815 = vmatprep.subr.bf16.mxu0 0
        %4816 = vmatpush2.bf16.msra.mxu0 %v3746
        %4817 = vmatprep.subr.bf16.mxu0 0
        %4818 = vmatpush2.bf16.msra.mxu0 %v3745
        %4819 = vmatprep.subr.bf16.mxu0 0
        %4820 = vmatpush2.bf16.msra.mxu0 %v3744
        %4821 = vmatprep.subr.bf16.mxu0 0
        %4822 = vmatpush2.bf16.msra.mxu0 %v3743
        %4823 = vmatprep.mubr.bf16.mxu0 %v1324
        %4824 = vmatmul.mubr.bf16.gmra.mxu0 %v1322
        %v4825 = vpop.f32.mrf.mxu0
        %v4826 = vadd.f32 %v4786, %v4825
        %v4827 = vpop.f32.mrf.mxu0
        %v4828 = vpop.f32.mrf.mxu0
        %v4829 = vpop.f32.mrf.mxu0
        %4830 = vdwg.mxu0
        %4831 = vmatprep.subr.bf16.mxu0 0
        %4832 = vmatpush1.bf16.msra.mxu0 %v3758
        %4833 = vmatprep.subr.bf16.mxu0 0
        %4834 = vmatpush1.bf16.msra.mxu0 %v3757
        %4835 = vmatprep.subr.bf16.mxu0 0
        %4836 = vmatpush1.bf16.msra.mxu0 %v3756
        %4837 = vmatprep.subr.bf16.mxu0 0
        %4838 = vmatpush1.bf16.msra.mxu0 %v3755
        %4839 = vmatprep.subr.bf16.mxu0 0
        %4840 = vmatpush1.bf16.msra.mxu0 %v3754
        %4841 = vmatprep.subr.bf16.mxu0 0
        %4842 = vmatpush1.bf16.msra.mxu0 %v3753
        %4843 = vmatprep.subr.bf16.mxu0 0
        %4844 = vmatpush1.bf16.msra.mxu0 %v3752
        %4845 = vmatprep.subr.bf16.mxu0 0
        %4846 = vmatpush1.bf16.msra.mxu0 %v3751
        %4847 = vmatprep.subr.bf16.mxu0 0
        %4848 = vmatpush2.bf16.msra.mxu0 %v3766
        %4849 = vmatprep.subr.bf16.mxu0 0
        %4850 = vmatpush2.bf16.msra.mxu0 %v3765
        %4851 = vmatprep.subr.bf16.mxu0 0
        %4852 = vmatpush2.bf16.msra.mxu0 %v3764
        %4853 = vmatprep.subr.bf16.mxu0 0
        %4854 = vmatpush2.bf16.msra.mxu0 %v3763
        %4855 = vmatprep.subr.bf16.mxu0 0
        %4856 = vmatpush2.bf16.msra.mxu0 %v3762
        %4857 = vmatprep.subr.bf16.mxu0 0
        %4858 = vmatpush2.bf16.msra.mxu0 %v3761
        %4859 = vmatprep.subr.bf16.mxu0 0
        %4860 = vmatpush2.bf16.msra.mxu0 %v3760
        %4861 = vmatprep.subr.bf16.mxu0 0
        %4862 = vmatpush2.bf16.msra.mxu0 %v3759
        %4863 = vmatprep.mubr.bf16.mxu0 %v1362
        %4864 = vmatmul.mubr.bf16.gmra.mxu0 %v1348
        %v4865 = vpop.f32.mrf.mxu0
        %v4866 = vadd.f32 %v4826, %v4865
        %v4867 = vpop.f32.mrf.mxu0
        %v4868 = vpop.f32.mrf.mxu0
        %v4869 = vpop.f32.mrf.mxu0
        %4870 = vdwg.mxu0
        %4871 = vmatprep.subr.bf16.mxu0 0
        %4872 = vmatpush1.bf16.msra.mxu0 %v3774
        %4873 = vmatprep.subr.bf16.mxu0 0
        %4874 = vmatpush1.bf16.msra.mxu0 %v3773
        %4875 = vmatprep.subr.bf16.mxu0 0
        %4876 = vmatpush1.bf16.msra.mxu0 %v3772
        %4877 = vmatprep.subr.bf16.mxu0 0
        %4878 = vmatpush1.bf16.msra.mxu0 %v3771
        %4879 = vmatprep.subr.bf16.mxu0 0
        %4880 = vmatpush1.bf16.msra.mxu0 %v3770
        %4881 = vmatprep.subr.bf16.mxu0 0
        %4882 = vmatpush1.bf16.msra.mxu0 %v3769
        %4883 = vmatprep.subr.bf16.mxu0 0
        %4884 = vmatpush1.bf16.msra.mxu0 %v3768
        %4885 = vmatprep.subr.bf16.mxu0 0
        %4886 = vmatpush1.bf16.msra.mxu0 %v3767
        %4887 = vmatprep.subr.bf16.mxu0 0
        %4888 = vmatpush2.bf16.msra.mxu0 %v3782
        %4889 = vmatprep.subr.bf16.mxu0 0
        %4890 = vmatpush2.bf16.msra.mxu0 %v3781
        %4891 = vmatprep.subr.bf16.mxu0 0
        %4892 = vmatpush2.bf16.msra.mxu0 %v3780
        %4893 = vmatprep.subr.bf16.mxu0 0
        %4894 = vmatpush2.bf16.msra.mxu0 %v3779
        %4895 = vmatprep.subr.bf16.mxu0 0
        %4896 = vmatpush2.bf16.msra.mxu0 %v3778
        %4897 = vmatprep.subr.bf16.mxu0 0
        %4898 = vmatpush2.bf16.msra.mxu0 %v3777
        %4899 = vmatprep.subr.bf16.mxu0 0
        %4900 = vmatpush2.bf16.msra.mxu0 %v3776
        %4901 = vmatprep.subr.bf16.mxu0 0
        %4902 = vmatpush2.bf16.msra.mxu0 %v3775
        %4903 = vmatprep.mubr.bf16.mxu0 %v1372
        %4904 = vmatmul.mubr.bf16.gmra.mxu0 %v1370
        %v4905 = vpop.f32.mrf.mxu0
        %v4906 = vadd.f32 %v4866, %v4905
        %v4907 = vpop.f32.mrf.mxu0
        %v4908 = vpop.f32.mrf.mxu0
        %v4909 = vpop.f32.mrf.mxu0
        %4910 = vdwg.mxu0
        %4911 = vmatprep.subr.bf16.mxu0 0
        %4912 = vmatpush1.bf16.msra.mxu0 %v3790
        %4913 = vmatprep.subr.bf16.mxu0 0
        %4914 = vmatpush1.bf16.msra.mxu0 %v3789
        %4915 = vmatprep.subr.bf16.mxu0 0
        %4916 = vmatpush1.bf16.msra.mxu0 %v3788
        %4917 = vmatprep.subr.bf16.mxu0 0
        %4918 = vmatpush1.bf16.msra.mxu0 %v3787
        %4919 = vmatprep.subr.bf16.mxu0 0
        %4920 = vmatpush1.bf16.msra.mxu0 %v3786
        %4921 = vmatprep.subr.bf16.mxu0 0
        %4922 = vmatpush1.bf16.msra.mxu0 %v3785
        %4923 = vmatprep.subr.bf16.mxu0 0
        %4924 = vmatpush1.bf16.msra.mxu0 %v3784
        %4925 = vmatprep.subr.bf16.mxu0 0
        %4926 = vmatpush1.bf16.msra.mxu0 %v3783
        %4927 = vmatprep.subr.bf16.mxu0 0
        %4928 = vmatpush2.bf16.msra.mxu0 %v3798
        %4929 = vmatprep.subr.bf16.mxu0 0
        %4930 = vmatpush2.bf16.msra.mxu0 %v3797
        %4931 = vmatprep.subr.bf16.mxu0 0
        %4932 = vmatpush2.bf16.msra.mxu0 %v3796
        %4933 = vmatprep.subr.bf16.mxu0 0
        %4934 = vmatpush2.bf16.msra.mxu0 %v3795
        %4935 = vmatprep.subr.bf16.mxu0 0
        %4936 = vmatpush2.bf16.msra.mxu0 %v3794
        %4937 = vmatprep.subr.bf16.mxu0 0
        %4938 = vmatpush2.bf16.msra.mxu0 %v3793
        %4939 = vmatprep.subr.bf16.mxu0 0
        %4940 = vmatpush2.bf16.msra.mxu0 %v3792
        %4941 = vmatprep.subr.bf16.mxu0 0
        %4942 = vmatpush2.bf16.msra.mxu0 %v3791
        %4943 = vmatprep.mubr.bf16.mxu0 %v1369
        %4944 = vmatmul.mubr.bf16.gmra.mxu0 %v1355
        %v4945 = vpop.f32.mrf.mxu0
        %v4946 = vadd.f32 %v4906, %v4945
        %v4947 = vpop.f32.mrf.mxu0
        %v4948 = vpop.f32.mrf.mxu0
        %v4949 = vpop.f32.mrf.mxu0
        %4950 = vdwg.mxu0
        %4951 = vmatprep.subr.bf16.mxu0 0
        %4952 = vmatpush1.bf16.msra.mxu0 %v3806
        %4953 = vmatprep.subr.bf16.mxu0 0
        %4954 = vmatpush1.bf16.msra.mxu0 %v3805
        %4955 = vmatprep.subr.bf16.mxu0 0
        %4956 = vmatpush1.bf16.msra.mxu0 %v3804
        %4957 = vmatprep.subr.bf16.mxu0 0
        %4958 = vmatpush1.bf16.msra.mxu0 %v3803
        %4959 = vmatprep.subr.bf16.mxu0 0
        %4960 = vmatpush1.bf16.msra.mxu0 %v3802
        %4961 = vmatprep.subr.bf16.mxu0 0
        %4962 = vmatpush1.bf16.msra.mxu0 %v3801
        %4963 = vmatprep.subr.bf16.mxu0 0
        %4964 = vmatpush1.bf16.msra.mxu0 %v3800
        %4965 = vmatprep.subr.bf16.mxu0 0
        %4966 = vmatpush1.bf16.msra.mxu0 %v3799
        %4967 = vmatprep.subr.bf16.mxu0 0
        %4968 = vmatpush2.bf16.msra.mxu0 %v3814
        %4969 = vmatprep.subr.bf16.mxu0 0
        %4970 = vmatpush2.bf16.msra.mxu0 %v3813
        %4971 = vmatprep.subr.bf16.mxu0 0
        %4972 = vmatpush2.bf16.msra.mxu0 %v3812
        %4973 = vmatprep.subr.bf16.mxu0 0
        %4974 = vmatpush2.bf16.msra.mxu0 %v3811
        %4975 = vmatprep.subr.bf16.mxu0 0
        %4976 = vmatpush2.bf16.msra.mxu0 %v3810
        %4977 = vmatprep.subr.bf16.mxu0 0
        %4978 = vmatpush2.bf16.msra.mxu0 %v3809
        %4979 = vmatprep.subr.bf16.mxu0 0
        %4980 = vmatpush2.bf16.msra.mxu0 %v3808
        %4981 = vmatprep.subr.bf16.mxu0 0
        %4982 = vmatpush2.bf16.msra.mxu0 %v3807
        %4983 = vmatprep.mubr.bf16.mxu0 %v1373
        %4984 = vmatmul.mubr.bf16.gmra.mxu0 %v1371
        %v4985 = vpop.f32.mrf.mxu0
        %v4986 = vadd.f32 %v4946, %v4985
        %v4987 = vpop.f32.mrf.mxu0
        %v4988 = vpop.f32.mrf.mxu0
        %v4989 = vpop.f32.mrf.mxu0
        %4990 = vdwg.mxu0
        %4991 = vmatprep.subr.bf16.mxu0 0
        %4992 = vmatpush1.bf16.msra.mxu0 %v3822
        %4993 = vmatprep.subr.bf16.mxu0 0
        %4994 = vmatpush1.bf16.msra.mxu0 %v3821
        %4995 = vmatprep.subr.bf16.mxu0 0
        %4996 = vmatpush1.bf16.msra.mxu0 %v3820
        %4997 = vmatprep.subr.bf16.mxu0 0
        %4998 = vmatpush1.bf16.msra.mxu0 %v3819
        %4999 = vmatprep.subr.bf16.mxu0 0
        %5000 = vmatpush1.bf16.msra.mxu0 %v3818
        %5001 = vmatprep.subr.bf16.mxu0 0
        %5002 = vmatpush1.bf16.msra.mxu0 %v3817
        %5003 = vmatprep.subr.bf16.mxu0 0
        %5004 = vmatpush1.bf16.msra.mxu0 %v3816
        %5005 = vmatprep.subr.bf16.mxu0 0
        %5006 = vmatpush1.bf16.msra.mxu0 %v3815
        %5007 = vmatprep.subr.bf16.mxu0 0
        %5008 = vmatpush2.bf16.msra.mxu0 %v3830
        %5009 = vmatprep.subr.bf16.mxu0 0
        %5010 = vmatpush2.bf16.msra.mxu0 %v3829
        %5011 = vmatprep.subr.bf16.mxu0 0
        %5012 = vmatpush2.bf16.msra.mxu0 %v3828
        %5013 = vmatprep.subr.bf16.mxu0 0
        %5014 = vmatpush2.bf16.msra.mxu0 %v3827
        %5015 = vmatprep.subr.bf16.mxu0 0
        %5016 = vmatpush2.bf16.msra.mxu0 %v3826
        %5017 = vmatprep.subr.bf16.mxu0 0
        %5018 = vmatpush2.bf16.msra.mxu0 %v3825
        %5019 = vmatprep.subr.bf16.mxu0 0
        %5020 = vmatpush2.bf16.msra.mxu0 %v3824
        %5021 = vmatprep.subr.bf16.mxu0 0
        %5022 = vmatpush2.bf16.msra.mxu0 %v3823
        %5023 = vmatprep.mubr.bf16.mxu0 %v1411
        %5024 = vmatmul.mubr.bf16.gmra.mxu0 %v1397
        %v5025 = vpop.f32.mrf.mxu0
        %v5026 = vadd.f32 %v4986, %v5025
        %v5027 = vpop.f32.mrf.mxu0
        %v5028 = vpop.f32.mrf.mxu0
        %v5029 = vpop.f32.mrf.mxu0
        %5030 = vdwg.mxu0
        %5031 = vmatprep.subr.bf16.mxu0 0
        %5032 = vmatpush1.bf16.msra.mxu0 %v3838
        %5033 = vmatprep.subr.bf16.mxu0 0
        %5034 = vmatpush1.bf16.msra.mxu0 %v3837
        %5035 = vmatprep.subr.bf16.mxu0 0
        %5036 = vmatpush1.bf16.msra.mxu0 %v3836
        %5037 = vmatprep.subr.bf16.mxu0 0
        %5038 = vmatpush1.bf16.msra.mxu0 %v3835
        %5039 = vmatprep.subr.bf16.mxu0 0
        %5040 = vmatpush1.bf16.msra.mxu0 %v3834
        %5041 = vmatprep.subr.bf16.mxu0 0
        %5042 = vmatpush1.bf16.msra.mxu0 %v3833
        %5043 = vmatprep.subr.bf16.mxu0 0
        %5044 = vmatpush1.bf16.msra.mxu0 %v3832
        %5045 = vmatprep.subr.bf16.mxu0 0
        %5046 = vmatpush1.bf16.msra.mxu0 %v3831
        %5047 = vmatprep.subr.bf16.mxu0 0
        %5048 = vmatpush2.bf16.msra.mxu0 %v3846
        %5049 = vmatprep.subr.bf16.mxu0 0
        %5050 = vmatpush2.bf16.msra.mxu0 %v3845
        %5051 = vmatprep.subr.bf16.mxu0 0
        %5052 = vmatpush2.bf16.msra.mxu0 %v3844
        %5053 = vmatprep.subr.bf16.mxu0 0
        %5054 = vmatpush2.bf16.msra.mxu0 %v3843
        %5055 = vmatprep.subr.bf16.mxu0 0
        %5056 = vmatpush2.bf16.msra.mxu0 %v3842
        %5057 = vmatprep.subr.bf16.mxu0 0
        %5058 = vmatpush2.bf16.msra.mxu0 %v3841
        %5059 = vmatprep.subr.bf16.mxu0 0
        %5060 = vmatpush2.bf16.msra.mxu0 %v3840
        %5061 = vmatprep.subr.bf16.mxu0 0
        %5062 = vmatpush2.bf16.msra.mxu0 %v3839
        %5063 = vmatprep.mubr.bf16.mxu0 %v1421
        %5064 = vmatmul.mubr.bf16.gmra.mxu0 %v1419
        %v5065 = vpop.f32.mrf.mxu0
        %v5066 = vadd.f32 %v5026, %v5065
        %v5067 = vpop.f32.mrf.mxu0
        %v5068 = vpop.f32.mrf.mxu0
        %v5069 = vpop.f32.mrf.mxu0
        %5070 = vdwg.mxu0
        %5071 = vmatprep.subr.bf16.mxu0 0
        %5072 = vmatpush1.bf16.msra.mxu0 %v3854
        %5073 = vmatprep.subr.bf16.mxu0 0
        %5074 = vmatpush1.bf16.msra.mxu0 %v3853
        %5075 = vmatprep.subr.bf16.mxu0 0
        %5076 = vmatpush1.bf16.msra.mxu0 %v3852
        %5077 = vmatprep.subr.bf16.mxu0 0
        %5078 = vmatpush1.bf16.msra.mxu0 %v3851
        %5079 = vmatprep.subr.bf16.mxu0 0
        %5080 = vmatpush1.bf16.msra.mxu0 %v3850
        %5081 = vmatprep.subr.bf16.mxu0 0
        %5082 = vmatpush1.bf16.msra.mxu0 %v3849
        %5083 = vmatprep.subr.bf16.mxu0 0
        %5084 = vmatpush1.bf16.msra.mxu0 %v3848
        %5085 = vmatprep.subr.bf16.mxu0 0
        %5086 = vmatpush1.bf16.msra.mxu0 %v3847
        %5087 = vmatprep.subr.bf16.mxu0 0
        %5088 = vmatpush2.bf16.msra.mxu0 %v3862
        %5089 = vmatprep.subr.bf16.mxu0 0
        %5090 = vmatpush2.bf16.msra.mxu0 %v3861
        %5091 = vmatprep.subr.bf16.mxu0 0
        %5092 = vmatpush2.bf16.msra.mxu0 %v3860
        %5093 = vmatprep.subr.bf16.mxu0 0
        %5094 = vmatpush2.bf16.msra.mxu0 %v3859
        %5095 = vmatprep.subr.bf16.mxu0 0
        %5096 = vmatpush2.bf16.msra.mxu0 %v3858
        %5097 = vmatprep.subr.bf16.mxu0 0
        %5098 = vmatpush2.bf16.msra.mxu0 %v3857
        %5099 = vmatprep.subr.bf16.mxu0 0
        %5100 = vmatpush2.bf16.msra.mxu0 %v3856
        %5101 = vmatprep.subr.bf16.mxu0 0
        %5102 = vmatpush2.bf16.msra.mxu0 %v3855
        %5103 = vmatprep.mubr.bf16.mxu0 %v1418
        %5104 = vmatmul.mubr.bf16.gmra.mxu0 %v1404
        %v5105 = vpop.f32.mrf.mxu0
        %v5106 = vadd.f32 %v5066, %v5105
        %v5107 = vpop.f32.mrf.mxu0
        %v5108 = vpop.f32.mrf.mxu0
        %v5109 = vpop.f32.mrf.mxu0
        %5110 = vdwg.mxu0
        %5111 = vmatprep.subr.bf16.mxu0 0
        %5112 = vmatpush1.bf16.msra.mxu0 %v3870
        %5113 = vmatprep.subr.bf16.mxu0 0
        %5114 = vmatpush1.bf16.msra.mxu0 %v3869
        %5115 = vmatprep.subr.bf16.mxu0 0
        %5116 = vmatpush1.bf16.msra.mxu0 %v3868
        %5117 = vmatprep.subr.bf16.mxu0 0
        %5118 = vmatpush1.bf16.msra.mxu0 %v3867
        %5119 = vmatprep.subr.bf16.mxu0 0
        %5120 = vmatpush1.bf16.msra.mxu0 %v3866
        %5121 = vmatprep.subr.bf16.mxu0 0
        %5122 = vmatpush1.bf16.msra.mxu0 %v3865
        %5123 = vmatprep.subr.bf16.mxu0 0
        %5124 = vmatpush1.bf16.msra.mxu0 %v3864
        %5125 = vmatprep.subr.bf16.mxu0 0
        %5126 = vmatpush1.bf16.msra.mxu0 %v3863
        %5127 = vmatprep.subr.bf16.mxu0 0
        %5128 = vmatpush2.bf16.msra.mxu0 %v3878
        %5129 = vmatprep.subr.bf16.mxu0 0
        %5130 = vmatpush2.bf16.msra.mxu0 %v3877
        %5131 = vmatprep.subr.bf16.mxu0 0
        %5132 = vmatpush2.bf16.msra.mxu0 %v3876
        %5133 = vmatprep.subr.bf16.mxu0 0
        %5134 = vmatpush2.bf16.msra.mxu0 %v3875
        %5135 = vmatprep.subr.bf16.mxu0 0
        %5136 = vmatpush2.bf16.msra.mxu0 %v3874
        %5137 = vmatprep.subr.bf16.mxu0 0
        %5138 = vmatpush2.bf16.msra.mxu0 %v3873
        %5139 = vmatprep.subr.bf16.mxu0 0
        %5140 = vmatpush2.bf16.msra.mxu0 %v3872
        %5141 = vmatprep.subr.bf16.mxu0 0
        %5142 = vmatpush2.bf16.msra.mxu0 %v3871
        %5143 = vmatprep.mubr.bf16.mxu0 %v1422
        %5144 = vmatmul.mubr.bf16.gmra.mxu0 %v1420
        %v5145 = vpop.f32.mrf.mxu0
        %v5146 = vadd.f32 %v5106, %v5145
        %v5147 = vpop.f32.mrf.mxu0
        %v5148 = vpop.f32.mrf.mxu0
        %v5149 = vpop.f32.mrf.mxu0
        %5150 = vdwg.mxu0
        %5151 = vmatprep.subr.bf16.mxu0 0
        %5152 = vmatpush1.bf16.msra.mxu0 %v3886
        %5153 = vmatprep.subr.bf16.mxu0 0
        %5154 = vmatpush1.bf16.msra.mxu0 %v3885
        %5155 = vmatprep.subr.bf16.mxu0 0
        %5156 = vmatpush1.bf16.msra.mxu0 %v3884
        %5157 = vmatprep.subr.bf16.mxu0 0
        %5158 = vmatpush1.bf16.msra.mxu0 %v3883
        %5159 = vmatprep.subr.bf16.mxu0 0
        %5160 = vmatpush1.bf16.msra.mxu0 %v3882
        %5161 = vmatprep.subr.bf16.mxu0 0
        %5162 = vmatpush1.bf16.msra.mxu0 %v3881
        %5163 = vmatprep.subr.bf16.mxu0 0
        %5164 = vmatpush1.bf16.msra.mxu0 %v3880
        %5165 = vmatprep.subr.bf16.mxu0 0
        %5166 = vmatpush1.bf16.msra.mxu0 %v3879
        %5167 = vmatprep.subr.bf16.mxu0 0
        %5168 = vmatpush2.bf16.msra.mxu0 %v3894
        %5169 = vmatprep.subr.bf16.mxu0 0
        %5170 = vmatpush2.bf16.msra.mxu0 %v3893
        %5171 = vmatprep.subr.bf16.mxu0 0
        %5172 = vmatpush2.bf16.msra.mxu0 %v3892
        %5173 = vmatprep.subr.bf16.mxu0 0
        %5174 = vmatpush2.bf16.msra.mxu0 %v3891
        %5175 = vmatprep.subr.bf16.mxu0 0
        %5176 = vmatpush2.bf16.msra.mxu0 %v3890
        %5177 = vmatprep.subr.bf16.mxu0 0
        %5178 = vmatpush2.bf16.msra.mxu0 %v3889
        %5179 = vmatprep.subr.bf16.mxu0 0
        %5180 = vmatpush2.bf16.msra.mxu0 %v3888
        %5181 = vmatprep.subr.bf16.mxu0 0
        %5182 = vmatpush2.bf16.msra.mxu0 %v3887
        %5183 = vmatprep.mubr.bf16.mxu0 %v1460
        %5184 = vmatmul.mubr.bf16.gmra.mxu0 %v1446
        %v5185 = vpop.f32.mrf.mxu0
        %v5186 = vadd.f32 %v5146, %v5185
        %v5187 = vpop.f32.mrf.mxu0
        %v5188 = vpop.f32.mrf.mxu0
        %v5189 = vpop.f32.mrf.mxu0
        %5190 = vdwg.mxu0
        %5191 = vmatprep.subr.bf16.mxu0 0
        %5192 = vmatpush1.bf16.msra.mxu0 %v3902
        %5193 = vmatprep.subr.bf16.mxu0 0
        %5194 = vmatpush1.bf16.msra.mxu0 %v3901
        %5195 = vmatprep.subr.bf16.mxu0 0
        %5196 = vmatpush1.bf16.msra.mxu0 %v3900
        %5197 = vmatprep.subr.bf16.mxu0 0
        %5198 = vmatpush1.bf16.msra.mxu0 %v3899
        %5199 = vmatprep.subr.bf16.mxu0 0
        %5200 = vmatpush1.bf16.msra.mxu0 %v3898
        %5201 = vmatprep.subr.bf16.mxu0 0
        %5202 = vmatpush1.bf16.msra.mxu0 %v3897
        %5203 = vmatprep.subr.bf16.mxu0 0
        %5204 = vmatpush1.bf16.msra.mxu0 %v3896
        %5205 = vmatprep.subr.bf16.mxu0 0
        %5206 = vmatpush1.bf16.msra.mxu0 %v3895
        %5207 = vmatprep.subr.bf16.mxu0 0
        %5208 = vmatpush2.bf16.msra.mxu0 %v3910
        %5209 = vmatprep.subr.bf16.mxu0 0
        %5210 = vmatpush2.bf16.msra.mxu0 %v3909
        %5211 = vmatprep.subr.bf16.mxu0 0
        %5212 = vmatpush2.bf16.msra.mxu0 %v3908
        %5213 = vmatprep.subr.bf16.mxu0 0
        %5214 = vmatpush2.bf16.msra.mxu0 %v3907
        %5215 = vmatprep.subr.bf16.mxu0 0
        %5216 = vmatpush2.bf16.msra.mxu0 %v3906
        %5217 = vmatprep.subr.bf16.mxu0 0
        %5218 = vmatpush2.bf16.msra.mxu0 %v3905
        %5219 = vmatprep.subr.bf16.mxu0 0
        %5220 = vmatpush2.bf16.msra.mxu0 %v3904
        %5221 = vmatprep.subr.bf16.mxu0 0
        %5222 = vmatpush2.bf16.msra.mxu0 %v3903
        %5223 = vmatprep.mubr.bf16.mxu0 %v1470
        %5224 = vmatmul.mubr.bf16.gmra.mxu0 %v1468
        %v5225 = vpop.f32.mrf.mxu0
        %v5226 = vadd.f32 %v5186, %v5225
        %v5227 = vpop.f32.mrf.mxu0
        %v5228 = vpop.f32.mrf.mxu0
        %v5229 = vpop.f32.mrf.mxu0
        %5230 = vdwg.mxu0
        %5231 = vmatprep.subr.bf16.mxu0 0
        %5232 = vmatpush1.bf16.msra.mxu0 %v3918
        %5233 = vmatprep.subr.bf16.mxu0 0
        %5234 = vmatpush1.bf16.msra.mxu0 %v3917
        %5235 = vmatprep.subr.bf16.mxu0 0
        %5236 = vmatpush1.bf16.msra.mxu0 %v3916
        %5237 = vmatprep.subr.bf16.mxu0 0
        %5238 = vmatpush1.bf16.msra.mxu0 %v3915
        %5239 = vmatprep.subr.bf16.mxu0 0
        %5240 = vmatpush1.bf16.msra.mxu0 %v3914
        %5241 = vmatprep.subr.bf16.mxu0 0
        %5242 = vmatpush1.bf16.msra.mxu0 %v3913
        %5243 = vmatprep.subr.bf16.mxu0 0
        %5244 = vmatpush1.bf16.msra.mxu0 %v3912
        %5245 = vmatprep.subr.bf16.mxu0 0
        %5246 = vmatpush1.bf16.msra.mxu0 %v3911
        %5247 = vmatprep.subr.bf16.mxu0 0
        %5248 = vmatpush2.bf16.msra.mxu0 %v3926
        %5249 = vmatprep.subr.bf16.mxu0 0
        %5250 = vmatpush2.bf16.msra.mxu0 %v3925
        %5251 = vmatprep.subr.bf16.mxu0 0
        %5252 = vmatpush2.bf16.msra.mxu0 %v3924
        %5253 = vmatprep.subr.bf16.mxu0 0
        %5254 = vmatpush2.bf16.msra.mxu0 %v3923
        %5255 = vmatprep.subr.bf16.mxu0 0
        %5256 = vmatpush2.bf16.msra.mxu0 %v3922
        %5257 = vmatprep.subr.bf16.mxu0 0
        %5258 = vmatpush2.bf16.msra.mxu0 %v3921
        %5259 = vmatprep.subr.bf16.mxu0 0
        %5260 = vmatpush2.bf16.msra.mxu0 %v3920
        %5261 = vmatprep.subr.bf16.mxu0 0
        %5262 = vmatpush2.bf16.msra.mxu0 %v3919
        %5263 = vmatprep.mubr.bf16.mxu0 %v1467
        %5264 = vmatmul.mubr.bf16.gmra.mxu0 %v1453
        %v5265 = vpop.f32.mrf.mxu0
        %v5266 = vadd.f32 %v5226, %v5265
        %v5267 = vpop.f32.mrf.mxu0
        %v5268 = vpop.f32.mrf.mxu0
        %v5269 = vpop.f32.mrf.mxu0
        %5270 = vdwg.mxu0
        %5271 = vmatprep.subr.bf16.mxu0 0
        %5272 = vmatpush1.bf16.msra.mxu0 %v3934
        %5273 = vmatprep.subr.bf16.mxu0 0
        %5274 = vmatpush1.bf16.msra.mxu0 %v3933
        %5275 = vmatprep.subr.bf16.mxu0 0
        %5276 = vmatpush1.bf16.msra.mxu0 %v3932
        %5277 = vmatprep.subr.bf16.mxu0 0
        %5278 = vmatpush1.bf16.msra.mxu0 %v3931
        %5279 = vmatprep.subr.bf16.mxu0 0
        %5280 = vmatpush1.bf16.msra.mxu0 %v3930
        %5281 = vmatprep.subr.bf16.mxu0 0
        %5282 = vmatpush1.bf16.msra.mxu0 %v3929
        %5283 = vmatprep.subr.bf16.mxu0 0
        %5284 = vmatpush1.bf16.msra.mxu0 %v3928
        %5285 = vmatprep.subr.bf16.mxu0 0
        %5286 = vmatpush1.bf16.msra.mxu0 %v3927
        %5287 = vmatprep.subr.bf16.mxu0 0
        %5288 = vmatpush2.bf16.msra.mxu0 %v3942
        %5289 = vmatprep.subr.bf16.mxu0 0
        %5290 = vmatpush2.bf16.msra.mxu0 %v3941
        %5291 = vmatprep.subr.bf16.mxu0 0
        %5292 = vmatpush2.bf16.msra.mxu0 %v3940
        %5293 = vmatprep.subr.bf16.mxu0 0
        %5294 = vmatpush2.bf16.msra.mxu0 %v3939
        %5295 = vmatprep.subr.bf16.mxu0 0
        %5296 = vmatpush2.bf16.msra.mxu0 %v3938
        %5297 = vmatprep.subr.bf16.mxu0 0
        %5298 = vmatpush2.bf16.msra.mxu0 %v3937
        %5299 = vmatprep.subr.bf16.mxu0 0
        %5300 = vmatpush2.bf16.msra.mxu0 %v3936
        %5301 = vmatprep.subr.bf16.mxu0 0
        %5302 = vmatpush2.bf16.msra.mxu0 %v3935
        %5303 = vmatprep.mubr.bf16.mxu0 %v1471
        %5304 = vmatmul.mubr.bf16.gmra.mxu0 %v1469
        %v5305 = vpop.f32.mrf.mxu0
        %v5306 = vadd.f32 %v5266, %v5305
        %v5307 = vpop.f32.mrf.mxu0
        %v5308 = vpop.f32.mrf.mxu0
        %v5309 = vpop.f32.mrf.mxu0
        %5310 = vdwg.mxu0
        %5311 = vmatprep.subr.bf16.mxu0 0
        %5312 = vmatpush1.bf16.msra.mxu0 %v3950
        %5313 = vmatprep.subr.bf16.mxu0 0
        %5314 = vmatpush1.bf16.msra.mxu0 %v3949
        %5315 = vmatprep.subr.bf16.mxu0 0
        %5316 = vmatpush1.bf16.msra.mxu0 %v3948
        %5317 = vmatprep.subr.bf16.mxu0 0
        %5318 = vmatpush1.bf16.msra.mxu0 %v3947
        %5319 = vmatprep.subr.bf16.mxu0 0
        %5320 = vmatpush1.bf16.msra.mxu0 %v3946
        %5321 = vmatprep.subr.bf16.mxu0 0
        %5322 = vmatpush1.bf16.msra.mxu0 %v3945
        %5323 = vmatprep.subr.bf16.mxu0 0
        %5324 = vmatpush1.bf16.msra.mxu0 %v3944
        %5325 = vmatprep.subr.bf16.mxu0 0
        %5326 = vmatpush1.bf16.msra.mxu0 %v3943
        %5327 = vmatprep.subr.bf16.mxu0 0
        %5328 = vmatpush2.bf16.msra.mxu0 %v3958
        %5329 = vmatprep.subr.bf16.mxu0 0
        %5330 = vmatpush2.bf16.msra.mxu0 %v3957
        %5331 = vmatprep.subr.bf16.mxu0 0
        %5332 = vmatpush2.bf16.msra.mxu0 %v3956
        %5333 = vmatprep.subr.bf16.mxu0 0
        %5334 = vmatpush2.bf16.msra.mxu0 %v3955
        %5335 = vmatprep.subr.bf16.mxu0 0
        %5336 = vmatpush2.bf16.msra.mxu0 %v3954
        %5337 = vmatprep.subr.bf16.mxu0 0
        %5338 = vmatpush2.bf16.msra.mxu0 %v3953
        %5339 = vmatprep.subr.bf16.mxu0 0
        %5340 = vmatpush2.bf16.msra.mxu0 %v3952
        %5341 = vmatprep.subr.bf16.mxu0 0
        %5342 = vmatpush2.bf16.msra.mxu0 %v3951
        %5343 = vmatprep.mubr.bf16.mxu0 %v1509
        %5344 = vmatmul.mubr.bf16.gmra.mxu0 %v1495
        %v5345 = vpop.f32.mrf.mxu0
        %v5346 = vadd.f32 %v5306, %v5345
        %v5347 = vpop.f32.mrf.mxu0
        %v5348 = vpop.f32.mrf.mxu0
        %v5349 = vpop.f32.mrf.mxu0
        %5350 = vdwg.mxu0
        %5351 = vmatprep.subr.bf16.mxu0 0
        %5352 = vmatpush1.bf16.msra.mxu0 %v3966
        %5353 = vmatprep.subr.bf16.mxu0 0
        %5354 = vmatpush1.bf16.msra.mxu0 %v3965
        %5355 = vmatprep.subr.bf16.mxu0 0
        %5356 = vmatpush1.bf16.msra.mxu0 %v3964
        %5357 = vmatprep.subr.bf16.mxu0 0
        %5358 = vmatpush1.bf16.msra.mxu0 %v3963
        %5359 = vmatprep.subr.bf16.mxu0 0
        %5360 = vmatpush1.bf16.msra.mxu0 %v3962
        %5361 = vmatprep.subr.bf16.mxu0 0
        %5362 = vmatpush1.bf16.msra.mxu0 %v3961
        %5363 = vmatprep.subr.bf16.mxu0 0
        %5364 = vmatpush1.bf16.msra.mxu0 %v3960
        %5365 = vmatprep.subr.bf16.mxu0 0
        %5366 = vmatpush1.bf16.msra.mxu0 %v3959
        %5367 = vmatprep.subr.bf16.mxu0 0
        %5368 = vmatpush2.bf16.msra.mxu0 %v3974
        %5369 = vmatprep.subr.bf16.mxu0 0
        %5370 = vmatpush2.bf16.msra.mxu0 %v3973
        %5371 = vmatprep.subr.bf16.mxu0 0
        %5372 = vmatpush2.bf16.msra.mxu0 %v3972
        %5373 = vmatprep.subr.bf16.mxu0 0
        %5374 = vmatpush2.bf16.msra.mxu0 %v3971
        %5375 = vmatprep.subr.bf16.mxu0 0
        %5376 = vmatpush2.bf16.msra.mxu0 %v3970
        %5377 = vmatprep.subr.bf16.mxu0 0
        %5378 = vmatpush2.bf16.msra.mxu0 %v3969
        %5379 = vmatprep.subr.bf16.mxu0 0
        %5380 = vmatpush2.bf16.msra.mxu0 %v3968
        %5381 = vmatprep.subr.bf16.mxu0 0
        %5382 = vmatpush2.bf16.msra.mxu0 %v3967
        %5383 = vmatprep.mubr.bf16.mxu0 %v1519
        %5384 = vmatmul.mubr.bf16.gmra.mxu0 %v1517
        %v5385 = vpop.f32.mrf.mxu0
        %v5386 = vadd.f32 %v5346, %v5385
        %v5387 = vpop.f32.mrf.mxu0
        %v5388 = vpop.f32.mrf.mxu0
        %v5389 = vpop.f32.mrf.mxu0
        %5390 = vdwg.mxu0
        %5391 = vmatprep.subr.bf16.mxu0 0
        %5392 = vmatpush1.bf16.msra.mxu0 %v3982
        %5393 = vmatprep.subr.bf16.mxu0 0
        %5394 = vmatpush1.bf16.msra.mxu0 %v3981
        %5395 = vmatprep.subr.bf16.mxu0 0
        %5396 = vmatpush1.bf16.msra.mxu0 %v3980
        %5397 = vmatprep.subr.bf16.mxu0 0
        %5398 = vmatpush1.bf16.msra.mxu0 %v3979
        %5399 = vmatprep.subr.bf16.mxu0 0
        %5400 = vmatpush1.bf16.msra.mxu0 %v3978
        %5401 = vmatprep.subr.bf16.mxu0 0
        %5402 = vmatpush1.bf16.msra.mxu0 %v3977
        %5403 = vmatprep.subr.bf16.mxu0 0
        %5404 = vmatpush1.bf16.msra.mxu0 %v3976
        %5405 = vmatprep.subr.bf16.mxu0 0
        %5406 = vmatpush1.bf16.msra.mxu0 %v3975
        %5407 = vmatprep.subr.bf16.mxu0 0
        %5408 = vmatpush2.bf16.msra.mxu0 %v3990
        %5409 = vmatprep.subr.bf16.mxu0 0
        %5410 = vmatpush2.bf16.msra.mxu0 %v3989
        %5411 = vmatprep.subr.bf16.mxu0 0
        %5412 = vmatpush2.bf16.msra.mxu0 %v3988
        %5413 = vmatprep.subr.bf16.mxu0 0
        %5414 = vmatpush2.bf16.msra.mxu0 %v3987
        %5415 = vmatprep.subr.bf16.mxu0 0
        %5416 = vmatpush2.bf16.msra.mxu0 %v3986
        %5417 = vmatprep.subr.bf16.mxu0 0
        %5418 = vmatpush2.bf16.msra.mxu0 %v3985
        %5419 = vmatprep.subr.bf16.mxu0 0
        %5420 = vmatpush2.bf16.msra.mxu0 %v3984
        %5421 = vmatprep.subr.bf16.mxu0 0
        %5422 = vmatpush2.bf16.msra.mxu0 %v3983
        %5423 = vmatprep.mubr.bf16.mxu0 %v1516
        %5424 = vmatmul.mubr.bf16.gmra.mxu0 %v1502
        %v5425 = vpop.f32.mrf.mxu0
        %v5426 = vadd.f32 %v5386, %v5425
        %v5427 = vpop.f32.mrf.mxu0
        %v5428 = vpop.f32.mrf.mxu0
        %v5429 = vpop.f32.mrf.mxu0
        %5430 = vdwg.mxu0
        %5431 = vmatprep.subr.bf16.mxu0 0
        %5432 = vmatpush1.bf16.msra.mxu0 %v3998
        %5433 = vmatprep.subr.bf16.mxu0 0
        %5434 = vmatpush1.bf16.msra.mxu0 %v3997
        %5435 = vmatprep.subr.bf16.mxu0 0
        %5436 = vmatpush1.bf16.msra.mxu0 %v3996
        %5437 = vmatprep.subr.bf16.mxu0 0
        %5438 = vmatpush1.bf16.msra.mxu0 %v3995
        %5439 = vmatprep.subr.bf16.mxu0 0
        %5440 = vmatpush1.bf16.msra.mxu0 %v3994
        %5441 = vmatprep.subr.bf16.mxu0 0
        %5442 = vmatpush1.bf16.msra.mxu0 %v3993
        %5443 = vmatprep.subr.bf16.mxu0 0
        %5444 = vmatpush1.bf16.msra.mxu0 %v3992
        %5445 = vmatprep.subr.bf16.mxu0 0
        %5446 = vmatpush1.bf16.msra.mxu0 %v3991
        %5447 = vmatprep.subr.bf16.mxu0 0
        %5448 = vmatpush2.bf16.msra.mxu0 %v4006
        %5449 = vmatprep.subr.bf16.mxu0 0
        %5450 = vmatpush2.bf16.msra.mxu0 %v4005
        %5451 = vmatprep.subr.bf16.mxu0 0
        %5452 = vmatpush2.bf16.msra.mxu0 %v4004
        %5453 = vmatprep.subr.bf16.mxu0 0
        %5454 = vmatpush2.bf16.msra.mxu0 %v4003
        %5455 = vmatprep.subr.bf16.mxu0 0
        %5456 = vmatpush2.bf16.msra.mxu0 %v4002
        %5457 = vmatprep.subr.bf16.mxu0 0
        %5458 = vmatpush2.bf16.msra.mxu0 %v4001
        %5459 = vmatprep.subr.bf16.mxu0 0
        %5460 = vmatpush2.bf16.msra.mxu0 %v4000
        %5461 = vmatprep.subr.bf16.mxu0 0
        %5462 = vmatpush2.bf16.msra.mxu0 %v3999
        %5463 = vmatprep.mubr.bf16.mxu0 %v1520
        %5464 = vmatmul.mubr.bf16.gmra.mxu0 %v1518
        %v5465 = vpop.f32.mrf.mxu0
        %v5466 = vadd.f32 %v5426, %v5465
        %v5467 = vpop.f32.mrf.mxu0
        %v5468 = vpop.f32.mrf.mxu0
        %v5469 = vpop.f32.mrf.mxu0
        %5470 = vdwg.mxu0
        %5471 = vmatprep.subr.bf16.mxu0 0
        %5472 = vmatpush1.bf16.msra.mxu0 %v4014
        %5473 = vmatprep.subr.bf16.mxu0 0
        %5474 = vmatpush1.bf16.msra.mxu0 %v4013
        %5475 = vmatprep.subr.bf16.mxu0 0
        %5476 = vmatpush1.bf16.msra.mxu0 %v4012
        %5477 = vmatprep.subr.bf16.mxu0 0
        %5478 = vmatpush1.bf16.msra.mxu0 %v4011
        %5479 = vmatprep.subr.bf16.mxu0 0
        %5480 = vmatpush1.bf16.msra.mxu0 %v4010
        %5481 = vmatprep.subr.bf16.mxu0 0
        %5482 = vmatpush1.bf16.msra.mxu0 %v4009
        %5483 = vmatprep.subr.bf16.mxu0 0
        %5484 = vmatpush1.bf16.msra.mxu0 %v4008
        %5485 = vmatprep.subr.bf16.mxu0 0
        %5486 = vmatpush1.bf16.msra.mxu0 %v4007
        %5487 = vmatprep.subr.bf16.mxu0 0
        %5488 = vmatpush2.bf16.msra.mxu0 %v4022
        %5489 = vmatprep.subr.bf16.mxu0 0
        %5490 = vmatpush2.bf16.msra.mxu0 %v4021
        %5491 = vmatprep.subr.bf16.mxu0 0
        %5492 = vmatpush2.bf16.msra.mxu0 %v4020
        %5493 = vmatprep.subr.bf16.mxu0 0
        %5494 = vmatpush2.bf16.msra.mxu0 %v4019
        %5495 = vmatprep.subr.bf16.mxu0 0
        %5496 = vmatpush2.bf16.msra.mxu0 %v4018
        %5497 = vmatprep.subr.bf16.mxu0 0
        %5498 = vmatpush2.bf16.msra.mxu0 %v4017
        %5499 = vmatprep.subr.bf16.mxu0 0
        %5500 = vmatpush2.bf16.msra.mxu0 %v4016
        %5501 = vmatprep.subr.bf16.mxu0 0
        %5502 = vmatpush2.bf16.msra.mxu0 %v4015
        %5503 = vmatprep.mubr.bf16.mxu0 %v1558
        %5504 = vmatmul.mubr.bf16.gmra.mxu0 %v1544
        %v5505 = vpop.f32.mrf.mxu0
        %v5506 = vadd.f32 %v5466, %v5505
        %v5507 = vpop.f32.mrf.mxu0
        %v5508 = vpop.f32.mrf.mxu0
        %v5509 = vpop.f32.mrf.mxu0
        %5510 = vdwg.mxu0
        %5511 = vmatprep.subr.bf16.mxu0 0
        %5512 = vmatpush1.bf16.msra.mxu0 %v4030
        %5513 = vmatprep.subr.bf16.mxu0 0
        %5514 = vmatpush1.bf16.msra.mxu0 %v4029
        %5515 = vmatprep.subr.bf16.mxu0 0
        %5516 = vmatpush1.bf16.msra.mxu0 %v4028
        %5517 = vmatprep.subr.bf16.mxu0 0
        %5518 = vmatpush1.bf16.msra.mxu0 %v4027
        %5519 = vmatprep.subr.bf16.mxu0 0
        %5520 = vmatpush1.bf16.msra.mxu0 %v4026
        %5521 = vmatprep.subr.bf16.mxu0 0
        %5522 = vmatpush1.bf16.msra.mxu0 %v4025
        %5523 = vmatprep.subr.bf16.mxu0 0
        %5524 = vmatpush1.bf16.msra.mxu0 %v4024
        %5525 = vmatprep.subr.bf16.mxu0 0
        %5526 = vmatpush1.bf16.msra.mxu0 %v4023
        %5527 = vmatprep.subr.bf16.mxu0 0
        %5528 = vmatpush2.bf16.msra.mxu0 %v4038
        %5529 = vmatprep.subr.bf16.mxu0 0
        %5530 = vmatpush2.bf16.msra.mxu0 %v4037
        %5531 = vmatprep.subr.bf16.mxu0 0
        %5532 = vmatpush2.bf16.msra.mxu0 %v4036
        %5533 = vmatprep.subr.bf16.mxu0 0
        %5534 = vmatpush2.bf16.msra.mxu0 %v4035
        %5535 = vmatprep.subr.bf16.mxu0 0
        %5536 = vmatpush2.bf16.msra.mxu0 %v4034
        %5537 = vmatprep.subr.bf16.mxu0 0
        %5538 = vmatpush2.bf16.msra.mxu0 %v4033
        %5539 = vmatprep.subr.bf16.mxu0 0
        %5540 = vmatpush2.bf16.msra.mxu0 %v4032
        %5541 = vmatprep.subr.bf16.mxu0 0
        %5542 = vmatpush2.bf16.msra.mxu0 %v4031
        %5543 = vmatprep.mubr.bf16.mxu0 %v1568
        %5544 = vmatmul.mubr.bf16.gmra.mxu0 %v1566
        %v5545 = vpop.f32.mrf.mxu0
        %v5546 = vadd.f32 %v5506, %v5545
        %v5547 = vpop.f32.mrf.mxu0
        %v5548 = vpop.f32.mrf.mxu0
        %v5549 = vpop.f32.mrf.mxu0
        %5550 = vdwg.mxu0
        %5551 = vmatprep.subr.bf16.mxu0 0
        %5552 = vmatpush1.bf16.msra.mxu0 %v4046
        %5553 = vmatprep.subr.bf16.mxu0 0
        %5554 = vmatpush1.bf16.msra.mxu0 %v4045
        %5555 = vmatprep.subr.bf16.mxu0 0
        %5556 = vmatpush1.bf16.msra.mxu0 %v4044
        %5557 = vmatprep.subr.bf16.mxu0 0
        %5558 = vmatpush1.bf16.msra.mxu0 %v4043
        %5559 = vmatprep.subr.bf16.mxu0 0
        %5560 = vmatpush1.bf16.msra.mxu0 %v4042
        %5561 = vmatprep.subr.bf16.mxu0 0
        %5562 = vmatpush1.bf16.msra.mxu0 %v4041
        %5563 = vmatprep.subr.bf16.mxu0 0
        %5564 = vmatpush1.bf16.msra.mxu0 %v4040
        %5565 = vmatprep.subr.bf16.mxu0 0
        %5566 = vmatpush1.bf16.msra.mxu0 %v4039
        %5567 = vmatprep.subr.bf16.mxu0 0
        %5568 = vmatpush2.bf16.msra.mxu0 %v4054
        %5569 = vmatprep.subr.bf16.mxu0 0
        %5570 = vmatpush2.bf16.msra.mxu0 %v4053
        %5571 = vmatprep.subr.bf16.mxu0 0
        %5572 = vmatpush2.bf16.msra.mxu0 %v4052
        %5573 = vmatprep.subr.bf16.mxu0 0
        %5574 = vmatpush2.bf16.msra.mxu0 %v4051
        %5575 = vmatprep.subr.bf16.mxu0 0
        %5576 = vmatpush2.bf16.msra.mxu0 %v4050
        %5577 = vmatprep.subr.bf16.mxu0 0
        %5578 = vmatpush2.bf16.msra.mxu0 %v4049
        %5579 = vmatprep.subr.bf16.mxu0 0
        %5580 = vmatpush2.bf16.msra.mxu0 %v4048
        %5581 = vmatprep.subr.bf16.mxu0 0
        %5582 = vmatpush2.bf16.msra.mxu0 %v4047
        %5583 = vmatprep.mubr.bf16.mxu0 %v1565
        %5584 = vmatmul.mubr.bf16.gmra.mxu0 %v1551
        %v5585 = vpop.f32.mrf.mxu0
        %v5586 = vadd.f32 %v5546, %v5585
        %v5587 = vpop.f32.mrf.mxu0
        %v5588 = vpop.f32.mrf.mxu0
        %v5589 = vpop.f32.mrf.mxu0
        %5590 = vdwg.mxu0
        %5591 = vmatprep.subr.bf16.mxu0 0
        %5592 = vmatpush1.bf16.msra.mxu0 %v4062
        %5593 = vmatprep.subr.bf16.mxu0 0
        %5594 = vmatpush1.bf16.msra.mxu0 %v4061
        %5595 = vmatprep.subr.bf16.mxu0 0
        %5596 = vmatpush1.bf16.msra.mxu0 %v4060
        %5597 = vmatprep.subr.bf16.mxu0 0
        %5598 = vmatpush1.bf16.msra.mxu0 %v4059
        %5599 = vmatprep.subr.bf16.mxu0 0
        %5600 = vmatpush1.bf16.msra.mxu0 %v4058
        %5601 = vmatprep.subr.bf16.mxu0 0
        %5602 = vmatpush1.bf16.msra.mxu0 %v4057
        %5603 = vmatprep.subr.bf16.mxu0 0
        %5604 = vmatpush1.bf16.msra.mxu0 %v4056
        %5605 = vmatprep.subr.bf16.mxu0 0
        %5606 = vmatpush1.bf16.msra.mxu0 %v4055
        %5607 = vmatprep.subr.bf16.mxu0 0
        %5608 = vmatpush2.bf16.msra.mxu0 %v4070
        %5609 = vmatprep.subr.bf16.mxu0 0
        %5610 = vmatpush2.bf16.msra.mxu0 %v4069
        %5611 = vmatprep.subr.bf16.mxu0 0
        %5612 = vmatpush2.bf16.msra.mxu0 %v4068
        %5613 = vmatprep.subr.bf16.mxu0 0
        %5614 = vmatpush2.bf16.msra.mxu0 %v4067
        %5615 = vmatprep.subr.bf16.mxu0 0
        %5616 = vmatpush2.bf16.msra.mxu0 %v4066
        %5617 = vmatprep.subr.bf16.mxu0 0
        %5618 = vmatpush2.bf16.msra.mxu0 %v4065
        %5619 = vmatprep.subr.bf16.mxu0 0
        %5620 = vmatpush2.bf16.msra.mxu0 %v4064
        %5621 = vmatprep.subr.bf16.mxu0 0
        %5622 = vmatpush2.bf16.msra.mxu0 %v4063
        %5623 = vmatprep.mubr.bf16.mxu0 %v1569
        %5624 = vmatmul.mubr.bf16.gmra.mxu0 %v1567
        %v5625 = vpop.f32.mrf.mxu0
        %v5626 = vadd.f32 %v5586, %v5625
        %v5627 = vpop.f32.mrf.mxu0
        %v5628 = vpop.f32.mrf.mxu0
        %v5629 = vpop.f32.mrf.mxu0
        %5630 = vdwg.mxu0
        %5631 = vmatprep.subr.bf16.mxu0 0
        %5632 = vmatpush1.bf16.msra.mxu0 %v4078
        %5633 = vmatprep.subr.bf16.mxu0 0
        %5634 = vmatpush1.bf16.msra.mxu0 %v4077
        %5635 = vmatprep.subr.bf16.mxu0 0
        %5636 = vmatpush1.bf16.msra.mxu0 %v4076
        %5637 = vmatprep.subr.bf16.mxu0 0
        %5638 = vmatpush1.bf16.msra.mxu0 %v4075
        %5639 = vmatprep.subr.bf16.mxu0 0
        %5640 = vmatpush1.bf16.msra.mxu0 %v4074
        %5641 = vmatprep.subr.bf16.mxu0 0
        %5642 = vmatpush1.bf16.msra.mxu0 %v4073
        %5643 = vmatprep.subr.bf16.mxu0 0
        %5644 = vmatpush1.bf16.msra.mxu0 %v4072
        %5645 = vmatprep.subr.bf16.mxu0 0
        %5646 = vmatpush1.bf16.msra.mxu0 %v4071
        %5647 = vmatprep.subr.bf16.mxu0 0
        %5648 = vmatpush2.bf16.msra.mxu0 %v4086
        %5649 = vmatprep.subr.bf16.mxu0 0
        %5650 = vmatpush2.bf16.msra.mxu0 %v4085
        %5651 = vmatprep.subr.bf16.mxu0 0
        %5652 = vmatpush2.bf16.msra.mxu0 %v4084
        %5653 = vmatprep.subr.bf16.mxu0 0
        %5654 = vmatpush2.bf16.msra.mxu0 %v4083
        %5655 = vmatprep.subr.bf16.mxu0 0
        %5656 = vmatpush2.bf16.msra.mxu0 %v4082
        %5657 = vmatprep.subr.bf16.mxu0 0
        %5658 = vmatpush2.bf16.msra.mxu0 %v4081
        %5659 = vmatprep.subr.bf16.mxu0 0
        %5660 = vmatpush2.bf16.msra.mxu0 %v4080
        %5661 = vmatprep.subr.bf16.mxu0 0
        %5662 = vmatpush2.bf16.msra.mxu0 %v4079
        %5663 = vmatprep.mubr.bf16.mxu0 %v1607
        %5664 = vmatmul.mubr.bf16.gmra.mxu0 %v1593
        %v5665 = vpop.f32.mrf.mxu0
        %v5666 = vadd.f32 %v5626, %v5665
        %v5667 = vpop.f32.mrf.mxu0
        %v5668 = vpop.f32.mrf.mxu0
        %v5669 = vpop.f32.mrf.mxu0
        %5670 = vdwg.mxu0
        %5671 = vmatprep.subr.bf16.mxu0 0
        %5672 = vmatpush1.bf16.msra.mxu0 %v4094
        %5673 = vmatprep.subr.bf16.mxu0 0
        %5674 = vmatpush1.bf16.msra.mxu0 %v4093
        %5675 = vmatprep.subr.bf16.mxu0 0
        %5676 = vmatpush1.bf16.msra.mxu0 %v4092
        %5677 = vmatprep.subr.bf16.mxu0 0
        %5678 = vmatpush1.bf16.msra.mxu0 %v4091
        %5679 = vmatprep.subr.bf16.mxu0 0
        %5680 = vmatpush1.bf16.msra.mxu0 %v4090
        %5681 = vmatprep.subr.bf16.mxu0 0
        %5682 = vmatpush1.bf16.msra.mxu0 %v4089
        %5683 = vmatprep.subr.bf16.mxu0 0
        %5684 = vmatpush1.bf16.msra.mxu0 %v4088
        %5685 = vmatprep.subr.bf16.mxu0 0
        %5686 = vmatpush1.bf16.msra.mxu0 %v4087
        %5687 = vmatprep.subr.bf16.mxu0 0
        %5688 = vmatpush2.bf16.msra.mxu0 %v4102
        %5689 = vmatprep.subr.bf16.mxu0 0
        %5690 = vmatpush2.bf16.msra.mxu0 %v4101
        %5691 = vmatprep.subr.bf16.mxu0 0
        %5692 = vmatpush2.bf16.msra.mxu0 %v4100
        %5693 = vmatprep.subr.bf16.mxu0 0
        %5694 = vmatpush2.bf16.msra.mxu0 %v4099
        %5695 = vmatprep.subr.bf16.mxu0 0
        %5696 = vmatpush2.bf16.msra.mxu0 %v4098
        %5697 = vmatprep.subr.bf16.mxu0 0
        %5698 = vmatpush2.bf16.msra.mxu0 %v4097
        %5699 = vmatprep.subr.bf16.mxu0 0
        %5700 = vmatpush2.bf16.msra.mxu0 %v4096
        %5701 = vmatprep.subr.bf16.mxu0 0
        %5702 = vmatpush2.bf16.msra.mxu0 %v4095
        %5703 = vmatprep.mubr.bf16.mxu0 %v1617
        %5704 = vmatmul.mubr.bf16.gmra.mxu0 %v1615
        %v5705 = vpop.f32.mrf.mxu0
        %v5706 = vadd.f32 %v5666, %v5705
        %v5707 = vpop.f32.mrf.mxu0
        %v5708 = vpop.f32.mrf.mxu0
        %v5709 = vpop.f32.mrf.mxu0
        %5710 = vdwg.mxu0
        %5711 = vmatprep.subr.bf16.mxu0 0
        %5712 = vmatpush1.bf16.msra.mxu0 %v4110
        %5713 = vmatprep.subr.bf16.mxu0 0
        %5714 = vmatpush1.bf16.msra.mxu0 %v4109
        %5715 = vmatprep.subr.bf16.mxu0 0
        %5716 = vmatpush1.bf16.msra.mxu0 %v4108
        %5717 = vmatprep.subr.bf16.mxu0 0
        %5718 = vmatpush1.bf16.msra.mxu0 %v4107
        %5719 = vmatprep.subr.bf16.mxu0 0
        %5720 = vmatpush1.bf16.msra.mxu0 %v4106
        %5721 = vmatprep.subr.bf16.mxu0 0
        %5722 = vmatpush1.bf16.msra.mxu0 %v4105
        %5723 = vmatprep.subr.bf16.mxu0 0
        %5724 = vmatpush1.bf16.msra.mxu0 %v4104
        %5725 = vmatprep.subr.bf16.mxu0 0
        %5726 = vmatpush1.bf16.msra.mxu0 %v4103
        %5727 = vmatprep.subr.bf16.mxu0 0
        %5728 = vmatpush2.bf16.msra.mxu0 %v4118
        %5729 = vmatprep.subr.bf16.mxu0 0
        %5730 = vmatpush2.bf16.msra.mxu0 %v4117
        %5731 = vmatprep.subr.bf16.mxu0 0
        %5732 = vmatpush2.bf16.msra.mxu0 %v4116
        %5733 = vmatprep.subr.bf16.mxu0 0
        %5734 = vmatpush2.bf16.msra.mxu0 %v4115
        %5735 = vmatprep.subr.bf16.mxu0 0
        %5736 = vmatpush2.bf16.msra.mxu0 %v4114
        %5737 = vmatprep.subr.bf16.mxu0 0
        %5738 = vmatpush2.bf16.msra.mxu0 %v4113
        %5739 = vmatprep.subr.bf16.mxu0 0
        %5740 = vmatpush2.bf16.msra.mxu0 %v4112
        %5741 = vmatprep.subr.bf16.mxu0 0
        %5742 = vmatpush2.bf16.msra.mxu0 %v4111
        %5743 = vmatprep.mubr.bf16.mxu0 %v1614
        %5744 = vmatmul.mubr.bf16.gmra.mxu0 %v1600
        %v5745 = vpop.f32.mrf.mxu0
        %v5746 = vadd.f32 %v5706, %v5745
        %v5747 = vpop.f32.mrf.mxu0
        %v5748 = vpop.f32.mrf.mxu0
        %v5749 = vpop.f32.mrf.mxu0
        %5750 = vdwg.mxu0
        %5751 = vmatprep.subr.bf16.mxu0 0
        %5752 = vmatpush1.bf16.msra.mxu0 %v4126
        %5753 = vmatprep.subr.bf16.mxu0 0
        %5754 = vmatpush1.bf16.msra.mxu0 %v4125
        %5755 = vmatprep.subr.bf16.mxu0 0
        %5756 = vmatpush1.bf16.msra.mxu0 %v4124
        %5757 = vmatprep.subr.bf16.mxu0 0
        %5758 = vmatpush1.bf16.msra.mxu0 %v4123
        %5759 = vmatprep.subr.bf16.mxu0 0
        %5760 = vmatpush1.bf16.msra.mxu0 %v4122
        %5761 = vmatprep.subr.bf16.mxu0 0
        %5762 = vmatpush1.bf16.msra.mxu0 %v4121
        %5763 = vmatprep.subr.bf16.mxu0 0
        %5764 = vmatpush1.bf16.msra.mxu0 %v4120
        %5765 = vmatprep.subr.bf16.mxu0 0
        %5766 = vmatpush1.bf16.msra.mxu0 %v4119
        %5767 = vmatprep.subr.bf16.mxu0 0
        %5768 = vmatpush2.bf16.msra.mxu0 %v4134
        %5769 = vmatprep.subr.bf16.mxu0 0
        %5770 = vmatpush2.bf16.msra.mxu0 %v4133
        %5771 = vmatprep.subr.bf16.mxu0 0
        %5772 = vmatpush2.bf16.msra.mxu0 %v4132
        %5773 = vmatprep.subr.bf16.mxu0 0
        %5774 = vmatpush2.bf16.msra.mxu0 %v4131
        %5775 = vmatprep.subr.bf16.mxu0 0
        %5776 = vmatpush2.bf16.msra.mxu0 %v4130
        %5777 = vmatprep.subr.bf16.mxu0 0
        %5778 = vmatpush2.bf16.msra.mxu0 %v4129
        %5779 = vmatprep.subr.bf16.mxu0 0
        %5780 = vmatpush2.bf16.msra.mxu0 %v4128
        %5781 = vmatprep.subr.bf16.mxu0 0
        %5782 = vmatpush2.bf16.msra.mxu0 %v4127
        %5783 = vmatprep.mubr.bf16.mxu0 %v1618
        %5784 = vmatmul.mubr.bf16.gmra.mxu0 %v1616
        %v5785 = vpop.f32.mrf.mxu0
        %v5786 = vadd.f32 %v5746, %v5785
        %v5787 = vpop.f32.mrf.mxu0
        %v5788 = vpop.f32.mrf.mxu0
        %v5789 = vpop.f32.mrf.mxu0
        %5790 = vdwg.mxu0
        %5791 = vmatprep.subr.bf16.mxu0 0
        %5792 = vmatpush1.bf16.msra.mxu0 %v4142
        %5793 = vmatprep.subr.bf16.mxu0 0
        %5794 = vmatpush1.bf16.msra.mxu0 %v4141
        %5795 = vmatprep.subr.bf16.mxu0 0
        %5796 = vmatpush1.bf16.msra.mxu0 %v4140
        %5797 = vmatprep.subr.bf16.mxu0 0
        %5798 = vmatpush1.bf16.msra.mxu0 %v4139
        %5799 = vmatprep.subr.bf16.mxu0 0
        %5800 = vmatpush1.bf16.msra.mxu0 %v4138
        %5801 = vmatprep.subr.bf16.mxu0 0
        %5802 = vmatpush1.bf16.msra.mxu0 %v4137
        %5803 = vmatprep.subr.bf16.mxu0 0
        %5804 = vmatpush1.bf16.msra.mxu0 %v4136
        %5805 = vmatprep.subr.bf16.mxu0 0
        %5806 = vmatpush1.bf16.msra.mxu0 %v4135
        %5807 = vmatprep.subr.bf16.mxu0 0
        %5808 = vmatpush2.bf16.msra.mxu0 %v4150
        %5809 = vmatprep.subr.bf16.mxu0 0
        %5810 = vmatpush2.bf16.msra.mxu0 %v4149
        %5811 = vmatprep.subr.bf16.mxu0 0
        %5812 = vmatpush2.bf16.msra.mxu0 %v4148
        %5813 = vmatprep.subr.bf16.mxu0 0
        %5814 = vmatpush2.bf16.msra.mxu0 %v4147
        %5815 = vmatprep.subr.bf16.mxu0 0
        %5816 = vmatpush2.bf16.msra.mxu0 %v4146
        %5817 = vmatprep.subr.bf16.mxu0 0
        %5818 = vmatpush2.bf16.msra.mxu0 %v4145
        %5819 = vmatprep.subr.bf16.mxu0 0
        %5820 = vmatpush2.bf16.msra.mxu0 %v4144
        %5821 = vmatprep.subr.bf16.mxu0 0
        %5822 = vmatpush2.bf16.msra.mxu0 %v4143
        %5823 = vmatprep.mubr.bf16.mxu0 %v1656
        %5824 = vmatmul.mubr.bf16.gmra.mxu0 %v1642
        %v5825 = vpop.f32.mrf.mxu0
        %v5826 = vadd.f32 %v5786, %v5825
        %v5827 = vpop.f32.mrf.mxu0
        %v5828 = vpop.f32.mrf.mxu0
        %v5829 = vpop.f32.mrf.mxu0
        %5830 = vdwg.mxu0
        %5831 = vmatprep.subr.bf16.mxu0 0
        %5832 = vmatpush1.bf16.msra.mxu0 %v4158
        %5833 = vmatprep.subr.bf16.mxu0 0
        %5834 = vmatpush1.bf16.msra.mxu0 %v4157
        %5835 = vmatprep.subr.bf16.mxu0 0
        %5836 = vmatpush1.bf16.msra.mxu0 %v4156
        %5837 = vmatprep.subr.bf16.mxu0 0
        %5838 = vmatpush1.bf16.msra.mxu0 %v4155
        %5839 = vmatprep.subr.bf16.mxu0 0
        %5840 = vmatpush1.bf16.msra.mxu0 %v4154
        %5841 = vmatprep.subr.bf16.mxu0 0
        %5842 = vmatpush1.bf16.msra.mxu0 %v4153
        %5843 = vmatprep.subr.bf16.mxu0 0
        %5844 = vmatpush1.bf16.msra.mxu0 %v4152
        %5845 = vmatprep.subr.bf16.mxu0 0
        %5846 = vmatpush1.bf16.msra.mxu0 %v4151
        %5847 = vmatprep.subr.bf16.mxu0 0
        %5848 = vmatpush2.bf16.msra.mxu0 %v4166
        %5849 = vmatprep.subr.bf16.mxu0 0
        %5850 = vmatpush2.bf16.msra.mxu0 %v4165
        %5851 = vmatprep.subr.bf16.mxu0 0
        %5852 = vmatpush2.bf16.msra.mxu0 %v4164
        %5853 = vmatprep.subr.bf16.mxu0 0
        %5854 = vmatpush2.bf16.msra.mxu0 %v4163
        %5855 = vmatprep.subr.bf16.mxu0 0
        %5856 = vmatpush2.bf16.msra.mxu0 %v4162
        %5857 = vmatprep.subr.bf16.mxu0 0
        %5858 = vmatpush2.bf16.msra.mxu0 %v4161
        %5859 = vmatprep.subr.bf16.mxu0 0
        %5860 = vmatpush2.bf16.msra.mxu0 %v4160
        %5861 = vmatprep.subr.bf16.mxu0 0
        %5862 = vmatpush2.bf16.msra.mxu0 %v4159
        %5863 = vmatprep.mubr.bf16.mxu0 %v1665
        %5864 = vmatmul.mubr.bf16.gmra.mxu0 %v1664
        %v5865 = vpop.f32.mrf.mxu0
        %v5866 = vadd.f32 %v5826, %v5865
        %v5867 = vpop.f32.mrf.mxu0
        %v5868 = vpop.f32.mrf.mxu0
        %v5869 = vpop.f32.mrf.mxu0
        %5870 = vdwg.mxu0
        %5871 = vmatprep.subr.bf16.mxu0 0
        %5872 = vmatpush1.bf16.msra.mxu0 %v4174
        %5873 = vmatprep.subr.bf16.mxu0 0
        %5874 = vmatpush1.bf16.msra.mxu0 %v4173
        %5875 = vmatprep.subr.bf16.mxu0 0
        %5876 = vmatpush1.bf16.msra.mxu0 %v4172
        %5877 = vmatprep.subr.bf16.mxu0 0
        %5878 = vmatpush1.bf16.msra.mxu0 %v4171
        %5879 = vmatprep.subr.bf16.mxu0 0
        %5880 = vmatpush1.bf16.msra.mxu0 %v4170
        %5881 = vmatprep.subr.bf16.mxu0 0
        %5882 = vmatpush1.bf16.msra.mxu0 %v4169
        %5883 = vmatprep.subr.bf16.mxu0 0
        %5884 = vmatpush1.bf16.msra.mxu0 %v4168
        %5885 = vmatprep.subr.bf16.mxu0 0
        %5886 = vmatpush1.bf16.msra.mxu0 %v4167
        %5887 = vmatprep.subr.bf16.mxu0 0
        %5888 = vmatpush2.bf16.msra.mxu0 0
        %5889 = vmatprep.subr.bf16.mxu0 0
        %5890 = vmatpush2.bf16.msra.mxu0 0
        %5891 = vmatprep.subr.bf16.mxu0 0
        %5892 = vmatpush2.bf16.msra.mxu0 0
        %5893 = vmatprep.subr.bf16.mxu0 0
        %5894 = vmatpush2.bf16.msra.mxu0 0
        %5895 = vmatprep.subr.bf16.mxu0 0
        %5896 = vmatpush2.bf16.msra.mxu0 0
        %5897 = vmatprep.subr.bf16.mxu0 0
        %5898 = vmatpush2.bf16.msra.mxu0 0
        %5899 = vmatprep.subr.bf16.mxu0 0
        %5900 = vmatpush2.bf16.msra.mxu0 %v4176
        %5901 = vmatprep.subr.bf16.mxu0 0
        %5902 = vmatpush2.bf16.msra.mxu0 %v4175
        %5903 = vmatprep.mubr.bf16.mxu0 %v4669
        %5904 = vmatmul.mubr.bf16.gmra.mxu0 %v1649
        %v5905 = vpop.f32.mrf.mxu0
        %v5906 = vadd.f32 %v5866, %v5905
        %v5907 = vpop.f32.mrf.mxu0
        %v5908 = vpop.f32.mrf.mxu0
        %v5909 = vpop.f32.mrf.mxu0
        %5910 = vdwg.mxu0
        %v5911 = vadd.f32 %v279, %v5906
        %5912 = vst [vmem:[#allocation2] sm:$0x3] %v5911
        %p5913 = scmp.eq.s32.totalorder %s21, 1
        // Predicated region
        $region57: #{close_layer_forward.1} parent=39 // pred_check
          %p5914 = pneg %p5913
        $region58: #{close_layer_forward.1} parent=39 // pred_check_branch
          %5916 = sbr.rel (%p5914) target = $region60
        $region59: #{close_layer_forward.1} parent=39 // pred_region
          %v5917 = vld [vmem:[#allocation2] sm:$0x3]
          %v5918 = vld [vmem:[#allocation6] sm:$0x1]
          %v5920 = vlaneseq
          %v5921 = vshrl.u32 %v5920, 7
          %v5922 = vsub.s32 0, %v5921
          %v5923 = vrot.slane %v5918, %v5922
          %v5925 = vadd.f32 %v5917, %v5923
          %v5926 = vmax.f32 %v5925, 0.0
          %v5927 = vpack.c.bf16 %v5926, %v5926
          %v5928 = vld [vmem:[%s3] sm:$0xf]
          %v5929 = vld [vmem:[%s3 + $0x4] sm:$0xf]
          %v5930 = vld [vmem:[%s3 + $0x8] sm:$0xf]
          %v5931 = vld [vmem:[%s3 + $0xc] sm:$0xf]
          %v5932 = vld [vmem:[%s3 + $0x10] sm:$0xf]
          %v5933 = vld [vmem:[%s3 + $0x14] sm:$0xf]
          %v5934 = vld [vmem:[%s3 + $0x18] sm:$0xf]
          %v5935 = vld [vmem:[%s3 + $0x1c] sm:$0xf]
          %v5936 = vld [vmem:[%s3 + $0x20] sm:$0xf]
          %v5937 = vld [vmem:[%s3 + $0x24] sm:$0xf]
          %v5938 = vld [vmem:[%s3 + $0x28] sm:$0xf]
          %v5939 = vld [vmem:[%s3 + $0x2c] sm:$0xf]
          %v5940 = vld [vmem:[%s3 + $0x30] sm:$0xf]
          %v5941 = vld [vmem:[%s3 + $0x34] sm:$0xf]
          %v5942 = vld [vmem:[%s3 + $0x38] sm:$0xf]
          %v5943 = vld [vmem:[%s3 + $0x3c] sm:$0xf]
          %v5944 = vld [vmem:[#allocation8] sm:$0x1]
          %v5946 = vlaneseq
          %v5947 = vshrl.u32 %v5946, 7
          %v5948 = vsub.s32 0, %v5947
          %v5949 = vrot.slane %v5944, %v5948
          %v5967 = vunpack.c.l.b16 %v5928
          %v5968 = vunpack.c.l.b16 %v5929
          %v5969 = vunpack.c.l.b16 %v5930
          %v5970 = vunpack.c.l.b16 %v5931
          %v5971 = vunpack.c.l.b16 %v5932
          %v5972 = vunpack.c.l.b16 %v5933
          %v5973 = vunpack.c.l.b16 %v5934
          %v5974 = vunpack.c.l.b16 %v5935
          %v5975 = vunpack.c.l.b16 %v5936
          %v5976 = vunpack.c.l.b16 %v5937
          %v5977 = vunpack.c.l.b16 %v5938
          %v5978 = vunpack.c.l.b16 %v5939
          %v5979 = vunpack.c.l.b16 %v5940
          %v5980 = vunpack.c.l.b16 %v5941
          %v5981 = vunpack.c.l.b16 %v5942
          %v5982 = vunpack.c.l.b16 %v5943
          %v5983 = vpack.c.b16 %v5968, %v5967
          %v5984 = vpack.c.b16 %v5970, %v5969
          %v5985 = vpack.c.b16 %v5972, %v5971
          %v5986 = vpack.c.b16 %v5974, %v5973
          %v5987 = vpack.c.b16 %v5976, %v5975
          %v5988 = vpack.c.b16 %v5978, %v5977
          %v5989 = vpack.c.b16 %v5980, %v5979
          %v5990 = vpack.c.b16 %v5982, %v5981
          %5999 = vmatprep.subr.bf16.mxu0 0
          %6000 = vmatpush1.bf16.msra.mxu0 %v5990
          %6001 = vmatprep.subr.bf16.mxu0 0
          %6002 = vmatpush1.bf16.msra.mxu0 %v5989
          %6003 = vmatprep.subr.bf16.mxu0 0
          %6004 = vmatpush1.bf16.msra.mxu0 %v5988
          %6005 = vmatprep.subr.bf16.mxu0 0
          %6006 = vmatpush1.bf16.msra.mxu0 %v5987
          %6007 = vmatprep.subr.bf16.mxu0 0
          %6008 = vmatpush1.bf16.msra.mxu0 %v5986
          %6009 = vmatprep.subr.bf16.mxu0 0
          %6010 = vmatpush1.bf16.msra.mxu0 %v5985
          %6011 = vmatprep.subr.bf16.mxu0 0
          %6012 = vmatpush1.bf16.msra.mxu0 %v5984
          %6013 = vmatprep.subr.bf16.mxu0 0
          %6014 = vmatpush1.bf16.msra.mxu0 %v5983
          %6015 = vmatprep.subr.bf16.mxu0 0
          %6016 = vmatpush2.bf16.msra.mxu0 0
          %6017 = vmatprep.subr.bf16.mxu0 0
          %6018 = vmatpush2.bf16.msra.mxu0 0
          %6019 = vmatprep.subr.bf16.mxu0 0
          %6020 = vmatpush2.bf16.msra.mxu0 0
          %6021 = vmatprep.subr.bf16.mxu0 0
          %6022 = vmatpush2.bf16.msra.mxu0 0
          %6023 = vmatprep.subr.bf16.mxu0 0
          %6024 = vmatpush2.bf16.msra.mxu0 0
          %6025 = vmatprep.subr.bf16.mxu0 0
          %6026 = vmatpush2.bf16.msra.mxu0 0
          %6027 = vmatprep.subr.bf16.mxu0 0
          %6028 = vmatpush2.bf16.msra.mxu0 0
          %6029 = vmatprep.subr.bf16.mxu0 0
          %6030 = vmatpush2.bf16.msra.mxu0 0
          %6031 = vmatprep.mubr.bf16.mxu0 0
          %6032 = vmatmul.mubr.bf16.gmra.mxu0 %v5927
          %v6033 = vpop.f32.mrf.mxu0
          %v6034 = vadd.f32 %v5949, %v6033
          %v6035 = vpop.f32.mrf.mxu0
          %v6036 = vpop.f32.mrf.mxu0
          %v6037 = vpop.f32.mrf.mxu0
          %6038 = vdwg.mxu0
          %vm6039 = vcmask 132096
          %v6040 = vsel %vm6039, %v6034, -inf
          %6041 = vmax.xlane.f32.xlu0 %v6040
          %v6042 = vpop.xlane.xlu0 %6041
          %v6043 = vsub.f32 %v6034, %v6042
          %v6044 = vmul.f32 %v6043, 1.442695
          %v6045 = vpow.pop %v6044
          %v6046 = vsel %vm6039, %v6045, 0.0
          %6047 = vadd.xlane.f32.xlu0 %v6046
          %v6048 = vpop.xlane.xlu0 %6047
          %v6049 = vlog2.pop %v6048
          %v6050 = vmul.f32 %v6049, 0.6931472
          %v6051 = vsub.f32 %v6043, %v6050
          %6052 = vst.msk [vmem:[#allocation9] sm:$0x3] %vm6039, %v6051
        $region60: #{close_layer_forward.1} parent=39 // pred_fallthru
          _
        // Predicated region
        $region61: #{close_layer_forward.1} parent=39 // pred_check
          %p6053 = pneg %p149
        $region62: #{close_layer_forward.1} parent=39 // pred_check_branch
          %6055 = sbr.rel (%p6053) target = $region64
        $region63: #{close_layer_forward.1} parent=39 // pred_region
          %s6057 = ssub.s32 32, 32
          %6058 = vsyncadd [#allocation5], %s6057
          %s6060 = sshll.u32 [#allocation9], 4
          %s6061 = int_to_ptr.vmem [resolvable:$true] %s6060
          %6063 = dma.vmem_to_hbm [thread:$0]  %s6061, 32, %s5, [#allocation5]
        $region64: #{close_layer_forward.1} parent=39 // pred_fallthru
          _
        // Predicated region
        $region65: #{close_layer_forward.1} parent=39 // pred_check
          %p6064 = pneg %p149
        $region66: #{close_layer_forward.1} parent=39 // pred_check_branch
          %6066 = sbr.rel (%p6064) target = $region68
        $region67: #{close_layer_forward.1} parent=39 // pred_region
          %6067 = dma.done [#allocation5], 32
        $region68: #{close_layer_forward.1} parent=39 // pred_fallthru
          _
      $region40: #{close_layer_forward.1} parent=5 // pred_fallthru
        _
      %p6068 = scmp.le.s32.totalorder 2, %s16
      // Predicated region
      $region69: #{close_layer_forward.1} parent=5 // pred_check
        %p6069 = pneg %p6068
      $region70: #{close_layer_forward.1} parent=5 // pred_check_branch
        %6071 = sbr.rel (%p6069) target = $region72
      $region71: #{close_layer_forward.1} parent=5 // pred_region
        %s6072 = ssub.s32 %s16, 2
      $region72: #{close_layer_forward.1} parent=5 // pred_fallthru
        _
    $region6: #{close_layer_forward.1} parent=1 // loop_footer
      %s20 = sadd.s32 1, %s16
    $region7: #{close_layer_forward.1} parent=1 // loop_footer_branch
      %15 = sbr.rel target = $region3
    $region8: #{close_layer_forward.1} parent=1 // loop_exit
      _
    %6073 = vsyncpa [#allocation4], 1
    %s6074 = scalar_lea.sflag [#allocation4], 1
    %6075 = vsyncpa %s6074, 1
    %6076 = vsyncpa [#allocation7], 1
    %6077 = vsyncpa [#allocation5], 1
    %s6078 = scalar_lea.sflag [#allocation5], 1
    %6079 = vsyncpa %s6078, 1

</llo_original>
